<compile_context>
chip_gen: v7x
topology: tpu7x:2x2x1
jax: 0.10.0
libtpu: 0.0.40
codegen_flags: <defaults>
</compile_context>

<pallas_src>
import functools
import math

import jax
import jax.numpy as jnp
from jax import lax
from jax.experimental import pallas as pl
from jax.experimental.pallas import tpu as pltpu

# bf16 matmul operands (f32 accumulation) per the perf review; set to jnp.float32 for
# exact parity with the f32 PyTorch module.
MATMUL_DTYPE = jnp.bfloat16


def _vmem():
    return pl.BlockSpec(memory_space=pltpu.MemorySpace.VMEM)


def _round_up(n, m):
    return ((n + m - 1) // m) * m


# ----------------------------------------------------------------------------
# Bidirectional LSTM kernel (single layer), PyTorch gate order (i, f, g, o).
#   x_ref   : [T*BP, IN]  time-major rows (row = t*BP + b), MATMUL_DTYPE
#   mask_ref: [T, BP, 1]  float {0,1}; 0 for t >= length[b] and for padded batch rows
#   h0/c0   : [2*BP, H]   rows 0:BP fwd, BP:2BP bwd (padded rows zero)
#   wih_ref : [IN, 8H]    [W_ih_f^T | W_ih_b^T], MATMUL_DTYPE
#   whh_f/b : [H, 4H]     W_hh^T per direction, MATMUL_DTYPE
#   b_ref   : [1, 8H]     b_ih + b_hh folded, per direction, f32
# ----------------------------------------------------------------------------
def lstm_kernel(x_ref, mask_ref, h0_ref, c0_ref,
                wih_ref, whh_f_ref, whh_b_ref, b_ref,
                out_ref, gxf_ref, gxb_ref):
    T, BP, H2 = out_ref.shape
    H = H2 // 2
    G = 4 * H                                     # gate width per direction

    # ---- hoisted input projection for both directions (bias folded), off the serial path
    gx = (jnp.dot(x_ref[...], wih_ref[...], preferred_element_type=jnp.float32)
          + b_ref[...])                           # [T*BP, 2G] f32
    gxf_ref[...] = gx[:, 0:G]
    gxb_ref[...] = gx[:, G:2 * G]

    whh_f = whh_f_ref[...]                        # loop-invariant, loaded once
    whh_b = whh_b_ref[...]

    h0 = h0_ref[...]
    c0 = c0_ref[...]
    hf0, hb0 = h0[0:BP, :], h0[BP:2 * BP, :]
    cf0, cb0 = c0[0:BP, :], c0[BP:2 * BP, :]

    def cell(gates, c):
        i = jax.nn.sigmoid(gates[:, 0:H])
        f = jax.nn.sigmoid(gates[:, H:2 * H])
        g = jnp.tanh(gates[:, 2 * H:3 * H])
        o = jax.nn.sigmoid(gates[:, 3 * H:4 * H])
        c_new = f * c + i * g
        h_new = o * jnp.tanh(c_new)
        return h_new, c_new

    def body(t, carry):
        h_f, h_b, c_f, c_b = carry                # four [BP, H] f32 arrays — no concat
        tb = T - 1 - t

        # one recurrent dot per direction (only the needed [H,4H] weight half each)
        rec_f = jnp.dot(h_f.astype(whh_f.dtype), whh_f,
                        preferred_element_type=jnp.float32)        # [BP, 4H]
        rec_b = jnp.dot(h_b.astype(whh_b.dtype), whh_b,
                        preferred_element_type=jnp.float32)        # [BP, 4H]

        row_f = pl.multiple_of(t * BP, BP)
        row_b = pl.multiple_of(tb * BP, BP)
        g_f = gxf_ref[pl.ds(row_f, BP), :] + rec_f
        g_b = gxb_ref[pl.ds(row_b, BP), :] + rec_b

        hf_new, cf_new = cell(g_f, c_f)
        hb_new, cb_new = cell(g_b, c_b)

        m_f = mask_ref[t]                         # [BP, 1] float in {0, 1}
        m_b = mask_ref[tb]

        out_ref[t, :, 0:H] = m_f * hf_new         # padded positions -> 0 (pad_packed)
        out_ref[tb, :, H:H2] = m_b * hb_new

        hf_next = h_f + m_f * (hf_new - h_f)      # freeze state past sequence end
        hb_next = h_b + m_b * (hb_new - h_b)
        cf_next = c_f + m_f * (cf_new - c_f)
        cb_next = c_b + m_b * (cb_new - c_b)
        return (hf_next, hb_next, cf_next, cb_next)

    lax.fori_loop(0, T, body, (hf0, hb0, cf0, cb0), unroll=min(T, 8))


def bilstm_pallas(x, lengths, h0, c0, p):
    """x: [B, T, 4*H] batch-first.  Returns time-major [T, BP, 2*H] (BP = round_up(B,8))."""
    B, T, IN = x.shape
    H = h0.shape[-1]
    BP = _round_up(max(B, 8), 8)                  # full sublane tile of batch rows

    x_p = jnp.pad(x, ((0, BP - B), (0, 0), (0, 0)))
    x_tm = jnp.transpose(x_p, (1, 0, 2)).reshape(T * BP, IN).astype(MATMUL_DTYPE)

    len_p = jnp.pad(lengths.astype(jnp.int32), (0, BP - B))        # padded rows: length 0
    mask = (jnp.arange(T)[:, None, None]
            < len_p[None, :, None]).astype(jnp.float32)            # [T, BP, 1]

    h0_p = jnp.pad(h0, ((0, 0), (0, BP - B), (0, 0))).reshape(2 * BP, H)
    c0_p = jnp.pad(c0, ((0, 0), (0, BP - B), (0, 0))).reshape(2 * BP, H)

    wih = jnp.concatenate([p["wih_f"], p["wih_b"]], axis=1).astype(MATMUL_DTYPE)  # [IN, 8H]
    whh_f = p["whh_f"].astype(MATMUL_DTYPE)                                       # [H, 4H]
    whh_b = p["whh_b"].astype(MATMUL_DTYPE)
    b = jnp.concatenate([p["b_f"], p["b_b"]], axis=1)                             # [1, 8H] f32

    return pl.pallas_call(
        lstm_kernel,
        out_shape=jax.ShapeDtypeStruct((T, BP, 2 * H), jnp.float32),
        in_specs=[_vmem() for _ in range(8)],
        out_specs=_vmem(),
        scratch_shapes=[pltpu.VMEM((T * BP, 4 * H), jnp.float32),
                        pltpu.VMEM((T * BP, 4 * H), jnp.float32)],
        compiler_params=pltpu.CompilerParams(vmem_limit_bytes=64 * 1024 * 1024),
    )(x_tm, mask, h0_p, c0_p, wih, whh_f, whh_b, b)


# ----------------------------------------------------------------------------
# Multi-head label attention, single kernel (no grid), batched Q/K/V projections.
#   q_ref : [T, BP, D]  time-major LSTM output (queries), f32
#   kv_ref: [B, LP, D]  label embeddings padded to LP labels (keys = values)
# Output [B, T, 2D] = torch.cat([lstm_out, attention_out], -1):
#   out[:, :, 0:D]  = lstm_out passthrough (batch-major)
#   out[:, :, D:2D] = attention output + queries (residual)
# ----------------------------------------------------------------------------
def attn_kernel(q_ref, kv_ref, wq_ref, bq_ref, wk_ref, bk_ref, wv_ref, bv_ref,
                out_ref, *, num_heads, batch, n_labels):
    T, BP, D = q_ref.shape
    LP = kv_ref.shape[1]
    d = D // num_heads
    scale = 1.0 / math.sqrt(float(d))

    q3 = q_ref[...]                               # [T, BP, D] f32
    q2 = q3.reshape(T * BP, D).astype(wq_ref.dtype)           # tile-aligned flatten (BP=8k)
    kv2 = kv_ref[...].reshape(batch * LP, D).astype(wk_ref.dtype)

    # batched projections: M = T*BP and B*LP rows respectively (single MXU calls)
    Q = jnp.maximum(jnp.dot(q2, wq_ref[...], preferred_element_type=jnp.float32)
                    + bq_ref[...], 0.0)
    K = jnp.maximum(jnp.dot(kv2, wk_ref[...], preferred_element_type=jnp.float32)
                    + bk_ref[...], 0.0)
    V = jnp.maximum(jnp.dot(kv2, wv_ref[...], preferred_element_type=jnp.float32)
                    + bv_ref[...], 0.0)
    Q3 = Q.reshape(T, BP, D)

    # padded label columns get -1e30 before the softmax -> exactly zero weight
    col = lax.broadcasted_iota(jnp.int32, (1, LP), 1)
    key_bias = jnp.where(col < n_labels, 0.0, -1e30).astype(jnp.float32)

    for b in range(batch):                        # static unroll over real batch rows
        qb = q3[:, b, :]                          # [T, D] original queries (lstm_out)
        Qb = Q3[:, b, :]
        Kb = K[b * LP:(b + 1) * LP, :]            # [LP, D]
        Vb = V[b * LP:(b + 1) * LP, :]

        # query_masks = sign(abs(sum(queries, -1))): zeroed (padded) timesteps -> 0
        qmask = jnp.sign(jnp.abs(jnp.sum(qb, axis=-1, keepdims=True)))   # [T, 1]

        out_ref[b, :, 0:D] = qb                   # lstm_out half of the final concat

        for h in range(num_heads):                # static unroll over heads
            lo, hi = h * d, (h + 1) * d
            # contract on the last dim of both operands -> no explicit K transpose
            s = lax.dot_general(Qb[:, lo:hi], Kb[:, lo:hi], (((1,), (1,)), ((), ())),
                                preferred_element_type=jnp.float32) * scale + key_bias
            s = s - jnp.max(s, axis=-1, keepdims=True)
            e = jnp.exp(s)
            pmat = e * pl.reciprocal(jnp.sum(e, axis=-1, keepdims=True), approx=False)
            pmat = pmat * qmask
            out_ref[b, :, D + lo:D + hi] = (
                jnp.dot(pmat, Vb[:, lo:hi], preferred_element_type=jnp.float32)
                + qb[:, lo:hi])                    # residual (+= queries)


def attention_concat_pallas(lstm_tm, label_embs, p, num_heads):
    """lstm_tm: [T, BP, D] time-major; returns [B, T, 2*D] batch-major."""
    T, BP, D = lstm_tm.shape
    B, L, _ = label_embs.shape
    LP = _round_up(max(L, 8), 8)
    kv_p = jnp.pad(label_embs, ((0, 0), (0, LP - L), (0, 0)))
    kernel = functools.partial(attn_kernel, num_heads=num_heads, batch=B, n_labels=L)
    # TODO(synk): if a batch grid is reintroduced (large B / v7x core split), mark the
    #             constant [D,D] weight BlockSpecs pipeline_mode=pl.Buffered(1).
    return pl.pallas_call(
        kernel,
        out_shape=jax.ShapeDtypeStruct((B, T, 2 * D), jnp.float32),
        in_specs=[_vmem() for _ in range(8)],
        out_specs=_vmem(),
        compiler_params=pltpu.CompilerParams(vmem_limit_bytes=64 * 1024 * 1024),
    )(lstm_tm, kv_p,
      p["wq"].astype(MATMUL_DTYPE), p["bq"],
      p["wk"].astype(MATMUL_DTYPE), p["bk"],
      p["wv"].astype(MATMUL_DTYPE), p["bv"])


# ----------------------------------------------------------------------------
# Full LSTM_attention forward
# ----------------------------------------------------------------------------
def lstm_attention_forward(lstm_in, label_embs, word_seq_lengths, hidden, params, num_heads):
    h0, c0 = hidden
    # [T, BP, 2H] time-major — consumed directly by the attention kernel (no transpose)
    lstm_tm = bilstm_pallas(lstm_in, word_seq_lengths, h0, c0, params["lstm"])
    # droplstm = identity (eval mode); attention kernel emits cat([lstm_out, attn_out], -1)
    return attention_concat_pallas(lstm_tm, label_embs, params["attn"], num_heads)


def init_params(key, lstm_hidden, hidden_dim):
    in_size = 4 * lstm_hidden
    ks = jax.random.split(key, 12)
    s_lstm = 1.0 / math.sqrt(lstm_hidden)
    s_lin = 1.0 / math.sqrt(hidden_dim)
    u = lambda k, shape, s: jax.random.uniform(k, shape, jnp.float32, -s, s)
    lstm = dict(
        wih_f=u(ks[0], (in_size, 4 * lstm_hidden), s_lstm),
        whh_f=u(ks[1], (lstm_hidden, 4 * lstm_hidden), s_lstm),
        b_f=u(ks[2], (1, 4 * lstm_hidden), s_lstm),     # b_ih + b_hh folded
        wih_b=u(ks[3], (in_size, 4 * lstm_hidden), s_lstm),
        whh_b=u(ks[4], (lstm_hidden, 4 * lstm_hidden), s_lstm),
        b_b=u(ks[5], (1, 4 * lstm_hidden), s_lstm),
    )
    attn = dict(
        wq=u(ks[6], (hidden_dim, hidden_dim), s_lin), bq=u(ks[7], (1, hidden_dim), s_lin),
        wk=u(ks[8], (hidden_dim, hidden_dim), s_lin), bk=u(ks[9], (1, hidden_dim), s_lin),
        wv=u(ks[10], (hidden_dim, hidden_dim), s_lin), bv=u(ks[11], (1, hidden_dim), s_lin),
    )
    return {"lstm": lstm, "attn": attn}


if __name__ == "__main__":
    # Config (stand-in for `data`): HP_hidden_dim = 2*lstm_hidden (bilstm_flag=True),
    # num_attention_head = 2, HP_dropout treated as eval-mode identity.
    B, T, L = 2, 8, 6
    lstm_hidden = 128
    hidden_dim = 2 * lstm_hidden
    num_heads = 2

    key = jax.random.PRNGKey(0)
    k_p, k_x, k_lab, k_h, k_c = jax.random.split(key, 5)
    params = init_params(k_p, lstm_hidden, hidden_dim)

    lstm_in = jax.random.normal(k_x, (B, T, 4 * lstm_hidden), jnp.float32)
    label_embs = jax.random.normal(k_lab, (B, L, hidden_dim), jnp.float32)
    word_seq_lengths = jnp.array([T, T - 3], dtype=jnp.int32)      # sorted descending
    h0 = 0.1 * jax.random.normal(k_h, (2, B, lstm_hidden), jnp.float32)
    c0 = 0.1 * jax.random.normal(k_c, (2, B, lstm_hidden), jnp.float32)

    out = lstm_attention_forward(lstm_in, label_embs, word_seq_lengths, (h0, c0),
                                 params, num_heads)
    jax.block_until_ready(out)
    assert out.shape == (B, T, 2 * hidden_dim), out.shape
    assert bool(jnp.all(jnp.isfinite(out)))
    print("KERNEL_OK")
</pallas_src>

<mosaic_0001>
module attributes {stable_mosaic.version = 11 : i64} {
  func.func @lstm_kernel(%arg0: memref<64x512xbf16, #tpu.memory_space<vmem>>, %arg1: memref<8x8x1xf32, #tpu.memory_space<vmem>>, %arg2: memref<16x128xf32, #tpu.memory_space<vmem>>, %arg3: memref<16x128xf32, #tpu.memory_space<vmem>>, %arg4: memref<512x1024xbf16, #tpu.memory_space<vmem>>, %arg5: memref<128x512xbf16, #tpu.memory_space<vmem>>, %arg6: memref<128x512xbf16, #tpu.memory_space<vmem>>, %arg7: memref<1x1024xf32, #tpu.memory_space<vmem>>, %arg8: memref<8x8x256xf32, #tpu.memory_space<vmem>>, %arg9: memref<64x512xf32, #tpu.memory_space<vmem>>, %arg10: memref<64x512xf32, #tpu.memory_space<vmem>>) attributes {dimension_semantics = [], scalar_prefetch = 0 : i64, scratch_operands = 2 : i64, tpu.core_type = #tpu.core_type<tc>} {
    %c0 = arith.constant 0 : index
    %c0_0 = arith.constant 0 : index
    %0 = vector.load %arg0[%c0, %c0_0] : memref<64x512xbf16, #tpu.memory_space<vmem>>, vector<64x512xbf16>
    %c0_1 = arith.constant 0 : index
    %c0_2 = arith.constant 0 : index
    %1 = vector.load %arg4[%c0_1, %c0_2] : memref<512x1024xbf16, #tpu.memory_space<vmem>>, vector<512x1024xbf16>
    %cst = arith.constant dense<0.000000e+00> : vector<64x1024xf32>
    %2 = tpu.matmul %0, %1, %cst {dimension_numbers = #tpu.dot_dimension_numbers<[1], [0], [0], [1], [0, 0, 1, 1], [], []>} : vector<64x512xbf16>, vector<512x1024xbf16>, vector<64x1024xf32> -> vector<64x1024xf32>
    %c0_3 = arith.constant 0 : index
    %c0_4 = arith.constant 0 : index
    %3 = vector.load %arg7[%c0_3, %c0_4] : memref<1x1024xf32, #tpu.memory_space<vmem>>, vector<1x1024xf32>
    %4 = vector.broadcast %3 : vector<1x1024xf32> to vector<64x1024xf32>
    %5 = arith.addf %2, %4 : vector<64x1024xf32>
    %6 = vector.extract_strided_slice %5 {offsets = [0, 0], sizes = [64, 512], strides = [1, 1]} : vector<64x1024xf32> to vector<64x512xf32>
    %c0_5 = arith.constant 0 : index
    %c0_6 = arith.constant 0 : index
    %7 = vector.load %arg9[%c0_5, %c0_6] : memref<64x512xf32, #tpu.memory_space<vmem>>, vector<64x512xf32>
    tpu.vector_store %arg9[%c0_5, %c0_6], %6 {strides = array<i32>} : memref<64x512xf32, #tpu.memory_space<vmem>>, vector<64x512xf32>,
    %8 = vector.extract_strided_slice %5 {offsets = [0, 512], sizes = [64, 512], strides = [1, 1]} : vector<64x1024xf32> to vector<64x512xf32>
    %c0_7 = arith.constant 0 : index
    %c0_8 = arith.constant 0 : index
    %9 = vector.load %arg10[%c0_7, %c0_8] : memref<64x512xf32, #tpu.memory_space<vmem>>, vector<64x512xf32>
    tpu.vector_store %arg10[%c0_7, %c0_8], %8 {strides = array<i32>} : memref<64x512xf32, #tpu.memory_space<vmem>>, vector<64x512xf32>,
    %c0_9 = arith.constant 0 : index
    %c0_10 = arith.constant 0 : index
    %10 = vector.load %arg5[%c0_9, %c0_10] : memref<128x512xbf16, #tpu.memory_space<vmem>>, vector<128x512xbf16>
    %c0_11 = arith.constant 0 : index
    %c0_12 = arith.constant 0 : index
    %11 = vector.load %arg6[%c0_11, %c0_12] : memref<128x512xbf16, #tpu.memory_space<vmem>>, vector<128x512xbf16>
    %c0_13 = arith.constant 0 : index
    %c0_14 = arith.constant 0 : index
    %12 = vector.load %arg2[%c0_13, %c0_14] : memref<16x128xf32, #tpu.memory_space<vmem>>, vector<16x128xf32>
    %c0_15 = arith.constant 0 : index
    %c0_16 = arith.constant 0 : index
    %13 = vector.load %arg3[%c0_15, %c0_16] : memref<16x128xf32, #tpu.memory_space<vmem>>, vector<16x128xf32>
    %14 = vector.extract_strided_slice %12 {offsets = [0, 0], sizes = [8, 128], strides = [1, 1]} : vector<16x128xf32> to vector<8x128xf32>
    %15 = vector.extract_strided_slice %12 {offsets = [8, 0], sizes = [8, 128], strides = [1, 1]} : vector<16x128xf32> to vector<8x128xf32>
    %16 = vector.extract_strided_slice %13 {offsets = [0, 0], sizes = [8, 128], strides = [1, 1]} : vector<16x128xf32> to vector<8x128xf32>
    %17 = vector.extract_strided_slice %13 {offsets = [8, 0], sizes = [8, 128], strides = [1, 1]} : vector<16x128xf32> to vector<8x128xf32>
    %c0_i32 = arith.constant 0 : i32
    %c7_i32 = arith.constant 7 : i32
    %18 = arith.subi %c7_i32, %c0_i32 : i32
    %19 = arith.truncf %14 : vector<8x128xf32> to vector<8x128xbf16>
    %cst_17 = arith.constant dense<0.000000e+00> : vector<8x512xf32>
    %20 = tpu.matmul %19, %10, %cst_17 {dimension_numbers = #tpu.dot_dimension_numbers<[1], [0], [0], [1], [0, 0, 1, 1], [], []>} : vector<8x128xbf16>, vector<128x512xbf16>, vector<8x512xf32> -> vector<8x512xf32>
    %21 = arith.truncf %15 : vector<8x128xf32> to vector<8x128xbf16>
    %cst_18 = arith.constant dense<0.000000e+00> : vector<8x512xf32>
    %22 = tpu.matmul %21, %11, %cst_18 {dimension_numbers = #tpu.dot_dimension_numbers<[1], [0], [0], [1], [0, 0, 1, 1], [], []>} : vector<8x128xbf16>, vector<128x512xbf16>, vector<8x512xf32> -> vector<8x512xf32>
    %c8_i32 = arith.constant 8 : i32
    %23 = arith.muli %c0_i32, %c8_i32 : i32
    %24 = tpu.assume_multiple %23, 8 : i32
    %c8_i32_19 = arith.constant 8 : i32
    %25 = arith.muli %18, %c8_i32_19 : i32
    %26 = tpu.assume_multiple %25, 8 : i32
    %27 = arith.index_cast %24 : i32 to index
    %c0_20 = arith.constant 0 : index
    %28 = vector.load %arg9[%27, %c0_20] : memref<64x512xf32, #tpu.memory_space<vmem>>, vector<8x512xf32>
    %29 = arith.addf %28, %20 : vector<8x512xf32>
    %30 = arith.index_cast %26 : i32 to index
    %c0_21 = arith.constant 0 : index
    %31 = vector.load %arg10[%30, %c0_21] : memref<64x512xf32, #tpu.memory_space<vmem>>, vector<8x512xf32>
    %32 = arith.addf %31, %22 : vector<8x512xf32>
    %33 = vector.extract_strided_slice %29 {offsets = [0, 0], sizes = [8, 128], strides = [1, 1]} : vector<8x512xf32> to vector<8x128xf32>
    %34 = arith.negf %33 : vector<8x128xf32>
    %35 = math.exp %34 : vector<8x128xf32>
    %cst_22 = arith.constant 1.000000e+00 : f32
    %36 = vector.broadcast %cst_22 : f32 to vector<8x128xf32>
    %37 = arith.addf %36, %35 : vector<8x128xf32>
    %38 = arith.divf %36, %37 : vector<8x128xf32>
    %39 = vector.extract_strided_slice %29 {offsets = [0, 128], sizes = [8, 128], strides = [1, 1]} : vector<8x512xf32> to vector<8x128xf32>
    %40 = arith.negf %39 : vector<8x128xf32>
    %41 = math.exp %40 : vector<8x128xf32>
    %cst_23 = arith.constant 1.000000e+00 : f32
    %42 = vector.broadcast %cst_23 : f32 to vector<8x128xf32>
    %43 = arith.addf %42, %41 : vector<8x128xf32>
    %44 = arith.divf %42, %43 : vector<8x128xf32>
    %45 = vector.extract_strided_slice %29 {offsets = [0, 256], sizes = [8, 128], strides = [1, 1]} : vector<8x512xf32> to vector<8x128xf32>
    %46 = math.tanh %45 : vector<8x128xf32>
    %47 = vector.extract_strided_slice %29 {offsets = [0, 384], sizes = [8, 128], strides = [1, 1]} : vector<8x512xf32> to vector<8x128xf32>
    %48 = arith.negf %47 : vector<8x128xf32>
    %49 = math.exp %48 : vector<8x128xf32>
    %cst_24 = arith.constant 1.000000e+00 : f32
    %50 = vector.broadcast %cst_24 : f32 to vector<8x128xf32>
    %51 = arith.addf %50, %49 : vector<8x128xf32>
    %52 = arith.divf %50, %51 : vector<8x128xf32>
    %53 = arith.mulf %44, %16 : vector<8x128xf32>
    %54 = arith.mulf %38, %46 : vector<8x128xf32>
    %55 = arith.addf %53, %54 : vector<8x128xf32>
    %56 = math.tanh %55 : vector<8x128xf32>
    %57 = arith.mulf %52, %56 : vector<8x128xf32>
    %58 = vector.extract_strided_slice %32 {offsets = [0, 0], sizes = [8, 128], strides = [1, 1]} : vector<8x512xf32> to vector<8x128xf32>
    %59 = arith.negf %58 : vector<8x128xf32>
    %60 = math.exp %59 : vector<8x128xf32>
    %cst_25 = arith.constant 1.000000e+00 : f32
    %61 = vector.broadcast %cst_25 : f32 to vector<8x128xf32>
    %62 = arith.addf %61, %60 : vector<8x128xf32>
    %63 = arith.divf %61, %62 : vector<8x128xf32>
    %64 = vector.extract_strided_slice %32 {offsets = [0, 128], sizes = [8, 128], strides = [1, 1]} : vector<8x512xf32> to vector<8x128xf32>
    %65 = arith.negf %64 : vector<8x128xf32>
    %66 = math.exp %65 : vector<8x128xf32>
    %cst_26 = arith.constant 1.000000e+00 : f32
    %67 = vector.broadcast %cst_26 : f32 to vector<8x128xf32>
    %68 = arith.addf %67, %66 : vector<8x128xf32>
    %69 = arith.divf %67, %68 : vector<8x128xf32>
    %70 = vector.extract_strided_slice %32 {offsets = [0, 256], sizes = [8, 128], strides = [1, 1]} : vector<8x512xf32> to vector<8x128xf32>
    %71 = math.tanh %70 : vector<8x128xf32>
    %72 = vector.extract_strided_slice %32 {offsets = [0, 384], sizes = [8, 128], strides = [1, 1]} : vector<8x512xf32> to vector<8x128xf32>
    %73 = arith.negf %72 : vector<8x128xf32>
    %74 = math.exp %73 : vector<8x128xf32>
    %cst_27 = arith.constant 1.000000e+00 : f32
    %75 = vector.broadcast %cst_27 : f32 to vector<8x128xf32>
    %76 = arith.addf %75, %74 : vector<8x128xf32>
    %77 = arith.divf %75, %76 : vector<8x128xf32>
    %78 = arith.mulf %69, %17 : vector<8x128xf32>
    %79 = arith.mulf %63, %71 : vector<8x128xf32>
    %80 = arith.addf %78, %79 : vector<8x128xf32>
    %81 = math.tanh %80 : vector<8x128xf32>
    %82 = arith.mulf %77, %81 : vector<8x128xf32>
    %83 = arith.index_cast %c0_i32 : i32 to index
    %c0_28 = arith.constant 0 : index
    %c0_29 = arith.constant 0 : index
    %84 = vector.load %arg1[%83, %c0_28, %c0_29] : memref<8x8x1xf32, #tpu.memory_space<vmem>>, vector<1x8x1xf32>
    %85 = vector.shape_cast %84 : vector<1x8x1xf32> to vector<8x1xf32>
    %86 = arith.index_cast %18 : i32 to index
    %c0_30 = arith.constant 0 : index
    %c0_31 = arith.constant 0 : index
    %87 = vector.load %arg1[%86, %c0_30, %c0_31] : memref<8x8x1xf32, #tpu.memory_space<vmem>>, vector<1x8x1xf32>
    %88 = vector.shape_cast %87 : vector<1x8x1xf32> to vector<8x1xf32>
    %89 = vector.broadcast %85 : vector<8x1xf32> to vector<8x128xf32>
    %90 = arith.mulf %89, %57 : vector<8x128xf32>
    %91 = arith.index_cast %c0_i32 : i32 to index
    %c0_32 = arith.constant 0 : index
    %c0_33 = arith.constant 0 : index
    %92 = vector.load %arg8[%91, %c0_32, %c0_33] : memref<8x8x256xf32, #tpu.memory_space<vmem>>, vector<1x8x128xf32>
    %93 = vector.shape_cast %92 : vector<1x8x128xf32> to vector<8x128xf32>
    %94 = vector.shape_cast %90 : vector<8x128xf32> to vector<1x8x128xf32>
    tpu.vector_store %arg8[%91, %c0_32, %c0_33], %94 {strides = array<i32>} : memref<8x8x256xf32, #tpu.memory_space<vmem>>, vector<1x8x128xf32>,
    %95 = vector.broadcast %88 : vector<8x1xf32> to vector<8x128xf32>
    %96 = arith.mulf %95, %82 : vector<8x128xf32>
    %97 = arith.index_cast %18 : i32 to index
    %c0_34 = arith.constant 0 : index
    %c128 = arith.constant 128 : index
    %98 = vector.load %arg8[%97, %c0_34, %c128] : memref<8x8x256xf32, #tpu.memory_space<vmem>>, vector<1x8x128xf32>
    %99 = vector.shape_cast %98 : vector<1x8x128xf32> to vector<8x128xf32>
    %100 = vector.shape_cast %96 : vector<8x128xf32> to vector<1x8x128xf32>
    tpu.vector_store %arg8[%97, %c0_34, %c128], %100 {strides = array<i32>} : memref<8x8x256xf32, #tpu.memory_space<vmem>>, vector<1x8x128xf32>,
    %101 = arith.subf %57, %14 : vector<8x128xf32>
    %102 = vector.broadcast %85 : vector<8x1xf32> to vector<8x128xf32>
    %103 = arith.mulf %102, %101 : vector<8x128xf32>
    %104 = arith.addf %14, %103 : vector<8x128xf32>
    %105 = arith.subf %82, %15 : vector<8x128xf32>
    %106 = vector.broadcast %88 : vector<8x1xf32> to vector<8x128xf32>
    %107 = arith.mulf %106, %105 : vector<8x128xf32>
    %108 = arith.addf %15, %107 : vector<8x128xf32>
    %109 = arith.subf %55, %16 : vector<8x128xf32>
    %110 = vector.broadcast %85 : vector<8x1xf32> to vector<8x128xf32>
    %111 = arith.mulf %110, %109 : vector<8x128xf32>
    %112 = arith.addf %16, %111 : vector<8x128xf32>
    %113 = arith.subf %80, %17 : vector<8x128xf32>
    %114 = vector.broadcast %88 : vector<8x1xf32> to vector<8x128xf32>
    %115 = arith.mulf %114, %113 : vector<8x128xf32>
    %116 = arith.addf %17, %115 : vector<8x128xf32>
    %c1_i32 = arith.constant 1 : i32
    %c7_i32_35 = arith.constant 7 : i32
    %117 = arith.subi %c7_i32_35, %c1_i32 : i32
    %118 = arith.truncf %104 : vector<8x128xf32> to vector<8x128xbf16>
    %cst_36 = arith.constant dense<0.000000e+00> : vector<8x512xf32>
    %119 = tpu.matmul %118, %10, %cst_36 {dimension_numbers = #tpu.dot_dimension_numbers<[1], [0], [0], [1], [0, 0, 1, 1], [], []>} : vector<8x128xbf16>, vector<128x512xbf16>, vector<8x512xf32> -> vector<8x512xf32>
    %120 = arith.truncf %108 : vector<8x128xf32> to vector<8x128xbf16>
    %cst_37 = arith.constant dense<0.000000e+00> : vector<8x512xf32>
    %121 = tpu.matmul %120, %11, %cst_37 {dimension_numbers = #tpu.dot_dimension_numbers<[1], [0], [0], [1], [0, 0, 1, 1], [], []>} : vector<8x128xbf16>, vector<128x512xbf16>, vector<8x512xf32> -> vector<8x512xf32>
    %c8_i32_38 = arith.constant 8 : i32
    %122 = arith.muli %c1_i32, %c8_i32_38 : i32
    %123 = tpu.assume_multiple %122, 8 : i32
    %c8_i32_39 = arith.constant 8 : i32
    %124 = arith.muli %117, %c8_i32_39 : i32
    %125 = tpu.assume_multiple %124, 8 : i32
    %126 = arith.index_cast %123 : i32 to index
    %c0_40 = arith.constant 0 : index
    %127 = vector.load %arg9[%126, %c0_40] : memref<64x512xf32, #tpu.memory_space<vmem>>, vector<8x512xf32>
    %128 = arith.addf %127, %119 : vector<8x512xf32>
    %129 = arith.index_cast %125 : i32 to index
    %c0_41 = arith.constant 0 : index
    %130 = vector.load %arg10[%129, %c0_41] : memref<64x512xf32, #tpu.memory_space<vmem>>, vector<8x512xf32>
    %131 = arith.addf %130, %121 : vector<8x512xf32>
    %132 = vector.extract_strided_slice %128 {offsets = [0, 0], sizes = [8, 128], strides = [1, 1]} : vector<8x512xf32> to vector<8x128xf32>
    %133 = arith.negf %132 : vector<8x128xf32>
    %134 = math.exp %133 : vector<8x128xf32>
    %cst_42 = arith.constant 1.000000e+00 : f32
    %135 = vector.broadcast %cst_42 : f32 to vector<8x128xf32>
    %136 = arith.addf %135, %134 : vector<8x128xf32>
    %137 = arith.divf %135, %136 : vector<8x128xf32>
    %138 = vector.extract_strided_slice %128 {offsets = [0, 128], sizes = [8, 128], strides = [1, 1]} : vector<8x512xf32> to vector<8x128xf32>
    %139 = arith.negf %138 : vector<8x128xf32>
    %140 = math.exp %139 : vector<8x128xf32>
    %cst_43 = arith.constant 1.000000e+00 : f32
    %141 = vector.broadcast %cst_43 : f32 to vector<8x128xf32>
    %142 = arith.addf %141, %140 : vector<8x128xf32>
    %143 = arith.divf %141, %142 : vector<8x128xf32>
    %144 = vector.extract_strided_slice %128 {offsets = [0, 256], sizes = [8, 128], strides = [1, 1]} : vector<8x512xf32> to vector<8x128xf32>
    %145 = math.tanh %144 : vector<8x128xf32>
    %146 = vector.extract_strided_slice %128 {offsets = [0, 384], sizes = [8, 128], strides = [1, 1]} : vector<8x512xf32> to vector<8x128xf32>
    %147 = arith.negf %146 : vector<8x128xf32>
    %148 = math.exp %147 : vector<8x128xf32>
    %cst_44 = arith.constant 1.000000e+00 : f32
    %149 = vector.broadcast %cst_44 : f32 to vector<8x128xf32>
    %150 = arith.addf %149, %148 : vector<8x128xf32>
    %151 = arith.divf %149, %150 : vector<8x128xf32>
    %152 = arith.mulf %143, %112 : vector<8x128xf32>
    %153 = arith.mulf %137, %145 : vector<8x128xf32>
    %154 = arith.addf %152, %153 : vector<8x128xf32>
    %155 = math.tanh %154 : vector<8x128xf32>
    %156 = arith.mulf %151, %155 : vector<8x128xf32>
    %157 = vector.extract_strided_slice %131 {offsets = [0, 0], sizes = [8, 128], strides = [1, 1]} : vector<8x512xf32> to vector<8x128xf32>
    %158 = arith.negf %157 : vector<8x128xf32>
    %159 = math.exp %158 : vector<8x128xf32>
    %cst_45 = arith.constant 1.000000e+00 : f32
    %160 = vector.broadcast %cst_45 : f32 to vector<8x128xf32>
    %161 = arith.addf %160, %159 : vector<8x128xf32>
    %162 = arith.divf %160, %161 : vector<8x128xf32>
    %163 = vector.extract_strided_slice %131 {offsets = [0, 128], sizes = [8, 128], strides = [1, 1]} : vector<8x512xf32> to vector<8x128xf32>
    %164 = arith.negf %163 : vector<8x128xf32>
    %165 = math.exp %164 : vector<8x128xf32>
    %cst_46 = arith.constant 1.000000e+00 : f32
    %166 = vector.broadcast %cst_46 : f32 to vector<8x128xf32>
    %167 = arith.addf %166, %165 : vector<8x128xf32>
    %168 = arith.divf %166, %167 : vector<8x128xf32>
    %169 = vector.extract_strided_slice %131 {offsets = [0, 256], sizes = [8, 128], strides = [1, 1]} : vector<8x512xf32> to vector<8x128xf32>
    %170 = math.tanh %169 : vector<8x128xf32>
    %171 = vector.extract_strided_slice %131 {offsets = [0, 384], sizes = [8, 128], strides = [1, 1]} : vector<8x512xf32> to vector<8x128xf32>
    %172 = arith.negf %171 : vector<8x128xf32>
    %173 = math.exp %172 : vector<8x128xf32>
    %cst_47 = arith.constant 1.000000e+00 : f32
    %174 = vector.broadcast %cst_47 : f32 to vector<8x128xf32>
    %175 = arith.addf %174, %173 : vector<8x128xf32>
    %176 = arith.divf %174, %175 : vector<8x128xf32>
    %177 = arith.mulf %168, %116 : vector<8x128xf32>
    %178 = arith.mulf %162, %170 : vector<8x128xf32>
    %179 = arith.addf %177, %178 : vector<8x128xf32>
    %180 = math.tanh %179 : vector<8x128xf32>
    %181 = arith.mulf %176, %180 : vector<8x128xf32>
    %182 = arith.index_cast %c1_i32 : i32 to index
    %c0_48 = arith.constant 0 : index
    %c0_49 = arith.constant 0 : index
    %183 = vector.load %arg1[%182, %c0_48, %c0_49] : memref<8x8x1xf32, #tpu.memory_space<vmem>>, vector<1x8x1xf32>
    %184 = vector.shape_cast %183 : vector<1x8x1xf32> to vector<8x1xf32>
    %185 = arith.index_cast %117 : i32 to index
    %c0_50 = arith.constant 0 : index
    %c0_51 = arith.constant 0 : index
    %186 = vector.load %arg1[%185, %c0_50, %c0_51] : memref<8x8x1xf32, #tpu.memory_space<vmem>>, vector<1x8x1xf32>
    %187 = vector.shape_cast %186 : vector<1x8x1xf32> to vector<8x1xf32>
    %188 = vector.broadcast %184 : vector<8x1xf32> to vector<8x128xf32>
    %189 = arith.mulf %188, %156 : vector<8x128xf32>
    %190 = arith.index_cast %c1_i32 : i32 to index
    %c0_52 = arith.constant 0 : index
    %c0_53 = arith.constant 0 : index
    %191 = vector.load %arg8[%190, %c0_52, %c0_53] : memref<8x8x256xf32, #tpu.memory_space<vmem>>, vector<1x8x128xf32>
    %192 = vector.shape_cast %191 : vector<1x8x128xf32> to vector<8x128xf32>
    %193 = vector.shape_cast %189 : vector<8x128xf32> to vector<1x8x128xf32>
    tpu.vector_store %arg8[%190, %c0_52, %c0_53], %193 {strides = array<i32>} : memref<8x8x256xf32, #tpu.memory_space<vmem>>, vector<1x8x128xf32>,
    %194 = vector.broadcast %187 : vector<8x1xf32> to vector<8x128xf32>
    %195 = arith.mulf %194, %181 : vector<8x128xf32>
    %196 = arith.index_cast %117 : i32 to index
    %c0_54 = arith.constant 0 : index
    %c128_55 = arith.constant 128 : index
    %197 = vector.load %arg8[%196, %c0_54, %c128_55] : memref<8x8x256xf32, #tpu.memory_space<vmem>>, vector<1x8x128xf32>
    %198 = vector.shape_cast %197 : vector<1x8x128xf32> to vector<8x128xf32>
    %199 = vector.shape_cast %195 : vector<8x128xf32> to vector<1x8x128xf32>
    tpu.vector_store %arg8[%196, %c0_54, %c128_55], %199 {strides = array<i32>} : memref<8x8x256xf32, #tpu.memory_space<vmem>>, vector<1x8x128xf32>,
    %200 = arith.subf %156, %104 : vector<8x128xf32>
    %201 = vector.broadcast %184 : vector<8x1xf32> to vector<8x128xf32>
    %202 = arith.mulf %201, %200 : vector<8x128xf32>
    %203 = arith.addf %104, %202 : vector<8x128xf32>
    %204 = arith.subf %181, %108 : vector<8x128xf32>
    %205 = vector.broadcast %187 : vector<8x1xf32> to vector<8x128xf32>
    %206 = arith.mulf %205, %204 : vector<8x128xf32>
    %207 = arith.addf %108, %206 : vector<8x128xf32>
    %208 = arith.subf %154, %112 : vector<8x128xf32>
    %209 = vector.broadcast %184 : vector<8x1xf32> to vector<8x128xf32>
    %210 = arith.mulf %209, %208 : vector<8x128xf32>
    %211 = arith.addf %112, %210 : vector<8x128xf32>
    %212 = arith.subf %179, %116 : vector<8x128xf32>
    %213 = vector.broadcast %187 : vector<8x1xf32> to vector<8x128xf32>
    %214 = arith.mulf %213, %212 : vector<8x128xf32>
    %215 = arith.addf %116, %214 : vector<8x128xf32>
    %c2_i32 = arith.constant 2 : i32
    %c7_i32_56 = arith.constant 7 : i32
    %216 = arith.subi %c7_i32_56, %c2_i32 : i32
    %217 = arith.truncf %203 : vector<8x128xf32> to vector<8x128xbf16>
    %cst_57 = arith.constant dense<0.000000e+00> : vector<8x512xf32>
    %218 = tpu.matmul %217, %10, %cst_57 {dimension_numbers = #tpu.dot_dimension_numbers<[1], [0], [0], [1], [0, 0, 1, 1], [], []>} : vector<8x128xbf16>, vector<128x512xbf16>, vector<8x512xf32> -> vector<8x512xf32>
    %219 = arith.truncf %207 : vector<8x128xf32> to vector<8x128xbf16>
    %cst_58 = arith.constant dense<0.000000e+00> : vector<8x512xf32>
    %220 = tpu.matmul %219, %11, %cst_58 {dimension_numbers = #tpu.dot_dimension_numbers<[1], [0], [0], [1], [0, 0, 1, 1], [], []>} : vector<8x128xbf16>, vector<128x512xbf16>, vector<8x512xf32> -> vector<8x512xf32>
    %c8_i32_59 = arith.constant 8 : i32
    %221 = arith.muli %c2_i32, %c8_i32_59 : i32
    %222 = tpu.assume_multiple %221, 8 : i32
    %c8_i32_60 = arith.constant 8 : i32
    %223 = arith.muli %216, %c8_i32_60 : i32
    %224 = tpu.assume_multiple %223, 8 : i32
    %225 = arith.index_cast %222 : i32 to index
    %c0_61 = arith.constant 0 : index
    %226 = vector.load %arg9[%225, %c0_61] : memref<64x512xf32, #tpu.memory_space<vmem>>, vector<8x512xf32>
    %227 = arith.addf %226, %218 : vector<8x512xf32>
    %228 = arith.index_cast %224 : i32 to index
    %c0_62 = arith.constant 0 : index
    %229 = vector.load %arg10[%228, %c0_62] : memref<64x512xf32, #tpu.memory_space<vmem>>, vector<8x512xf32>
    %230 = arith.addf %229, %220 : vector<8x512xf32>
    %231 = vector.extract_strided_slice %227 {offsets = [0, 0], sizes = [8, 128], strides = [1, 1]} : vector<8x512xf32> to vector<8x128xf32>
    %232 = arith.negf %231 : vector<8x128xf32>
    %233 = math.exp %232 : vector<8x128xf32>
    %cst_63 = arith.constant 1.000000e+00 : f32
    %234 = vector.broadcast %cst_63 : f32 to vector<8x128xf32>
    %235 = arith.addf %234, %233 : vector<8x128xf32>
    %236 = arith.divf %234, %235 : vector<8x128xf32>
    %237 = vector.extract_strided_slice %227 {offsets = [0, 128], sizes = [8, 128], strides = [1, 1]} : vector<8x512xf32> to vector<8x128xf32>
    %238 = arith.negf %237 : vector<8x128xf32>
    %239 = math.exp %238 : vector<8x128xf32>
    %cst_64 = arith.constant 1.000000e+00 : f32
    %240 = vector.broadcast %cst_64 : f32 to vector<8x128xf32>
    %241 = arith.addf %240, %239 : vector<8x128xf32>
    %242 = arith.divf %240, %241 : vector<8x128xf32>
    %243 = vector.extract_strided_slice %227 {offsets = [0, 256], sizes = [8, 128], strides = [1, 1]} : vector<8x512xf32> to vector<8x128xf32>
    %244 = math.tanh %243 : vector<8x128xf32>
    %245 = vector.extract_strided_slice %227 {offsets = [0, 384], sizes = [8, 128], strides = [1, 1]} : vector<8x512xf32> to vector<8x128xf32>
    %246 = arith.negf %245 : vector<8x128xf32>
    %247 = math.exp %246 : vector<8x128xf32>
    %cst_65 = arith.constant 1.000000e+00 : f32
    %248 = vector.broadcast %cst_65 : f32 to vector<8x128xf32>
    %249 = arith.addf %248, %247 : vector<8x128xf32>
    %250 = arith.divf %248, %249 : vector<8x128xf32>
    %251 = arith.mulf %242, %211 : vector<8x128xf32>
    %252 = arith.mulf %236, %244 : vector<8x128xf32>
    %253 = arith.addf %251, %252 : vector<8x128xf32>
    %254 = math.tanh %253 : vector<8x128xf32>
    %255 = arith.mulf %250, %254 : vector<8x128xf32>
    %256 = vector.extract_strided_slice %230 {offsets = [0, 0], sizes = [8, 128], strides = [1, 1]} : vector<8x512xf32> to vector<8x128xf32>
    %257 = arith.negf %256 : vector<8x128xf32>
    %258 = math.exp %257 : vector<8x128xf32>
    %cst_66 = arith.constant 1.000000e+00 : f32
    %259 = vector.broadcast %cst_66 : f32 to vector<8x128xf32>
    %260 = arith.addf %259, %258 : vector<8x128xf32>
    %261 = arith.divf %259, %260 : vector<8x128xf32>
    %262 = vector.extract_strided_slice %230 {offsets = [0, 128], sizes = [8, 128], strides = [1, 1]} : vector<8x512xf32> to vector<8x128xf32>
    %263 = arith.negf %262 : vector<8x128xf32>
    %264 = math.exp %263 : vector<8x128xf32>
    %cst_67 = arith.constant 1.000000e+00 : f32
    %265 = vector.broadcast %cst_67 : f32 to vector<8x128xf32>
    %266 = arith.addf %265, %264 : vector<8x128xf32>
    %267 = arith.divf %265, %266 : vector<8x128xf32>
    %268 = vector.extract_strided_slice %230 {offsets = [0, 256], sizes = [8, 128], strides = [1, 1]} : vector<8x512xf32> to vector<8x128xf32>
    %269 = math.tanh %268 : vector<8x128xf32>
    %270 = vector.extract_strided_slice %230 {offsets = [0, 384], sizes = [8, 128], strides = [1, 1]} : vector<8x512xf32> to vector<8x128xf32>
    %271 = arith.negf %270 : vector<8x128xf32>
    %272 = math.exp %271 : vector<8x128xf32>
    %cst_68 = arith.constant 1.000000e+00 : f32
    %273 = vector.broadcast %cst_68 : f32 to vector<8x128xf32>
    %274 = arith.addf %273, %272 : vector<8x128xf32>
    %275 = arith.divf %273, %274 : vector<8x128xf32>
    %276 = arith.mulf %267, %215 : vector<8x128xf32>
    %277 = arith.mulf %261, %269 : vector<8x128xf32>
    %278 = arith.addf %276, %277 : vector<8x128xf32>
    %279 = math.tanh %278 : vector<8x128xf32>
    %280 = arith.mulf %275, %279 : vector<8x128xf32>
    %281 = arith.index_cast %c2_i32 : i32 to index
    %c0_69 = arith.constant 0 : index
    %c0_70 = arith.constant 0 : index
    %282 = vector.load %arg1[%281, %c0_69, %c0_70] : memref<8x8x1xf32, #tpu.memory_space<vmem>>, vector<1x8x1xf32>
    %283 = vector.shape_cast %282 : vector<1x8x1xf32> to vector<8x1xf32>
    %284 = arith.index_cast %216 : i32 to index
    %c0_71 = arith.constant 0 : index
    %c0_72 = arith.constant 0 : index
    %285 = vector.load %arg1[%284, %c0_71, %c0_72] : memref<8x8x1xf32, #tpu.memory_space<vmem>>, vector<1x8x1xf32>
    %286 = vector.shape_cast %285 : vector<1x8x1xf32> to vector<8x1xf32>
    %287 = vector.broadcast %283 : vector<8x1xf32> to vector<8x128xf32>
    %288 = arith.mulf %287, %255 : vector<8x128xf32>
    %289 = arith.index_cast %c2_i32 : i32 to index
    %c0_73 = arith.constant 0 : index
    %c0_74 = arith.constant 0 : index
    %290 = vector.load %arg8[%289, %c0_73, %c0_74] : memref<8x8x256xf32, #tpu.memory_space<vmem>>, vector<1x8x128xf32>
    %291 = vector.shape_cast %290 : vector<1x8x128xf32> to vector<8x128xf32>
    %292 = vector.shape_cast %288 : vector<8x128xf32> to vector<1x8x128xf32>
    tpu.vector_store %arg8[%289, %c0_73, %c0_74], %292 {strides = array<i32>} : memref<8x8x256xf32, #tpu.memory_space<vmem>>, vector<1x8x128xf32>,
    %293 = vector.broadcast %286 : vector<8x1xf32> to vector<8x128xf32>
    %294 = arith.mulf %293, %280 : vector<8x128xf32>
    %295 = arith.index_cast %216 : i32 to index
    %c0_75 = arith.constant 0 : index
    %c128_76 = arith.constant 128 : index
    %296 = vector.load %arg8[%295, %c0_75, %c128_76] : memref<8x8x256xf32, #tpu.memory_space<vmem>>, vector<1x8x128xf32>
    %297 = vector.shape_cast %296 : vector<1x8x128xf32> to vector<8x128xf32>
    %298 = vector.shape_cast %294 : vector<8x128xf32> to vector<1x8x128xf32>
    tpu.vector_store %arg8[%295, %c0_75, %c128_76], %298 {strides = array<i32>} : memref<8x8x256xf32, #tpu.memory_space<vmem>>, vector<1x8x128xf32>,
    %299 = arith.subf %255, %203 : vector<8x128xf32>
    %300 = vector.broadcast %283 : vector<8x1xf32> to vector<8x128xf32>
    %301 = arith.mulf %300, %299 : vector<8x128xf32>
    %302 = arith.addf %203, %301 : vector<8x128xf32>
    %303 = arith.subf %280, %207 : vector<8x128xf32>
    %304 = vector.broadcast %286 : vector<8x1xf32> to vector<8x128xf32>
    %305 = arith.mulf %304, %303 : vector<8x128xf32>
    %306 = arith.addf %207, %305 : vector<8x128xf32>
    %307 = arith.subf %253, %211 : vector<8x128xf32>
    %308 = vector.broadcast %283 : vector<8x1xf32> to vector<8x128xf32>
    %309 = arith.mulf %308, %307 : vector<8x128xf32>
    %310 = arith.addf %211, %309 : vector<8x128xf32>
    %311 = arith.subf %278, %215 : vector<8x128xf32>
    %312 = vector.broadcast %286 : vector<8x1xf32> to vector<8x128xf32>
    %313 = arith.mulf %312, %311 : vector<8x128xf32>
    %314 = arith.addf %215, %313 : vector<8x128xf32>
    %c3_i32 = arith.constant 3 : i32
    %c7_i32_77 = arith.constant 7 : i32
    %315 = arith.subi %c7_i32_77, %c3_i32 : i32
    %316 = arith.truncf %302 : vector<8x128xf32> to vector<8x128xbf16>
    %cst_78 = arith.constant dense<0.000000e+00> : vector<8x512xf32>
    %317 = tpu.matmul %316, %10, %cst_78 {dimension_numbers = #tpu.dot_dimension_numbers<[1], [0], [0], [1], [0, 0, 1, 1], [], []>} : vector<8x128xbf16>, vector<128x512xbf16>, vector<8x512xf32> -> vector<8x512xf32>
    %318 = arith.truncf %306 : vector<8x128xf32> to vector<8x128xbf16>
    %cst_79 = arith.constant dense<0.000000e+00> : vector<8x512xf32>
    %319 = tpu.matmul %318, %11, %cst_79 {dimension_numbers = #tpu.dot_dimension_numbers<[1], [0], [0], [1], [0, 0, 1, 1], [], []>} : vector<8x128xbf16>, vector<128x512xbf16>, vector<8x512xf32> -> vector<8x512xf32>
    %c8_i32_80 = arith.constant 8 : i32
    %320 = arith.muli %c3_i32, %c8_i32_80 : i32
    %321 = tpu.assume_multiple %320, 8 : i32
    %c8_i32_81 = arith.constant 8 : i32
    %322 = arith.muli %315, %c8_i32_81 : i32
    %323 = tpu.assume_multiple %322, 8 : i32
    %324 = arith.index_cast %321 : i32 to index
    %c0_82 = arith.constant 0 : index
    %325 = vector.load %arg9[%324, %c0_82] : memref<64x512xf32, #tpu.memory_space<vmem>>, vector<8x512xf32>
    %326 = arith.addf %325, %317 : vector<8x512xf32>
    %327 = arith.index_cast %323 : i32 to index
    %c0_83 = arith.constant 0 : index
    %328 = vector.load %arg10[%327, %c0_83] : memref<64x512xf32, #tpu.memory_space<vmem>>, vector<8x512xf32>
    %329 = arith.addf %328, %319 : vector<8x512xf32>
    %330 = vector.extract_strided_slice %326 {offsets = [0, 0], sizes = [8, 128], strides = [1, 1]} : vector<8x512xf32> to vector<8x128xf32>
    %331 = arith.negf %330 : vector<8x128xf32>
    %332 = math.exp %331 : vector<8x128xf32>
    %cst_84 = arith.constant 1.000000e+00 : f32
    %333 = vector.broadcast %cst_84 : f32 to vector<8x128xf32>
    %334 = arith.addf %333, %332 : vector<8x128xf32>
    %335 = arith.divf %333, %334 : vector<8x128xf32>
    %336 = vector.extract_strided_slice %326 {offsets = [0, 128], sizes = [8, 128], strides = [1, 1]} : vector<8x512xf32> to vector<8x128xf32>
    %337 = arith.negf %336 : vector<8x128xf32>
    %338 = math.exp %337 : vector<8x128xf32>
    %cst_85 = arith.constant 1.000000e+00 : f32
    %339 = vector.broadcast %cst_85 : f32 to vector<8x128xf32>
    %340 = arith.addf %339, %338 : vector<8x128xf32>
    %341 = arith.divf %339, %340 : vector<8x128xf32>
    %342 = vector.extract_strided_slice %326 {offsets = [0, 256], sizes = [8, 128], strides = [1, 1]} : vector<8x512xf32> to vector<8x128xf32>
    %343 = math.tanh %342 : vector<8x128xf32>
    %344 = vector.extract_strided_slice %326 {offsets = [0, 384], sizes = [8, 128], strides = [1, 1]} : vector<8x512xf32> to vector<8x128xf32>
    %345 = arith.negf %344 : vector<8x128xf32>
    %346 = math.exp %345 : vector<8x128xf32>
    %cst_86 = arith.constant 1.000000e+00 : f32
    %347 = vector.broadcast %cst_86 : f32 to vector<8x128xf32>
    %348 = arith.addf %347, %346 : vector<8x128xf32>
    %349 = arith.divf %347, %348 : vector<8x128xf32>
    %350 = arith.mulf %341, %310 : vector<8x128xf32>
    %351 = arith.mulf %335, %343 : vector<8x128xf32>
    %352 = arith.addf %350, %351 : vector<8x128xf32>
    %353 = math.tanh %352 : vector<8x128xf32>
    %354 = arith.mulf %349, %353 : vector<8x128xf32>
    %355 = vector.extract_strided_slice %329 {offsets = [0, 0], sizes = [8, 128], strides = [1, 1]} : vector<8x512xf32> to vector<8x128xf32>
    %356 = arith.negf %355 : vector<8x128xf32>
    %357 = math.exp %356 : vector<8x128xf32>
    %cst_87 = arith.constant 1.000000e+00 : f32
    %358 = vector.broadcast %cst_87 : f32 to vector<8x128xf32>
    %359 = arith.addf %358, %357 : vector<8x128xf32>
    %360 = arith.divf %358, %359 : vector<8x128xf32>
    %361 = vector.extract_strided_slice %329 {offsets = [0, 128], sizes = [8, 128], strides = [1, 1]} : vector<8x512xf32> to vector<8x128xf32>
    %362 = arith.negf %361 : vector<8x128xf32>
    %363 = math.exp %362 : vector<8x128xf32>
    %cst_88 = arith.constant 1.000000e+00 : f32
    %364 = vector.broadcast %cst_88 : f32 to vector<8x128xf32>
    %365 = arith.addf %364, %363 : vector<8x128xf32>
    %366 = arith.divf %364, %365 : vector<8x128xf32>
    %367 = vector.extract_strided_slice %329 {offsets = [0, 256], sizes = [8, 128], strides = [1, 1]} : vector<8x512xf32> to vector<8x128xf32>
    %368 = math.tanh %367 : vector<8x128xf32>
    %369 = vector.extract_strided_slice %329 {offsets = [0, 384], sizes = [8, 128], strides = [1, 1]} : vector<8x512xf32> to vector<8x128xf32>
    %370 = arith.negf %369 : vector<8x128xf32>
    %371 = math.exp %370 : vector<8x128xf32>
    %cst_89 = arith.constant 1.000000e+00 : f32
    %372 = vector.broadcast %cst_89 : f32 to vector<8x128xf32>
    %373 = arith.addf %372, %371 : vector<8x128xf32>
    %374 = arith.divf %372, %373 : vector<8x128xf32>
    %375 = arith.mulf %366, %314 : vector<8x128xf32>
    %376 = arith.mulf %360, %368 : vector<8x128xf32>
    %377 = arith.addf %375, %376 : vector<8x128xf32>
    %378 = math.tanh %377 : vector<8x128xf32>
    %379 = arith.mulf %374, %378 : vector<8x128xf32>
    %380 = arith.index_cast %c3_i32 : i32 to index
    %c0_90 = arith.constant 0 : index
    %c0_91 = arith.constant 0 : index
    %381 = vector.load %arg1[%380, %c0_90, %c0_91] : memref<8x8x1xf32, #tpu.memory_space<vmem>>, vector<1x8x1xf32>
    %382 = vector.shape_cast %381 : vector<1x8x1xf32> to vector<8x1xf32>
    %383 = arith.index_cast %315 : i32 to index
    %c0_92 = arith.constant 0 : index
    %c0_93 = arith.constant 0 : index
    %384 = vector.load %arg1[%383, %c0_92, %c0_93] : memref<8x8x1xf32, #tpu.memory_space<vmem>>, vector<1x8x1xf32>
    %385 = vector.shape_cast %384 : vector<1x8x1xf32> to vector<8x1xf32>
    %386 = vector.broadcast %382 : vector<8x1xf32> to vector<8x128xf32>
    %387 = arith.mulf %386, %354 : vector<8x128xf32>
    %388 = arith.index_cast %c3_i32 : i32 to index
    %c0_94 = arith.constant 0 : index
    %c0_95 = arith.constant 0 : index
    %389 = vector.load %arg8[%388, %c0_94, %c0_95] : memref<8x8x256xf32, #tpu.memory_space<vmem>>, vector<1x8x128xf32>
    %390 = vector.shape_cast %389 : vector<1x8x128xf32> to vector<8x128xf32>
    %391 = vector.shape_cast %387 : vector<8x128xf32> to vector<1x8x128xf32>
    tpu.vector_store %arg8[%388, %c0_94, %c0_95], %391 {strides = array<i32>} : memref<8x8x256xf32, #tpu.memory_space<vmem>>, vector<1x8x128xf32>,
    %392 = vector.broadcast %385 : vector<8x1xf32> to vector<8x128xf32>
    %393 = arith.mulf %392, %379 : vector<8x128xf32>
    %394 = arith.index_cast %315 : i32 to index
    %c0_96 = arith.constant 0 : index
    %c128_97 = arith.constant 128 : index
    %395 = vector.load %arg8[%394, %c0_96, %c128_97] : memref<8x8x256xf32, #tpu.memory_space<vmem>>, vector<1x8x128xf32>
    %396 = vector.shape_cast %395 : vector<1x8x128xf32> to vector<8x128xf32>
    %397 = vector.shape_cast %393 : vector<8x128xf32> to vector<1x8x128xf32>
    tpu.vector_store %arg8[%394, %c0_96, %c128_97], %397 {strides = array<i32>} : memref<8x8x256xf32, #tpu.memory_space<vmem>>, vector<1x8x128xf32>,
    %398 = arith.subf %354, %302 : vector<8x128xf32>
    %399 = vector.broadcast %382 : vector<8x1xf32> to vector<8x128xf32>
    %400 = arith.mulf %399, %398 : vector<8x128xf32>
    %401 = arith.addf %302, %400 : vector<8x128xf32>
    %402 = arith.subf %379, %306 : vector<8x128xf32>
    %403 = vector.broadcast %385 : vector<8x1xf32> to vector<8x128xf32>
    %404 = arith.mulf %403, %402 : vector<8x128xf32>
    %405 = arith.addf %306, %404 : vector<8x128xf32>
    %406 = arith.subf %352, %310 : vector<8x128xf32>
    %407 = vector.broadcast %382 : vector<8x1xf32> to vector<8x128xf32>
    %408 = arith.mulf %407, %406 : vector<8x128xf32>
    %409 = arith.addf %310, %408 : vector<8x128xf32>
    %410 = arith.subf %377, %314 : vector<8x128xf32>
    %411 = vector.broadcast %385 : vector<8x1xf32> to vector<8x128xf32>
    %412 = arith.mulf %411, %410 : vector<8x128xf32>
    %413 = arith.addf %314, %412 : vector<8x128xf32>
    %c4_i32 = arith.constant 4 : i32
    %c7_i32_98 = arith.constant 7 : i32
    %414 = arith.subi %c7_i32_98, %c4_i32 : i32
    %415 = arith.truncf %401 : vector<8x128xf32> to vector<8x128xbf16>
    %cst_99 = arith.constant dense<0.000000e+00> : vector<8x512xf32>
    %416 = tpu.matmul %415, %10, %cst_99 {dimension_numbers = #tpu.dot_dimension_numbers<[1], [0], [0], [1], [0, 0, 1, 1], [], []>} : vector<8x128xbf16>, vector<128x512xbf16>, vector<8x512xf32> -> vector<8x512xf32>
    %417 = arith.truncf %405 : vector<8x128xf32> to vector<8x128xbf16>
    %cst_100 = arith.constant dense<0.000000e+00> : vector<8x512xf32>
    %418 = tpu.matmul %417, %11, %cst_100 {dimension_numbers = #tpu.dot_dimension_numbers<[1], [0], [0], [1], [0, 0, 1, 1], [], []>} : vector<8x128xbf16>, vector<128x512xbf16>, vector<8x512xf32> -> vector<8x512xf32>
    %c8_i32_101 = arith.constant 8 : i32
    %419 = arith.muli %c4_i32, %c8_i32_101 : i32
    %420 = tpu.assume_multiple %419, 8 : i32
    %c8_i32_102 = arith.constant 8 : i32
    %421 = arith.muli %414, %c8_i32_102 : i32
    %422 = tpu.assume_multiple %421, 8 : i32
    %423 = arith.index_cast %420 : i32 to index
    %c0_103 = arith.constant 0 : index
    %424 = vector.load %arg9[%423, %c0_103] : memref<64x512xf32, #tpu.memory_space<vmem>>, vector<8x512xf32>
    %425 = arith.addf %424, %416 : vector<8x512xf32>
    %426 = arith.index_cast %422 : i32 to index
    %c0_104 = arith.constant 0 : index
    %427 = vector.load %arg10[%426, %c0_104] : memref<64x512xf32, #tpu.memory_space<vmem>>, vector<8x512xf32>
    %428 = arith.addf %427, %418 : vector<8x512xf32>
    %429 = vector.extract_strided_slice %425 {offsets = [0, 0], sizes = [8, 128], strides = [1, 1]} : vector<8x512xf32> to vector<8x128xf32>
    %430 = arith.negf %429 : vector<8x128xf32>
    %431 = math.exp %430 : vector<8x128xf32>
    %cst_105 = arith.constant 1.000000e+00 : f32
    %432 = vector.broadcast %cst_105 : f32 to vector<8x128xf32>
    %433 = arith.addf %432, %431 : vector<8x128xf32>
    %434 = arith.divf %432, %433 : vector<8x128xf32>
    %435 = vector.extract_strided_slice %425 {offsets = [0, 128], sizes = [8, 128], strides = [1, 1]} : vector<8x512xf32> to vector<8x128xf32>
    %436 = arith.negf %435 : vector<8x128xf32>
    %437 = math.exp %436 : vector<8x128xf32>
    %cst_106 = arith.constant 1.000000e+00 : f32
    %438 = vector.broadcast %cst_106 : f32 to vector<8x128xf32>
    %439 = arith.addf %438, %437 : vector<8x128xf32>
    %440 = arith.divf %438, %439 : vector<8x128xf32>
    %441 = vector.extract_strided_slice %425 {offsets = [0, 256], sizes = [8, 128], strides = [1, 1]} : vector<8x512xf32> to vector<8x128xf32>
    %442 = math.tanh %441 : vector<8x128xf32>
    %443 = vector.extract_strided_slice %425 {offsets = [0, 384], sizes = [8, 128], strides = [1, 1]} : vector<8x512xf32> to vector<8x128xf32>
    %444 = arith.negf %443 : vector<8x128xf32>
    %445 = math.exp %444 : vector<8x128xf32>
    %cst_107 = arith.constant 1.000000e+00 : f32
    %446 = vector.broadcast %cst_107 : f32 to vector<8x128xf32>
    %447 = arith.addf %446, %445 : vector<8x128xf32>
    %448 = arith.divf %446, %447 : vector<8x128xf32>
    %449 = arith.mulf %440, %409 : vector<8x128xf32>
    %450 = arith.mulf %434, %442 : vector<8x128xf32>
    %451 = arith.addf %449, %450 : vector<8x128xf32>
    %452 = math.tanh %451 : vector<8x128xf32>
    %453 = arith.mulf %448, %452 : vector<8x128xf32>
    %454 = vector.extract_strided_slice %428 {offsets = [0, 0], sizes = [8, 128], strides = [1, 1]} : vector<8x512xf32> to vector<8x128xf32>
    %455 = arith.negf %454 : vector<8x128xf32>
    %456 = math.exp %455 : vector<8x128xf32>
    %cst_108 = arith.constant 1.000000e+00 : f32
    %457 = vector.broadcast %cst_108 : f32 to vector<8x128xf32>
    %458 = arith.addf %457, %456 : vector<8x128xf32>
    %459 = arith.divf %457, %458 : vector<8x128xf32>
    %460 = vector.extract_strided_slice %428 {offsets = [0, 128], sizes = [8, 128], strides = [1, 1]} : vector<8x512xf32> to vector<8x128xf32>
    %461 = arith.negf %460 : vector<8x128xf32>
    %462 = math.exp %461 : vector<8x128xf32>
    %cst_109 = arith.constant 1.000000e+00 : f32
    %463 = vector.broadcast %cst_109 : f32 to vector<8x128xf32>
    %464 = arith.addf %463, %462 : vector<8x128xf32>
    %465 = arith.divf %463, %464 : vector<8x128xf32>
    %466 = vector.extract_strided_slice %428 {offsets = [0, 256], sizes = [8, 128], strides = [1, 1]} : vector<8x512xf32> to vector<8x128xf32>
    %467 = math.tanh %466 : vector<8x128xf32>
    %468 = vector.extract_strided_slice %428 {offsets = [0, 384], sizes = [8, 128], strides = [1, 1]} : vector<8x512xf32> to vector<8x128xf32>
    %469 = arith.negf %468 : vector<8x128xf32>
    %470 = math.exp %469 : vector<8x128xf32>
    %cst_110 = arith.constant 1.000000e+00 : f32
    %471 = vector.broadcast %cst_110 : f32 to vector<8x128xf32>
    %472 = arith.addf %471, %470 : vector<8x128xf32>
    %473 = arith.divf %471, %472 : vector<8x128xf32>
    %474 = arith.mulf %465, %413 : vector<8x128xf32>
    %475 = arith.mulf %459, %467 : vector<8x128xf32>
    %476 = arith.addf %474, %475 : vector<8x128xf32>
    %477 = math.tanh %476 : vector<8x128xf32>
    %478 = arith.mulf %473, %477 : vector<8x128xf32>
    %479 = arith.index_cast %c4_i32 : i32 to index
    %c0_111 = arith.constant 0 : index
    %c0_112 = arith.constant 0 : index
    %480 = vector.load %arg1[%479, %c0_111, %c0_112] : memref<8x8x1xf32, #tpu.memory_space<vmem>>, vector<1x8x1xf32>
    %481 = vector.shape_cast %480 : vector<1x8x1xf32> to vector<8x1xf32>
    %482 = arith.index_cast %414 : i32 to index
    %c0_113 = arith.constant 0 : index
    %c0_114 = arith.constant 0 : index
    %483 = vector.load %arg1[%482, %c0_113, %c0_114] : memref<8x8x1xf32, #tpu.memory_space<vmem>>, vector<1x8x1xf32>
    %484 = vector.shape_cast %483 : vector<1x8x1xf32> to vector<8x1xf32>
    %485 = vector.broadcast %481 : vector<8x1xf32> to vector<8x128xf32>
    %486 = arith.mulf %485, %453 : vector<8x128xf32>
    %487 = arith.index_cast %c4_i32 : i32 to index
    %c0_115 = arith.constant 0 : index
    %c0_116 = arith.constant 0 : index
    %488 = vector.load %arg8[%487, %c0_115, %c0_116] : memref<8x8x256xf32, #tpu.memory_space<vmem>>, vector<1x8x128xf32>
    %489 = vector.shape_cast %488 : vector<1x8x128xf32> to vector<8x128xf32>
    %490 = vector.shape_cast %486 : vector<8x128xf32> to vector<1x8x128xf32>
    tpu.vector_store %arg8[%487, %c0_115, %c0_116], %490 {strides = array<i32>} : memref<8x8x256xf32, #tpu.memory_space<vmem>>, vector<1x8x128xf32>,
    %491 = vector.broadcast %484 : vector<8x1xf32> to vector<8x128xf32>
    %492 = arith.mulf %491, %478 : vector<8x128xf32>
    %493 = arith.index_cast %414 : i32 to index
    %c0_117 = arith.constant 0 : index
    %c128_118 = arith.constant 128 : index
    %494 = vector.load %arg8[%493, %c0_117, %c128_118] : memref<8x8x256xf32, #tpu.memory_space<vmem>>, vector<1x8x128xf32>
    %495 = vector.shape_cast %494 : vector<1x8x128xf32> to vector<8x128xf32>
    %496 = vector.shape_cast %492 : vector<8x128xf32> to vector<1x8x128xf32>
    tpu.vector_store %arg8[%493, %c0_117, %c128_118], %496 {strides = array<i32>} : memref<8x8x256xf32, #tpu.memory_space<vmem>>, vector<1x8x128xf32>,
    %497 = arith.subf %453, %401 : vector<8x128xf32>
    %498 = vector.broadcast %481 : vector<8x1xf32> to vector<8x128xf32>
    %499 = arith.mulf %498, %497 : vector<8x128xf32>
    %500 = arith.addf %401, %499 : vector<8x128xf32>
    %501 = arith.subf %478, %405 : vector<8x128xf32>
    %502 = vector.broadcast %484 : vector<8x1xf32> to vector<8x128xf32>
    %503 = arith.mulf %502, %501 : vector<8x128xf32>
    %504 = arith.addf %405, %503 : vector<8x128xf32>
    %505 = arith.subf %451, %409 : vector<8x128xf32>
    %506 = vector.broadcast %481 : vector<8x1xf32> to vector<8x128xf32>
    %507 = arith.mulf %506, %505 : vector<8x128xf32>
    %508 = arith.addf %409, %507 : vector<8x128xf32>
    %509 = arith.subf %476, %413 : vector<8x128xf32>
    %510 = vector.broadcast %484 : vector<8x1xf32> to vector<8x128xf32>
    %511 = arith.mulf %510, %509 : vector<8x128xf32>
    %512 = arith.addf %413, %511 : vector<8x128xf32>
    %c5_i32 = arith.constant 5 : i32
    %c7_i32_119 = arith.constant 7 : i32
    %513 = arith.subi %c7_i32_119, %c5_i32 : i32
    %514 = arith.truncf %500 : vector<8x128xf32> to vector<8x128xbf16>
    %cst_120 = arith.constant dense<0.000000e+00> : vector<8x512xf32>
    %515 = tpu.matmul %514, %10, %cst_120 {dimension_numbers = #tpu.dot_dimension_numbers<[1], [0], [0], [1], [0, 0, 1, 1], [], []>} : vector<8x128xbf16>, vector<128x512xbf16>, vector<8x512xf32> -> vector<8x512xf32>
    %516 = arith.truncf %504 : vector<8x128xf32> to vector<8x128xbf16>
    %cst_121 = arith.constant dense<0.000000e+00> : vector<8x512xf32>
    %517 = tpu.matmul %516, %11, %cst_121 {dimension_numbers = #tpu.dot_dimension_numbers<[1], [0], [0], [1], [0, 0, 1, 1], [], []>} : vector<8x128xbf16>, vector<128x512xbf16>, vector<8x512xf32> -> vector<8x512xf32>
    %c8_i32_122 = arith.constant 8 : i32
    %518 = arith.muli %c5_i32, %c8_i32_122 : i32
    %519 = tpu.assume_multiple %518, 8 : i32
    %c8_i32_123 = arith.constant 8 : i32
    %520 = arith.muli %513, %c8_i32_123 : i32
    %521 = tpu.assume_multiple %520, 8 : i32
    %522 = arith.index_cast %519 : i32 to index
    %c0_124 = arith.constant 0 : index
    %523 = vector.load %arg9[%522, %c0_124] : memref<64x512xf32, #tpu.memory_space<vmem>>, vector<8x512xf32>
    %524 = arith.addf %523, %515 : vector<8x512xf32>
    %525 = arith.index_cast %521 : i32 to index
    %c0_125 = arith.constant 0 : index
    %526 = vector.load %arg10[%525, %c0_125] : memref<64x512xf32, #tpu.memory_space<vmem>>, vector<8x512xf32>
    %527 = arith.addf %526, %517 : vector<8x512xf32>
    %528 = vector.extract_strided_slice %524 {offsets = [0, 0], sizes = [8, 128], strides = [1, 1]} : vector<8x512xf32> to vector<8x128xf32>
    %529 = arith.negf %528 : vector<8x128xf32>
    %530 = math.exp %529 : vector<8x128xf32>
    %cst_126 = arith.constant 1.000000e+00 : f32
    %531 = vector.broadcast %cst_126 : f32 to vector<8x128xf32>
    %532 = arith.addf %531, %530 : vector<8x128xf32>
    %533 = arith.divf %531, %532 : vector<8x128xf32>
    %534 = vector.extract_strided_slice %524 {offsets = [0, 128], sizes = [8, 128], strides = [1, 1]} : vector<8x512xf32> to vector<8x128xf32>
    %535 = arith.negf %534 : vector<8x128xf32>
    %536 = math.exp %535 : vector<8x128xf32>
    %cst_127 = arith.constant 1.000000e+00 : f32
    %537 = vector.broadcast %cst_127 : f32 to vector<8x128xf32>
    %538 = arith.addf %537, %536 : vector<8x128xf32>
    %539 = arith.divf %537, %538 : vector<8x128xf32>
    %540 = vector.extract_strided_slice %524 {offsets = [0, 256], sizes = [8, 128], strides = [1, 1]} : vector<8x512xf32> to vector<8x128xf32>
    %541 = math.tanh %540 : vector<8x128xf32>
    %542 = vector.extract_strided_slice %524 {offsets = [0, 384], sizes = [8, 128], strides = [1, 1]} : vector<8x512xf32> to vector<8x128xf32>
    %543 = arith.negf %542 : vector<8x128xf32>
    %544 = math.exp %543 : vector<8x128xf32>
    %cst_128 = arith.constant 1.000000e+00 : f32
    %545 = vector.broadcast %cst_128 : f32 to vector<8x128xf32>
    %546 = arith.addf %545, %544 : vector<8x128xf32>
    %547 = arith.divf %545, %546 : vector<8x128xf32>
    %548 = arith.mulf %539, %508 : vector<8x128xf32>
    %549 = arith.mulf %533, %541 : vector<8x128xf32>
    %550 = arith.addf %548, %549 : vector<8x128xf32>
    %551 = math.tanh %550 : vector<8x128xf32>
    %552 = arith.mulf %547, %551 : vector<8x128xf32>
    %553 = vector.extract_strided_slice %527 {offsets = [0, 0], sizes = [8, 128], strides = [1, 1]} : vector<8x512xf32> to vector<8x128xf32>
    %554 = arith.negf %553 : vector<8x128xf32>
    %555 = math.exp %554 : vector<8x128xf32>
    %cst_129 = arith.constant 1.000000e+00 : f32
    %556 = vector.broadcast %cst_129 : f32 to vector<8x128xf32>
    %557 = arith.addf %556, %555 : vector<8x128xf32>
    %558 = arith.divf %556, %557 : vector<8x128xf32>
    %559 = vector.extract_strided_slice %527 {offsets = [0, 128], sizes = [8, 128], strides = [1, 1]} : vector<8x512xf32> to vector<8x128xf32>
    %560 = arith.negf %559 : vector<8x128xf32>
    %561 = math.exp %560 : vector<8x128xf32>
    %cst_130 = arith.constant 1.000000e+00 : f32
    %562 = vector.broadcast %cst_130 : f32 to vector<8x128xf32>
    %563 = arith.addf %562, %561 : vector<8x128xf32>
    %564 = arith.divf %562, %563 : vector<8x128xf32>
    %565 = vector.extract_strided_slice %527 {offsets = [0, 256], sizes = [8, 128], strides = [1, 1]} : vector<8x512xf32> to vector<8x128xf32>
    %566 = math.tanh %565 : vector<8x128xf32>
    %567 = vector.extract_strided_slice %527 {offsets = [0, 384], sizes = [8, 128], strides = [1, 1]} : vector<8x512xf32> to vector<8x128xf32>
    %568 = arith.negf %567 : vector<8x128xf32>
    %569 = math.exp %568 : vector<8x128xf32>
    %cst_131 = arith.constant 1.000000e+00 : f32
    %570 = vector.broadcast %cst_131 : f32 to vector<8x128xf32>
    %571 = arith.addf %570, %569 : vector<8x128xf32>
    %572 = arith.divf %570, %571 : vector<8x128xf32>
    %573 = arith.mulf %564, %512 : vector<8x128xf32>
    %574 = arith.mulf %558, %566 : vector<8x128xf32>
    %575 = arith.addf %573, %574 : vector<8x128xf32>
    %576 = math.tanh %575 : vector<8x128xf32>
    %577 = arith.mulf %572, %576 : vector<8x128xf32>
    %578 = arith.index_cast %c5_i32 : i32 to index
    %c0_132 = arith.constant 0 : index
    %c0_133 = arith.constant 0 : index
    %579 = vector.load %arg1[%578, %c0_132, %c0_133] : memref<8x8x1xf32, #tpu.memory_space<vmem>>, vector<1x8x1xf32>
    %580 = vector.shape_cast %579 : vector<1x8x1xf32> to vector<8x1xf32>
    %581 = arith.index_cast %513 : i32 to index
    %c0_134 = arith.constant 0 : index
    %c0_135 = arith.constant 0 : index
    %582 = vector.load %arg1[%581, %c0_134, %c0_135] : memref<8x8x1xf32, #tpu.memory_space<vmem>>, vector<1x8x1xf32>
    %583 = vector.shape_cast %582 : vector<1x8x1xf32> to vector<8x1xf32>
    %584 = vector.broadcast %580 : vector<8x1xf32> to vector<8x128xf32>
    %585 = arith.mulf %584, %552 : vector<8x128xf32>
    %586 = arith.index_cast %c5_i32 : i32 to index
    %c0_136 = arith.constant 0 : index
    %c0_137 = arith.constant 0 : index
    %587 = vector.load %arg8[%586, %c0_136, %c0_137] : memref<8x8x256xf32, #tpu.memory_space<vmem>>, vector<1x8x128xf32>
    %588 = vector.shape_cast %587 : vector<1x8x128xf32> to vector<8x128xf32>
    %589 = vector.shape_cast %585 : vector<8x128xf32> to vector<1x8x128xf32>
    tpu.vector_store %arg8[%586, %c0_136, %c0_137], %589 {strides = array<i32>} : memref<8x8x256xf32, #tpu.memory_space<vmem>>, vector<1x8x128xf32>,
    %590 = vector.broadcast %583 : vector<8x1xf32> to vector<8x128xf32>
    %591 = arith.mulf %590, %577 : vector<8x128xf32>
    %592 = arith.index_cast %513 : i32 to index
    %c0_138 = arith.constant 0 : index
    %c128_139 = arith.constant 128 : index
    %593 = vector.load %arg8[%592, %c0_138, %c128_139] : memref<8x8x256xf32, #tpu.memory_space<vmem>>, vector<1x8x128xf32>
    %594 = vector.shape_cast %593 : vector<1x8x128xf32> to vector<8x128xf32>
    %595 = vector.shape_cast %591 : vector<8x128xf32> to vector<1x8x128xf32>
    tpu.vector_store %arg8[%592, %c0_138, %c128_139], %595 {strides = array<i32>} : memref<8x8x256xf32, #tpu.memory_space<vmem>>, vector<1x8x128xf32>,
    %596 = arith.subf %552, %500 : vector<8x128xf32>
    %597 = vector.broadcast %580 : vector<8x1xf32> to vector<8x128xf32>
    %598 = arith.mulf %597, %596 : vector<8x128xf32>
    %599 = arith.addf %500, %598 : vector<8x128xf32>
    %600 = arith.subf %577, %504 : vector<8x128xf32>
    %601 = vector.broadcast %583 : vector<8x1xf32> to vector<8x128xf32>
    %602 = arith.mulf %601, %600 : vector<8x128xf32>
    %603 = arith.addf %504, %602 : vector<8x128xf32>
    %604 = arith.subf %550, %508 : vector<8x128xf32>
    %605 = vector.broadcast %580 : vector<8x1xf32> to vector<8x128xf32>
    %606 = arith.mulf %605, %604 : vector<8x128xf32>
    %607 = arith.addf %508, %606 : vector<8x128xf32>
    %608 = arith.subf %575, %512 : vector<8x128xf32>
    %609 = vector.broadcast %583 : vector<8x1xf32> to vector<8x128xf32>
    %610 = arith.mulf %609, %608 : vector<8x128xf32>
    %611 = arith.addf %512, %610 : vector<8x128xf32>
    %c6_i32 = arith.constant 6 : i32
    %c7_i32_140 = arith.constant 7 : i32
    %612 = arith.subi %c7_i32_140, %c6_i32 : i32
    %613 = arith.truncf %599 : vector<8x128xf32> to vector<8x128xbf16>
    %cst_141 = arith.constant dense<0.000000e+00> : vector<8x512xf32>
    %614 = tpu.matmul %613, %10, %cst_141 {dimension_numbers = #tpu.dot_dimension_numbers<[1], [0], [0], [1], [0, 0, 1, 1], [], []>} : vector<8x128xbf16>, vector<128x512xbf16>, vector<8x512xf32> -> vector<8x512xf32>
    %615 = arith.truncf %603 : vector<8x128xf32> to vector<8x128xbf16>
    %cst_142 = arith.constant dense<0.000000e+00> : vector<8x512xf32>
    %616 = tpu.matmul %615, %11, %cst_142 {dimension_numbers = #tpu.dot_dimension_numbers<[1], [0], [0], [1], [0, 0, 1, 1], [], []>} : vector<8x128xbf16>, vector<128x512xbf16>, vector<8x512xf32> -> vector<8x512xf32>
    %c8_i32_143 = arith.constant 8 : i32
    %617 = arith.muli %c6_i32, %c8_i32_143 : i32
    %618 = tpu.assume_multiple %617, 8 : i32
    %c8_i32_144 = arith.constant 8 : i32
    %619 = arith.muli %612, %c8_i32_144 : i32
    %620 = tpu.assume_multiple %619, 8 : i32
    %621 = arith.index_cast %618 : i32 to index
    %c0_145 = arith.constant 0 : index
    %622 = vector.load %arg9[%621, %c0_145] : memref<64x512xf32, #tpu.memory_space<vmem>>, vector<8x512xf32>
    %623 = arith.addf %622, %614 : vector<8x512xf32>
    %624 = arith.index_cast %620 : i32 to index
    %c0_146 = arith.constant 0 : index
    %625 = vector.load %arg10[%624, %c0_146] : memref<64x512xf32, #tpu.memory_space<vmem>>, vector<8x512xf32>
    %626 = arith.addf %625, %616 : vector<8x512xf32>
    %627 = vector.extract_strided_slice %623 {offsets = [0, 0], sizes = [8, 128], strides = [1, 1]} : vector<8x512xf32> to vector<8x128xf32>
    %628 = arith.negf %627 : vector<8x128xf32>
    %629 = math.exp %628 : vector<8x128xf32>
    %cst_147 = arith.constant 1.000000e+00 : f32
    %630 = vector.broadcast %cst_147 : f32 to vector<8x128xf32>
    %631 = arith.addf %630, %629 : vector<8x128xf32>
    %632 = arith.divf %630, %631 : vector<8x128xf32>
    %633 = vector.extract_strided_slice %623 {offsets = [0, 128], sizes = [8, 128], strides = [1, 1]} : vector<8x512xf32> to vector<8x128xf32>
    %634 = arith.negf %633 : vector<8x128xf32>
    %635 = math.exp %634 : vector<8x128xf32>
    %cst_148 = arith.constant 1.000000e+00 : f32
    %636 = vector.broadcast %cst_148 : f32 to vector<8x128xf32>
    %637 = arith.addf %636, %635 : vector<8x128xf32>
    %638 = arith.divf %636, %637 : vector<8x128xf32>
    %639 = vector.extract_strided_slice %623 {offsets = [0, 256], sizes = [8, 128], strides = [1, 1]} : vector<8x512xf32> to vector<8x128xf32>
    %640 = math.tanh %639 : vector<8x128xf32>
    %641 = vector.extract_strided_slice %623 {offsets = [0, 384], sizes = [8, 128], strides = [1, 1]} : vector<8x512xf32> to vector<8x128xf32>
    %642 = arith.negf %641 : vector<8x128xf32>
    %643 = math.exp %642 : vector<8x128xf32>
    %cst_149 = arith.constant 1.000000e+00 : f32
    %644 = vector.broadcast %cst_149 : f32 to vector<8x128xf32>
    %645 = arith.addf %644, %643 : vector<8x128xf32>
    %646 = arith.divf %644, %645 : vector<8x128xf32>
    %647 = arith.mulf %638, %607 : vector<8x128xf32>
    %648 = arith.mulf %632, %640 : vector<8x128xf32>
    %649 = arith.addf %647, %648 : vector<8x128xf32>
    %650 = math.tanh %649 : vector<8x128xf32>
    %651 = arith.mulf %646, %650 : vector<8x128xf32>
    %652 = vector.extract_strided_slice %626 {offsets = [0, 0], sizes = [8, 128], strides = [1, 1]} : vector<8x512xf32> to vector<8x128xf32>
    %653 = arith.negf %652 : vector<8x128xf32>
    %654 = math.exp %653 : vector<8x128xf32>
    %cst_150 = arith.constant 1.000000e+00 : f32
    %655 = vector.broadcast %cst_150 : f32 to vector<8x128xf32>
    %656 = arith.addf %655, %654 : vector<8x128xf32>
    %657 = arith.divf %655, %656 : vector<8x128xf32>
    %658 = vector.extract_strided_slice %626 {offsets = [0, 128], sizes = [8, 128], strides = [1, 1]} : vector<8x512xf32> to vector<8x128xf32>
    %659 = arith.negf %658 : vector<8x128xf32>
    %660 = math.exp %659 : vector<8x128xf32>
    %cst_151 = arith.constant 1.000000e+00 : f32
    %661 = vector.broadcast %cst_151 : f32 to vector<8x128xf32>
    %662 = arith.addf %661, %660 : vector<8x128xf32>
    %663 = arith.divf %661, %662 : vector<8x128xf32>
    %664 = vector.extract_strided_slice %626 {offsets = [0, 256], sizes = [8, 128], strides = [1, 1]} : vector<8x512xf32> to vector<8x128xf32>
    %665 = math.tanh %664 : vector<8x128xf32>
    %666 = vector.extract_strided_slice %626 {offsets = [0, 384], sizes = [8, 128], strides = [1, 1]} : vector<8x512xf32> to vector<8x128xf32>
    %667 = arith.negf %666 : vector<8x128xf32>
    %668 = math.exp %667 : vector<8x128xf32>
    %cst_152 = arith.constant 1.000000e+00 : f32
    %669 = vector.broadcast %cst_152 : f32 to vector<8x128xf32>
    %670 = arith.addf %669, %668 : vector<8x128xf32>
    %671 = arith.divf %669, %670 : vector<8x128xf32>
    %672 = arith.mulf %663, %611 : vector<8x128xf32>
    %673 = arith.mulf %657, %665 : vector<8x128xf32>
    %674 = arith.addf %672, %673 : vector<8x128xf32>
    %675 = math.tanh %674 : vector<8x128xf32>
    %676 = arith.mulf %671, %675 : vector<8x128xf32>
    %677 = arith.index_cast %c6_i32 : i32 to index
    %c0_153 = arith.constant 0 : index
    %c0_154 = arith.constant 0 : index
    %678 = vector.load %arg1[%677, %c0_153, %c0_154] : memref<8x8x1xf32, #tpu.memory_space<vmem>>, vector<1x8x1xf32>
    %679 = vector.shape_cast %678 : vector<1x8x1xf32> to vector<8x1xf32>
    %680 = arith.index_cast %612 : i32 to index
    %c0_155 = arith.constant 0 : index
    %c0_156 = arith.constant 0 : index
    %681 = vector.load %arg1[%680, %c0_155, %c0_156] : memref<8x8x1xf32, #tpu.memory_space<vmem>>, vector<1x8x1xf32>
    %682 = vector.shape_cast %681 : vector<1x8x1xf32> to vector<8x1xf32>
    %683 = vector.broadcast %679 : vector<8x1xf32> to vector<8x128xf32>
    %684 = arith.mulf %683, %651 : vector<8x128xf32>
    %685 = arith.index_cast %c6_i32 : i32 to index
    %c0_157 = arith.constant 0 : index
    %c0_158 = arith.constant 0 : index
    %686 = vector.load %arg8[%685, %c0_157, %c0_158] : memref<8x8x256xf32, #tpu.memory_space<vmem>>, vector<1x8x128xf32>
    %687 = vector.shape_cast %686 : vector<1x8x128xf32> to vector<8x128xf32>
    %688 = vector.shape_cast %684 : vector<8x128xf32> to vector<1x8x128xf32>
    tpu.vector_store %arg8[%685, %c0_157, %c0_158], %688 {strides = array<i32>} : memref<8x8x256xf32, #tpu.memory_space<vmem>>, vector<1x8x128xf32>,
    %689 = vector.broadcast %682 : vector<8x1xf32> to vector<8x128xf32>
    %690 = arith.mulf %689, %676 : vector<8x128xf32>
    %691 = arith.index_cast %612 : i32 to index
    %c0_159 = arith.constant 0 : index
    %c128_160 = arith.constant 128 : index
    %692 = vector.load %arg8[%691, %c0_159, %c128_160] : memref<8x8x256xf32, #tpu.memory_space<vmem>>, vector<1x8x128xf32>
    %693 = vector.shape_cast %692 : vector<1x8x128xf32> to vector<8x128xf32>
    %694 = vector.shape_cast %690 : vector<8x128xf32> to vector<1x8x128xf32>
    tpu.vector_store %arg8[%691, %c0_159, %c128_160], %694 {strides = array<i32>} : memref<8x8x256xf32, #tpu.memory_space<vmem>>, vector<1x8x128xf32>,
    %695 = arith.subf %651, %599 : vector<8x128xf32>
    %696 = vector.broadcast %679 : vector<8x1xf32> to vector<8x128xf32>
    %697 = arith.mulf %696, %695 : vector<8x128xf32>
    %698 = arith.addf %599, %697 : vector<8x128xf32>
    %699 = arith.subf %676, %603 : vector<8x128xf32>
    %700 = vector.broadcast %682 : vector<8x1xf32> to vector<8x128xf32>
    %701 = arith.mulf %700, %699 : vector<8x128xf32>
    %702 = arith.addf %603, %701 : vector<8x128xf32>
    %703 = arith.subf %649, %607 : vector<8x128xf32>
    %704 = vector.broadcast %679 : vector<8x1xf32> to vector<8x128xf32>
    %705 = arith.mulf %704, %703 : vector<8x128xf32>
    %706 = arith.addf %607, %705 : vector<8x128xf32>
    %707 = arith.subf %674, %611 : vector<8x128xf32>
    %708 = vector.broadcast %682 : vector<8x1xf32> to vector<8x128xf32>
    %709 = arith.mulf %708, %707 : vector<8x128xf32>
    %710 = arith.addf %611, %709 : vector<8x128xf32>
    %c7_i32_161 = arith.constant 7 : i32
    %c7_i32_162 = arith.constant 7 : i32
    %711 = arith.subi %c7_i32_162, %c7_i32_161 : i32
    %712 = arith.truncf %698 : vector<8x128xf32> to vector<8x128xbf16>
    %cst_163 = arith.constant dense<0.000000e+00> : vector<8x512xf32>
    %713 = tpu.matmul %712, %10, %cst_163 {dimension_numbers = #tpu.dot_dimension_numbers<[1], [0], [0], [1], [0, 0, 1, 1], [], []>} : vector<8x128xbf16>, vector<128x512xbf16>, vector<8x512xf32> -> vector<8x512xf32>
    %714 = arith.truncf %702 : vector<8x128xf32> to vector<8x128xbf16>
    %cst_164 = arith.constant dense<0.000000e+00> : vector<8x512xf32>
    %715 = tpu.matmul %714, %11, %cst_164 {dimension_numbers = #tpu.dot_dimension_numbers<[1], [0], [0], [1], [0, 0, 1, 1], [], []>} : vector<8x128xbf16>, vector<128x512xbf16>, vector<8x512xf32> -> vector<8x512xf32>
    %c8_i32_165 = arith.constant 8 : i32
    %716 = arith.muli %c7_i32_161, %c8_i32_165 : i32
    %717 = tpu.assume_multiple %716, 8 : i32
    %c8_i32_166 = arith.constant 8 : i32
    %718 = arith.muli %711, %c8_i32_166 : i32
    %719 = tpu.assume_multiple %718, 8 : i32
    %720 = arith.index_cast %717 : i32 to index
    %c0_167 = arith.constant 0 : index
    %721 = vector.load %arg9[%720, %c0_167] : memref<64x512xf32, #tpu.memory_space<vmem>>, vector<8x512xf32>
    %722 = arith.addf %721, %713 : vector<8x512xf32>
    %723 = arith.index_cast %719 : i32 to index
    %c0_168 = arith.constant 0 : index
    %724 = vector.load %arg10[%723, %c0_168] : memref<64x512xf32, #tpu.memory_space<vmem>>, vector<8x512xf32>
    %725 = arith.addf %724, %715 : vector<8x512xf32>
    %726 = vector.extract_strided_slice %722 {offsets = [0, 0], sizes = [8, 128], strides = [1, 1]} : vector<8x512xf32> to vector<8x128xf32>
    %727 = arith.negf %726 : vector<8x128xf32>
    %728 = math.exp %727 : vector<8x128xf32>
    %cst_169 = arith.constant 1.000000e+00 : f32
    %729 = vector.broadcast %cst_169 : f32 to vector<8x128xf32>
    %730 = arith.addf %729, %728 : vector<8x128xf32>
    %731 = arith.divf %729, %730 : vector<8x128xf32>
    %732 = vector.extract_strided_slice %722 {offsets = [0, 128], sizes = [8, 128], strides = [1, 1]} : vector<8x512xf32> to vector<8x128xf32>
    %733 = arith.negf %732 : vector<8x128xf32>
    %734 = math.exp %733 : vector<8x128xf32>
    %cst_170 = arith.constant 1.000000e+00 : f32
    %735 = vector.broadcast %cst_170 : f32 to vector<8x128xf32>
    %736 = arith.addf %735, %734 : vector<8x128xf32>
    %737 = arith.divf %735, %736 : vector<8x128xf32>
    %738 = vector.extract_strided_slice %722 {offsets = [0, 256], sizes = [8, 128], strides = [1, 1]} : vector<8x512xf32> to vector<8x128xf32>
    %739 = math.tanh %738 : vector<8x128xf32>
    %740 = vector.extract_strided_slice %722 {offsets = [0, 384], sizes = [8, 128], strides = [1, 1]} : vector<8x512xf32> to vector<8x128xf32>
    %741 = arith.negf %740 : vector<8x128xf32>
    %742 = math.exp %741 : vector<8x128xf32>
    %cst_171 = arith.constant 1.000000e+00 : f32
    %743 = vector.broadcast %cst_171 : f32 to vector<8x128xf32>
    %744 = arith.addf %743, %742 : vector<8x128xf32>
    %745 = arith.divf %743, %744 : vector<8x128xf32>
    %746 = arith.mulf %737, %706 : vector<8x128xf32>
    %747 = arith.mulf %731, %739 : vector<8x128xf32>
    %748 = arith.addf %746, %747 : vector<8x128xf32>
    %749 = math.tanh %748 : vector<8x128xf32>
    %750 = arith.mulf %745, %749 : vector<8x128xf32>
    %751 = vector.extract_strided_slice %725 {offsets = [0, 0], sizes = [8, 128], strides = [1, 1]} : vector<8x512xf32> to vector<8x128xf32>
    %752 = arith.negf %751 : vector<8x128xf32>
    %753 = math.exp %752 : vector<8x128xf32>
    %cst_172 = arith.constant 1.000000e+00 : f32
    %754 = vector.broadcast %cst_172 : f32 to vector<8x128xf32>
    %755 = arith.addf %754, %753 : vector<8x128xf32>
    %756 = arith.divf %754, %755 : vector<8x128xf32>
    %757 = vector.extract_strided_slice %725 {offsets = [0, 128], sizes = [8, 128], strides = [1, 1]} : vector<8x512xf32> to vector<8x128xf32>
    %758 = arith.negf %757 : vector<8x128xf32>
    %759 = math.exp %758 : vector<8x128xf32>
    %cst_173 = arith.constant 1.000000e+00 : f32
    %760 = vector.broadcast %cst_173 : f32 to vector<8x128xf32>
    %761 = arith.addf %760, %759 : vector<8x128xf32>
    %762 = arith.divf %760, %761 : vector<8x128xf32>
    %763 = vector.extract_strided_slice %725 {offsets = [0, 256], sizes = [8, 128], strides = [1, 1]} : vector<8x512xf32> to vector<8x128xf32>
    %764 = math.tanh %763 : vector<8x128xf32>
    %765 = vector.extract_strided_slice %725 {offsets = [0, 384], sizes = [8, 128], strides = [1, 1]} : vector<8x512xf32> to vector<8x128xf32>
    %766 = arith.negf %765 : vector<8x128xf32>
    %767 = math.exp %766 : vector<8x128xf32>
    %cst_174 = arith.constant 1.000000e+00 : f32
    %768 = vector.broadcast %cst_174 : f32 to vector<8x128xf32>
    %769 = arith.addf %768, %767 : vector<8x128xf32>
    %770 = arith.divf %768, %769 : vector<8x128xf32>
    %771 = arith.mulf %762, %710 : vector<8x128xf32>
    %772 = arith.mulf %756, %764 : vector<8x128xf32>
    %773 = arith.addf %771, %772 : vector<8x128xf32>
    %774 = math.tanh %773 : vector<8x128xf32>
    %775 = arith.mulf %770, %774 : vector<8x128xf32>
    %776 = arith.index_cast %c7_i32_161 : i32 to index
    %c0_175 = arith.constant 0 : index
    %c0_176 = arith.constant 0 : index
    %777 = vector.load %arg1[%776, %c0_175, %c0_176] : memref<8x8x1xf32, #tpu.memory_space<vmem>>, vector<1x8x1xf32>
    %778 = vector.shape_cast %777 : vector<1x8x1xf32> to vector<8x1xf32>
    %779 = arith.index_cast %711 : i32 to index
    %c0_177 = arith.constant 0 : index
    %c0_178 = arith.constant 0 : index
    %780 = vector.load %arg1[%779, %c0_177, %c0_178] : memref<8x8x1xf32, #tpu.memory_space<vmem>>, vector<1x8x1xf32>
    %781 = vector.shape_cast %780 : vector<1x8x1xf32> to vector<8x1xf32>
    %782 = vector.broadcast %778 : vector<8x1xf32> to vector<8x128xf32>
    %783 = arith.mulf %782, %750 : vector<8x128xf32>
    %784 = arith.index_cast %c7_i32_161 : i32 to index
    %c0_179 = arith.constant 0 : index
    %c0_180 = arith.constant 0 : index
    %785 = vector.load %arg8[%784, %c0_179, %c0_180] : memref<8x8x256xf32, #tpu.memory_space<vmem>>, vector<1x8x128xf32>
    %786 = vector.shape_cast %785 : vector<1x8x128xf32> to vector<8x128xf32>
    %787 = vector.shape_cast %783 : vector<8x128xf32> to vector<1x8x128xf32>
    tpu.vector_store %arg8[%784, %c0_179, %c0_180], %787 {strides = array<i32>} : memref<8x8x256xf32, #tpu.memory_space<vmem>>, vector<1x8x128xf32>,
    %788 = vector.broadcast %781 : vector<8x1xf32> to vector<8x128xf32>
    %789 = arith.mulf %788, %775 : vector<8x128xf32>
    %790 = arith.index_cast %711 : i32 to index
    %c0_181 = arith.constant 0 : index
    %c128_182 = arith.constant 128 : index
    %791 = vector.load %arg8[%790, %c0_181, %c128_182] : memref<8x8x256xf32, #tpu.memory_space<vmem>>, vector<1x8x128xf32>
    %792 = vector.shape_cast %791 : vector<1x8x128xf32> to vector<8x128xf32>
    %793 = vector.shape_cast %789 : vector<8x128xf32> to vector<1x8x128xf32>
    tpu.vector_store %arg8[%790, %c0_181, %c128_182], %793 {strides = array<i32>} : memref<8x8x256xf32, #tpu.memory_space<vmem>>, vector<1x8x128xf32>,
    %794 = arith.subf %750, %698 : vector<8x128xf32>
    %795 = vector.broadcast %778 : vector<8x1xf32> to vector<8x128xf32>
    %796 = arith.mulf %795, %794 : vector<8x128xf32>
    %797 = arith.addf %698, %796 : vector<8x128xf32>
    %798 = arith.subf %775, %702 : vector<8x128xf32>
    %799 = vector.broadcast %781 : vector<8x1xf32> to vector<8x128xf32>
    %800 = arith.mulf %799, %798 : vector<8x128xf32>
    %801 = arith.addf %702, %800 : vector<8x128xf32>
    %802 = arith.subf %748, %706 : vector<8x128xf32>
    %803 = vector.broadcast %778 : vector<8x1xf32> to vector<8x128xf32>
    %804 = arith.mulf %803, %802 : vector<8x128xf32>
    %805 = arith.addf %706, %804 : vector<8x128xf32>
    %806 = arith.subf %773, %710 : vector<8x128xf32>
    %807 = vector.broadcast %781 : vector<8x1xf32> to vector<8x128xf32>
    %808 = arith.mulf %807, %806 : vector<8x128xf32>
    %809 = arith.addf %710, %808 : vector<8x128xf32>
    %c8_i32_183 = arith.constant 8 : i32
    return
  }
}

</mosaic_0001>

<llo_original>
// kernel: tpu_custom_call.1
$region0: #{tpu_custom_call.1}
  #allocation0 [shape = 'u32[]', space=smem, size = 0x4, offset = 0x4, fixed_abs, tag = 'smem constant byte address 0x4 - core index']
  #allocation1 [shape = 'u32[144,128]{1,0:T(1,128)}', space=vmem, size = 0x12000, scoped, tag = 'internal scratch']
  #allocation2 [shape = 'f32[64,512]{1,0:T(8,128)}', space=vmem, size = 0x20000, scoped, tag = 'scratch operand']
  #allocation3 [shape = 'f32[64,512]{1,0:T(8,128)}', space=vmem, size = 0x20000, scoped, tag = 'scratch operand']
  %s0 = inlined_call_operand.hbm [shape: bf16[64,512], index: 0, kind: input, shape index: {}]
  %s1 = inlined_call_operand.hbm [shape: f32[8,8,1], index: 1, kind: input, shape index: {}]
  %s2 = inlined_call_operand.hbm [shape: f32[16,128], index: 2, kind: input, shape index: {}]
  %s3 = inlined_call_operand.hbm [shape: f32[16,128], index: 3, kind: input, shape index: {}]
  %s4 = inlined_call_operand.hbm [shape: bf16[512,1024], index: 4, kind: input, shape index: {}]
  %s5 = inlined_call_operand.hbm [shape: bf16[128,512], index: 5, kind: input, shape index: {}]
  %s6 = inlined_call_operand.hbm [shape: bf16[128,512], index: 6, kind: input, shape index: {}]
  %s7 = inlined_call_operand.hbm [shape: f32[1,1024], index: 7, kind: input, shape index: {}]
  %s8 = inlined_call_operand.hbm [shape: f32[8,8,256], index: 8, kind: output, shape index: {}]
  %s9 = sld [smem:[#allocation0]]
  $region74: #{tpu_custom_call.1} parent=0
    _
  %s11 = ssub.s32 1, %s9
  %s12 = scalar_select 0, %s11, %s9
  $region1: #{tpu_custom_call.1} parent=0
    #allocation4 [shape = 'u8[65536]{0}', space=vmem, size = 0x10000, scoped, tag = 'input window, operand 0, single buffered']
    #allocation5 [shape = 's32[1]{0}', space=sflag, size = 0x4, scoped, tag = 'scoped memory for tpu_custom_call.1']
    #allocation6 [shape = 's32[1]{0}', space=sflag, size = 0x4, scoped, tag = 'scoped memory for tpu_custom_call.1']
    #allocation7 [shape = 'u8[32768]{0}', space=vmem, size = 0x8000, scoped, tag = 'input window, operand 1, single buffered']
    #allocation8 [shape = 's32[1]{0}', space=sflag, size = 0x4, scoped, tag = 'scoped memory for tpu_custom_call.1']
    #allocation9 [shape = 'u8[8192]{0}', space=vmem, size = 0x2000, scoped, tag = 'input window, operand 2, single buffered']
    #allocation10 [shape = 'u8[8192]{0}', space=vmem, size = 0x2000, scoped, tag = 'input window, operand 3, single buffered']
    #allocation11 [shape = 's32[1]{0}', space=sflag, size = 0x4, scoped, tag = 'scoped memory for tpu_custom_call.1']
    #allocation12 [shape = 'u8[1048576]{0}', space=vmem, size = 0x100000, scoped, tag = 'input window, operand 4, single buffered']
    #allocation13 [shape = 'u8[131072]{0}', space=vmem, size = 0x20000, scoped, tag = 'input window, operand 5, single buffered']
    #allocation14 [shape = 's32[1]{0}', space=sflag, size = 0x4, scoped, tag = 'scoped memory for tpu_custom_call.1']
    #allocation15 [shape = 'u8[131072]{0}', space=vmem, size = 0x20000, scoped, tag = 'input window, operand 6, single buffered']
    #allocation16 [shape = 'u8[4096]{0}', space=vmem, size = 0x1000, scoped, tag = 'input window, operand 7, single buffered']
    #allocation17 [shape = 's32[1]{0}', space=sflag, size = 0x4, scoped, tag = 'scoped memory for tpu_custom_call.1']
    #allocation18 [shape = 'u8[65536]{0}', space=vmem, size = 0x10000, scoped, tag = 'output window, operand 0, single buffered']
    %13 = vsyncpa [#allocation5], 0
    %14 = vsyncpa [#allocation8], 0
    %15 = vsyncpa [#allocation11], 0
    %16 = vsyncpa [#allocation14], 0
    %17 = vsyncpa [#allocation17], 0
    %18 = vsyncpa [#allocation6], 0
    // Predicated region
    $region2: #{tpu_custom_call.1} parent=1 // pred_check
      _
    $region3: #{tpu_custom_call.1} parent=1 // pred_check_branch
      %20 = sbr.rel (0) target = $region5
    $region4: #{tpu_custom_call.1} parent=1 // pred_region
      %s22 = ssub.s32 2048, 2048
      %23 = vsyncadd [#allocation5], %s22
      %s24 = sshll.u32 [#allocation4], 4
      %s25 = int_to_ptr.vmem [resolvable:$true] %s24
      %30 = dma.hbm_to_vmem [thread:$0]  %s0, 2048, %s25, [#allocation5], 256, 256, 16
    $region5: #{tpu_custom_call.1} parent=1 // pred_fallthru
      _
    // Predicated region
    $region6: #{tpu_custom_call.1} parent=1 // pred_check
      _
    $region7: #{tpu_custom_call.1} parent=1 // pred_check_branch
      %32 = sbr.rel (0) target = $region9
    $region8: #{tpu_custom_call.1} parent=1 // pred_region
      %s34 = ssub.s32 1024, 1024
      %35 = vsyncadd [#allocation8], %s34
      %s36 = sshll.u32 [#allocation7], 4
      %s37 = int_to_ptr.vmem [resolvable:$true] %s36
      %42 = dma.hbm_to_vmem [thread:$0]  %s1, 1024, %s37, [#allocation8], 128, 128, 8
    $region9: #{tpu_custom_call.1} parent=1 // pred_fallthru
      _
    // Predicated region
    $region10: #{tpu_custom_call.1} parent=1 // pred_check
      _
    $region11: #{tpu_custom_call.1} parent=1 // pred_check_branch
      %44 = sbr.rel (0) target = $region13
    $region12: #{tpu_custom_call.1} parent=1 // pred_region
      %s46 = ssub.s32 256, 256
      %47 = vsyncadd [#allocation8], %s46
      %s48 = sshll.u32 [#allocation9], 4
      %s49 = int_to_ptr.vmem [resolvable:$true] %s48
      %54 = dma.hbm_to_vmem [thread:$0]  %s2, 256, %s49, [#allocation8], 128, 128, 8
    $region13: #{tpu_custom_call.1} parent=1 // pred_fallthru
      _
    // Predicated region
    $region14: #{tpu_custom_call.1} parent=1 // pred_check
      _
    $region15: #{tpu_custom_call.1} parent=1 // pred_check_branch
      %56 = sbr.rel (0) target = $region17
    $region16: #{tpu_custom_call.1} parent=1 // pred_region
      %s58 = ssub.s32 256, 256
      %59 = vsyncadd [#allocation11], %s58
      %s60 = sshll.u32 [#allocation10], 4
      %s61 = int_to_ptr.vmem [resolvable:$true] %s60
      %66 = dma.hbm_to_vmem [thread:$0]  %s3, 256, %s61, [#allocation11], 128, 128, 8
    $region17: #{tpu_custom_call.1} parent=1 // pred_fallthru
      _
    // Predicated region
    $region18: #{tpu_custom_call.1} parent=1 // pred_check
      _
    $region19: #{tpu_custom_call.1} parent=1 // pred_check_branch
      %68 = sbr.rel (0) target = $region21
    $region20: #{tpu_custom_call.1} parent=1 // pred_region
      %s70 = ssub.s32 32768, 32768
      %71 = vsyncadd [#allocation11], %s70
      %s72 = sshll.u32 [#allocation12], 4
      %s73 = int_to_ptr.vmem [resolvable:$true] %s72
      %78 = dma.hbm_to_vmem [thread:$0]  %s4, 32768, %s73, [#allocation11], 512, 512, 32
    $region21: #{tpu_custom_call.1} parent=1 // pred_fallthru
      _
    // Predicated region
    $region22: #{tpu_custom_call.1} parent=1 // pred_check
      _
    $region23: #{tpu_custom_call.1} parent=1 // pred_check_branch
      %80 = sbr.rel (0) target = $region25
    $region24: #{tpu_custom_call.1} parent=1 // pred_region
      %s82 = ssub.s32 4096, 4096
      %83 = vsyncadd [#allocation14], %s82
      %s84 = sshll.u32 [#allocation13], 4
      %s85 = int_to_ptr.vmem [resolvable:$true] %s84
      %90 = dma.hbm_to_vmem [thread:$0]  %s5, 4096, %s85, [#allocation14], 256, 256, 16
    $region25: #{tpu_custom_call.1} parent=1 // pred_fallthru
      _
    // Predicated region
    $region26: #{tpu_custom_call.1} parent=1 // pred_check
      _
    $region27: #{tpu_custom_call.1} parent=1 // pred_check_branch
      %92 = sbr.rel (0) target = $region29
    $region28: #{tpu_custom_call.1} parent=1 // pred_region
      %s94 = ssub.s32 4096, 4096
      %95 = vsyncadd [#allocation14], %s94
      %s96 = sshll.u32 [#allocation15], 4
      %s97 = int_to_ptr.vmem [resolvable:$true] %s96
      %102 = dma.hbm_to_vmem [thread:$0]  %s6, 4096, %s97, [#allocation14], 256, 256, 16
    $region29: #{tpu_custom_call.1} parent=1 // pred_fallthru
      _
    // Predicated region
    $region30: #{tpu_custom_call.1} parent=1 // pred_check
      _
    $region31: #{tpu_custom_call.1} parent=1 // pred_check_branch
      %104 = sbr.rel (0) target = $region33
    $region32: #{tpu_custom_call.1} parent=1 // pred_region
      %s106 = ssub.s32 128, 128
      %107 = vsyncadd [#allocation17], %s106
      %s109 = sshll.u32 [#allocation16], 4
      %s110 = int_to_ptr.vmem [resolvable:$true] %s109
      %112 = dma.hbm_to_vmem [thread:$0]  %s7, 128, %s110, [#allocation17]
    $region33: #{tpu_custom_call.1} parent=1 // pred_fallthru
      _
    // Predicated region
    $region34: #{tpu_custom_call.1} parent=1 // pred_check
      _
    $region35: #{tpu_custom_call.1} parent=1 // pred_check_branch
      %114 = sbr.rel (0) target = $region37
    $region36: #{tpu_custom_call.1} parent=1 // pred_region
      %115 = dma.done [#allocation5], 2048
    $region37: #{tpu_custom_call.1} parent=1 // pred_fallthru
      _
    // Predicated region
    $region38: #{tpu_custom_call.1} parent=1 // pred_check
      _
    $region39: #{tpu_custom_call.1} parent=1 // pred_check_branch
      %117 = sbr.rel (0) target = $region41
    $region40: #{tpu_custom_call.1} parent=1 // pred_region
      %118 = dma.done [#allocation8], 1024
    $region41: #{tpu_custom_call.1} parent=1 // pred_fallthru
      _
    // Predicated region
    $region42: #{tpu_custom_call.1} parent=1 // pred_check
      _
    $region43: #{tpu_custom_call.1} parent=1 // pred_check_branch
      %120 = sbr.rel (0) target = $region45
    $region44: #{tpu_custom_call.1} parent=1 // pred_region
      %121 = dma.done [#allocation8], 256
    $region45: #{tpu_custom_call.1} parent=1 // pred_fallthru
      _
    // Predicated region
    $region46: #{tpu_custom_call.1} parent=1 // pred_check
      _
    $region47: #{tpu_custom_call.1} parent=1 // pred_check_branch
      %123 = sbr.rel (0) target = $region49
    $region48: #{tpu_custom_call.1} parent=1 // pred_region
      %124 = dma.done [#allocation11], 256
    $region49: #{tpu_custom_call.1} parent=1 // pred_fallthru
      _
    // Predicated region
    $region50: #{tpu_custom_call.1} parent=1 // pred_check
      _
    $region51: #{tpu_custom_call.1} parent=1 // pred_check_branch
      %126 = sbr.rel (0) target = $region53
    $region52: #{tpu_custom_call.1} parent=1 // pred_region
      %127 = dma.done [#allocation11], 32768
    $region53: #{tpu_custom_call.1} parent=1 // pred_fallthru
      _
    // Predicated region
    $region54: #{tpu_custom_call.1} parent=1 // pred_check
      _
    $region55: #{tpu_custom_call.1} parent=1 // pred_check_branch
      %129 = sbr.rel (0) target = $region57
    $region56: #{tpu_custom_call.1} parent=1 // pred_region
      %130 = dma.done [#allocation14], 4096
    $region57: #{tpu_custom_call.1} parent=1 // pred_fallthru
      _
    // Predicated region
    $region58: #{tpu_custom_call.1} parent=1 // pred_check
      _
    $region59: #{tpu_custom_call.1} parent=1 // pred_check_branch
      %132 = sbr.rel (0) target = $region61
    $region60: #{tpu_custom_call.1} parent=1 // pred_region
      %133 = dma.done [#allocation14], 4096
    $region61: #{tpu_custom_call.1} parent=1 // pred_fallthru
      _
    // Predicated region
    $region62: #{tpu_custom_call.1} parent=1 // pred_check
      _
    $region63: #{tpu_custom_call.1} parent=1 // pred_check_branch
      %135 = sbr.rel (0) target = $region65
    $region64: #{tpu_custom_call.1} parent=1 // pred_region
      %136 = dma.done [#allocation17], 128
    $region65: #{tpu_custom_call.1} parent=1 // pred_fallthru
      _
    %v138 = vld [vmem:[#allocation4] sm:$0xff]
    %v139 = vld [vmem:[#allocation4 + $0x8] sm:$0xff]
    %v140 = vld [vmem:[#allocation4 + $0x10] sm:$0xff]
    %v141 = vld [vmem:[#allocation4 + $0x18] sm:$0xff]
    %v142 = vld [vmem:[#allocation4 + $0x20] sm:$0xff]
    %v143 = vld [vmem:[#allocation4 + $0x28] sm:$0xff]
    %v144 = vld [vmem:[#allocation4 + $0x30] sm:$0xff]
    %v145 = vld [vmem:[#allocation4 + $0x38] sm:$0xff]
    %v146 = vld [vmem:[#allocation4 + $0x40] sm:$0xff]
    %v147 = vld [vmem:[#allocation4 + $0x48] sm:$0xff]
    %v148 = vld [vmem:[#allocation4 + $0x50] sm:$0xff]
    %v149 = vld [vmem:[#allocation4 + $0x58] sm:$0xff]
    %v150 = vld [vmem:[#allocation4 + $0x60] sm:$0xff]
    %v151 = vld [vmem:[#allocation4 + $0x68] sm:$0xff]
    %v152 = vld [vmem:[#allocation4 + $0x70] sm:$0xff]
    %v153 = vld [vmem:[#allocation4 + $0x78] sm:$0xff]
    %v154 = vld [vmem:[#allocation12] sm:$0xff]
    %v155 = vld [vmem:[#allocation12 + $0x8] sm:$0xff]
    %v156 = vld [vmem:[#allocation12 + $0x10] sm:$0xff]
    %v157 = vld [vmem:[#allocation12 + $0x18] sm:$0xff]
    %v158 = vld [vmem:[#allocation12 + $0x20] sm:$0xff]
    %v159 = vld [vmem:[#allocation12 + $0x28] sm:$0xff]
    %v160 = vld [vmem:[#allocation12 + $0x30] sm:$0xff]
    %v161 = vld [vmem:[#allocation12 + $0x38] sm:$0xff]
    %v162 = vld [vmem:[#allocation12 + $0x40] sm:$0xff]
    %v163 = vld [vmem:[#allocation12 + $0x48] sm:$0xff]
    %v164 = vld [vmem:[#allocation12 + $0x50] sm:$0xff]
    %v165 = vld [vmem:[#allocation12 + $0x58] sm:$0xff]
    %v166 = vld [vmem:[#allocation12 + $0x60] sm:$0xff]
    %v167 = vld [vmem:[#allocation12 + $0x68] sm:$0xff]
    %v168 = vld [vmem:[#allocation12 + $0x70] sm:$0xff]
    %v169 = vld [vmem:[#allocation12 + $0x78] sm:$0xff]
    %v170 = vld [vmem:[#allocation12 + $0x80] sm:$0xff]
    %v171 = vld [vmem:[#allocation12 + $0x88] sm:$0xff]
    %v172 = vld [vmem:[#allocation12 + $0x90] sm:$0xff]
    %v173 = vld [vmem:[#allocation12 + $0x98] sm:$0xff]
    %v174 = vld [vmem:[#allocation12 + $0xa0] sm:$0xff]
    %v175 = vld [vmem:[#allocation12 + $0xa8] sm:$0xff]
    %v176 = vld [vmem:[#allocation12 + $0xb0] sm:$0xff]
    %v177 = vld [vmem:[#allocation12 + $0xb8] sm:$0xff]
    %v178 = vld [vmem:[#allocation12 + $0xc0] sm:$0xff]
    %v179 = vld [vmem:[#allocation12 + $0xc8] sm:$0xff]
    %v180 = vld [vmem:[#allocation12 + $0xd0] sm:$0xff]
    %v181 = vld [vmem:[#allocation12 + $0xd8] sm:$0xff]
    %v182 = vld [vmem:[#allocation12 + $0xe0] sm:$0xff]
    %v183 = vld [vmem:[#allocation12 + $0xe8] sm:$0xff]
    %v184 = vld [vmem:[#allocation12 + $0xf0] sm:$0xff]
    %v185 = vld [vmem:[#allocation12 + $0xf8] sm:$0xff]
    %v186 = vld [vmem:[#allocation12 + $0x100] sm:$0xff]
    %v187 = vld [vmem:[#allocation12 + $0x108] sm:$0xff]
    %v188 = vld [vmem:[#allocation12 + $0x110] sm:$0xff]
    %v189 = vld [vmem:[#allocation12 + $0x118] sm:$0xff]
    %v190 = vld [vmem:[#allocation12 + $0x120] sm:$0xff]
    %v191 = vld [vmem:[#allocation12 + $0x128] sm:$0xff]
    %v192 = vld [vmem:[#allocation12 + $0x130] sm:$0xff]
    %v193 = vld [vmem:[#allocation12 + $0x138] sm:$0xff]
    %v194 = vld [vmem:[#allocation12 + $0x140] sm:$0xff]
    %v195 = vld [vmem:[#allocation12 + $0x148] sm:$0xff]
    %v196 = vld [vmem:[#allocation12 + $0x150] sm:$0xff]
    %v197 = vld [vmem:[#allocation12 + $0x158] sm:$0xff]
    %v198 = vld [vmem:[#allocation12 + $0x160] sm:$0xff]
    %v199 = vld [vmem:[#allocation12 + $0x168] sm:$0xff]
    %v200 = vld [vmem:[#allocation12 + $0x170] sm:$0xff]
    %v201 = vld [vmem:[#allocation12 + $0x178] sm:$0xff]
    %v202 = vld [vmem:[#allocation12 + $0x180] sm:$0xff]
    %v203 = vld [vmem:[#allocation12 + $0x188] sm:$0xff]
    %v204 = vld [vmem:[#allocation12 + $0x190] sm:$0xff]
    %v205 = vld [vmem:[#allocation12 + $0x198] sm:$0xff]
    %v206 = vld [vmem:[#allocation12 + $0x1a0] sm:$0xff]
    %v207 = vld [vmem:[#allocation12 + $0x1a8] sm:$0xff]
    %v208 = vld [vmem:[#allocation12 + $0x1b0] sm:$0xff]
    %v209 = vld [vmem:[#allocation12 + $0x1b8] sm:$0xff]
    %v210 = vld [vmem:[#allocation12 + $0x1c0] sm:$0xff]
    %v211 = vld [vmem:[#allocation12 + $0x1c8] sm:$0xff]
    %v212 = vld [vmem:[#allocation12 + $0x1d0] sm:$0xff]
    %v213 = vld [vmem:[#allocation12 + $0x1d8] sm:$0xff]
    %v214 = vld [vmem:[#allocation12 + $0x1e0] sm:$0xff]
    %v215 = vld [vmem:[#allocation12 + $0x1e8] sm:$0xff]
    %v216 = vld [vmem:[#allocation12 + $0x1f0] sm:$0xff]
    %v217 = vld [vmem:[#allocation12 + $0x1f8] sm:$0xff]
    %v218 = vld [vmem:[#allocation12 + $0x200] sm:$0xff]
    %v219 = vld [vmem:[#allocation12 + $0x208] sm:$0xff]
    %v220 = vld [vmem:[#allocation12 + $0x210] sm:$0xff]
    %v221 = vld [vmem:[#allocation12 + $0x218] sm:$0xff]
    %v222 = vld [vmem:[#allocation12 + $0x220] sm:$0xff]
    %v223 = vld [vmem:[#allocation12 + $0x228] sm:$0xff]
    %v224 = vld [vmem:[#allocation12 + $0x230] sm:$0xff]
    %v225 = vld [vmem:[#allocation12 + $0x238] sm:$0xff]
    %v226 = vld [vmem:[#allocation12 + $0x240] sm:$0xff]
    %v227 = vld [vmem:[#allocation12 + $0x248] sm:$0xff]
    %v228 = vld [vmem:[#allocation12 + $0x250] sm:$0xff]
    %v229 = vld [vmem:[#allocation12 + $0x258] sm:$0xff]
    %v230 = vld [vmem:[#allocation12 + $0x260] sm:$0xff]
    %v231 = vld [vmem:[#allocation12 + $0x268] sm:$0xff]
    %v232 = vld [vmem:[#allocation12 + $0x270] sm:$0xff]
    %v233 = vld [vmem:[#allocation12 + $0x278] sm:$0xff]
    %v234 = vld [vmem:[#allocation12 + $0x280] sm:$0xff]
    %v235 = vld [vmem:[#allocation12 + $0x288] sm:$0xff]
    %v236 = vld [vmem:[#allocation12 + $0x290] sm:$0xff]
    %v237 = vld [vmem:[#allocation12 + $0x298] sm:$0xff]
    %v238 = vld [vmem:[#allocation12 + $0x2a0] sm:$0xff]
    %v239 = vld [vmem:[#allocation12 + $0x2a8] sm:$0xff]
    %v240 = vld [vmem:[#allocation12 + $0x2b0] sm:$0xff]
    %v241 = vld [vmem:[#allocation12 + $0x2b8] sm:$0xff]
    %v242 = vld [vmem:[#allocation12 + $0x2c0] sm:$0xff]
    %v243 = vld [vmem:[#allocation12 + $0x2c8] sm:$0xff]
    %v244 = vld [vmem:[#allocation12 + $0x2d0] sm:$0xff]
    %v245 = vld [vmem:[#allocation12 + $0x2d8] sm:$0xff]
    %v246 = vld [vmem:[#allocation12 + $0x2e0] sm:$0xff]
    %v247 = vld [vmem:[#allocation12 + $0x2e8] sm:$0xff]
    %v248 = vld [vmem:[#allocation12 + $0x2f0] sm:$0xff]
    %v249 = vld [vmem:[#allocation12 + $0x2f8] sm:$0xff]
    %v250 = vld [vmem:[#allocation12 + $0x300] sm:$0xff]
    %v251 = vld [vmem:[#allocation12 + $0x308] sm:$0xff]
    %v252 = vld [vmem:[#allocation12 + $0x310] sm:$0xff]
    %v253 = vld [vmem:[#allocation12 + $0x318] sm:$0xff]
    %v254 = vld [vmem:[#allocation12 + $0x320] sm:$0xff]
    %v255 = vld [vmem:[#allocation12 + $0x328] sm:$0xff]
    %v256 = vld [vmem:[#allocation12 + $0x330] sm:$0xff]
    %v257 = vld [vmem:[#allocation12 + $0x338] sm:$0xff]
    %v258 = vld [vmem:[#allocation12 + $0x340] sm:$0xff]
    %v259 = vld [vmem:[#allocation12 + $0x348] sm:$0xff]
    %v260 = vld [vmem:[#allocation12 + $0x350] sm:$0xff]
    %v261 = vld [vmem:[#allocation12 + $0x358] sm:$0xff]
    %v262 = vld [vmem:[#allocation12 + $0x360] sm:$0xff]
    %v263 = vld [vmem:[#allocation12 + $0x368] sm:$0xff]
    %v264 = vld [vmem:[#allocation12 + $0x370] sm:$0xff]
    %v265 = vld [vmem:[#allocation12 + $0x378] sm:$0xff]
    %v266 = vld [vmem:[#allocation12 + $0x380] sm:$0xff]
    %v267 = vld [vmem:[#allocation12 + $0x388] sm:$0xff]
    %v268 = vld [vmem:[#allocation12 + $0x390] sm:$0xff]
    %v269 = vld [vmem:[#allocation12 + $0x398] sm:$0xff]
    %v270 = vld [vmem:[#allocation12 + $0x3a0] sm:$0xff]
    %v271 = vld [vmem:[#allocation12 + $0x3a8] sm:$0xff]
    %v272 = vld [vmem:[#allocation12 + $0x3b0] sm:$0xff]
    %v273 = vld [vmem:[#allocation12 + $0x3b8] sm:$0xff]
    %v274 = vld [vmem:[#allocation12 + $0x3c0] sm:$0xff]
    %v275 = vld [vmem:[#allocation12 + $0x3c8] sm:$0xff]
    %v276 = vld [vmem:[#allocation12 + $0x3d0] sm:$0xff]
    %v277 = vld [vmem:[#allocation12 + $0x3d8] sm:$0xff]
    %v278 = vld [vmem:[#allocation12 + $0x3e0] sm:$0xff]
    %v279 = vld [vmem:[#allocation12 + $0x3e8] sm:$0xff]
    %v280 = vld [vmem:[#allocation12 + $0x3f0] sm:$0xff]
    %v281 = vld [vmem:[#allocation12 + $0x3f8] sm:$0xff]
    %v282 = vld [vmem:[#allocation12 + $0x400] sm:$0xff]
    %v283 = vld [vmem:[#allocation12 + $0x408] sm:$0xff]
    %v284 = vld [vmem:[#allocation12 + $0x410] sm:$0xff]
    %v285 = vld [vmem:[#allocation12 + $0x418] sm:$0xff]
    %v286 = vld [vmem:[#allocation12 + $0x420] sm:$0xff]
    %v287 = vld [vmem:[#allocation12 + $0x428] sm:$0xff]
    %v288 = vld [vmem:[#allocation12 + $0x430] sm:$0xff]
    %v289 = vld [vmem:[#allocation12 + $0x438] sm:$0xff]
    %v290 = vld [vmem:[#allocation12 + $0x440] sm:$0xff]
    %v291 = vld [vmem:[#allocation12 + $0x448] sm:$0xff]
    %v292 = vld [vmem:[#allocation12 + $0x450] sm:$0xff]
    %v293 = vld [vmem:[#allocation12 + $0x458] sm:$0xff]
    %v294 = vld [vmem:[#allocation12 + $0x460] sm:$0xff]
    %v295 = vld [vmem:[#allocation12 + $0x468] sm:$0xff]
    %v296 = vld [vmem:[#allocation12 + $0x470] sm:$0xff]
    %v297 = vld [vmem:[#allocation12 + $0x478] sm:$0xff]
    %v298 = vld [vmem:[#allocation12 + $0x480] sm:$0xff]
    %v299 = vld [vmem:[#allocation12 + $0x488] sm:$0xff]
    %v300 = vld [vmem:[#allocation12 + $0x490] sm:$0xff]
    %v301 = vld [vmem:[#allocation12 + $0x498] sm:$0xff]
    %v302 = vld [vmem:[#allocation12 + $0x4a0] sm:$0xff]
    %v303 = vld [vmem:[#allocation12 + $0x4a8] sm:$0xff]
    %v304 = vld [vmem:[#allocation12 + $0x4b0] sm:$0xff]
    %v305 = vld [vmem:[#allocation12 + $0x4b8] sm:$0xff]
    %v306 = vld [vmem:[#allocation12 + $0x4c0] sm:$0xff]
    %v307 = vld [vmem:[#allocation12 + $0x4c8] sm:$0xff]
    %v308 = vld [vmem:[#allocation12 + $0x4d0] sm:$0xff]
    %v309 = vld [vmem:[#allocation12 + $0x4d8] sm:$0xff]
    %v310 = vld [vmem:[#allocation12 + $0x4e0] sm:$0xff]
    %v311 = vld [vmem:[#allocation12 + $0x4e8] sm:$0xff]
    %v312 = vld [vmem:[#allocation12 + $0x4f0] sm:$0xff]
    %v313 = vld [vmem:[#allocation12 + $0x4f8] sm:$0xff]
    %v314 = vld [vmem:[#allocation12 + $0x500] sm:$0xff]
    %v315 = vld [vmem:[#allocation12 + $0x508] sm:$0xff]
    %v316 = vld [vmem:[#allocation12 + $0x510] sm:$0xff]
    %v317 = vld [vmem:[#allocation12 + $0x518] sm:$0xff]
    %v318 = vld [vmem:[#allocation12 + $0x520] sm:$0xff]
    %v319 = vld [vmem:[#allocation12 + $0x528] sm:$0xff]
    %v320 = vld [vmem:[#allocation12 + $0x530] sm:$0xff]
    %v321 = vld [vmem:[#allocation12 + $0x538] sm:$0xff]
    %v322 = vld [vmem:[#allocation12 + $0x540] sm:$0xff]
    %v323 = vld [vmem:[#allocation12 + $0x548] sm:$0xff]
    %v324 = vld [vmem:[#allocation12 + $0x550] sm:$0xff]
    %v325 = vld [vmem:[#allocation12 + $0x558] sm:$0xff]
    %v326 = vld [vmem:[#allocation12 + $0x560] sm:$0xff]
    %v327 = vld [vmem:[#allocation12 + $0x568] sm:$0xff]
    %v328 = vld [vmem:[#allocation12 + $0x570] sm:$0xff]
    %v329 = vld [vmem:[#allocation12 + $0x578] sm:$0xff]
    %v330 = vld [vmem:[#allocation12 + $0x580] sm:$0xff]
    %v331 = vld [vmem:[#allocation12 + $0x588] sm:$0xff]
    %v332 = vld [vmem:[#allocation12 + $0x590] sm:$0xff]
    %v333 = vld [vmem:[#allocation12 + $0x598] sm:$0xff]
    %v334 = vld [vmem:[#allocation12 + $0x5a0] sm:$0xff]
    %v335 = vld [vmem:[#allocation12 + $0x5a8] sm:$0xff]
    %v336 = vld [vmem:[#allocation12 + $0x5b0] sm:$0xff]
    %v337 = vld [vmem:[#allocation12 + $0x5b8] sm:$0xff]
    %v338 = vld [vmem:[#allocation12 + $0x5c0] sm:$0xff]
    %v339 = vld [vmem:[#allocation12 + $0x5c8] sm:$0xff]
    %v340 = vld [vmem:[#allocation12 + $0x5d0] sm:$0xff]
    %v341 = vld [vmem:[#allocation12 + $0x5d8] sm:$0xff]
    %v342 = vld [vmem:[#allocation12 + $0x5e0] sm:$0xff]
    %v343 = vld [vmem:[#allocation12 + $0x5e8] sm:$0xff]
    %v344 = vld [vmem:[#allocation12 + $0x5f0] sm:$0xff]
    %v345 = vld [vmem:[#allocation12 + $0x5f8] sm:$0xff]
    %v346 = vld [vmem:[#allocation12 + $0x600] sm:$0xff]
    %v347 = vld [vmem:[#allocation12 + $0x608] sm:$0xff]
    %v348 = vld [vmem:[#allocation12 + $0x610] sm:$0xff]
    %v349 = vld [vmem:[#allocation12 + $0x618] sm:$0xff]
    %v350 = vld [vmem:[#allocation12 + $0x620] sm:$0xff]
    %v351 = vld [vmem:[#allocation12 + $0x628] sm:$0xff]
    %v352 = vld [vmem:[#allocation12 + $0x630] sm:$0xff]
    %v353 = vld [vmem:[#allocation12 + $0x638] sm:$0xff]
    %v354 = vld [vmem:[#allocation12 + $0x640] sm:$0xff]
    %v355 = vld [vmem:[#allocation12 + $0x648] sm:$0xff]
    %v356 = vld [vmem:[#allocation12 + $0x650] sm:$0xff]
    %v357 = vld [vmem:[#allocation12 + $0x658] sm:$0xff]
    %v358 = vld [vmem:[#allocation12 + $0x660] sm:$0xff]
    %v359 = vld [vmem:[#allocation12 + $0x668] sm:$0xff]
    %v360 = vld [vmem:[#allocation12 + $0x670] sm:$0xff]
    %v361 = vld [vmem:[#allocation12 + $0x678] sm:$0xff]
    %v362 = vld [vmem:[#allocation12 + $0x680] sm:$0xff]
    %v363 = vld [vmem:[#allocation12 + $0x688] sm:$0xff]
    %v364 = vld [vmem:[#allocation12 + $0x690] sm:$0xff]
    %v365 = vld [vmem:[#allocation12 + $0x698] sm:$0xff]
    %v366 = vld [vmem:[#allocation12 + $0x6a0] sm:$0xff]
    %v367 = vld [vmem:[#allocation12 + $0x6a8] sm:$0xff]
    %v368 = vld [vmem:[#allocation12 + $0x6b0] sm:$0xff]
    %v369 = vld [vmem:[#allocation12 + $0x6b8] sm:$0xff]
    %v370 = vld [vmem:[#allocation12 + $0x6c0] sm:$0xff]
    %v371 = vld [vmem:[#allocation12 + $0x6c8] sm:$0xff]
    %v372 = vld [vmem:[#allocation12 + $0x6d0] sm:$0xff]
    %v373 = vld [vmem:[#allocation12 + $0x6d8] sm:$0xff]
    %v374 = vld [vmem:[#allocation12 + $0x6e0] sm:$0xff]
    %v375 = vld [vmem:[#allocation12 + $0x6e8] sm:$0xff]
    %v376 = vld [vmem:[#allocation12 + $0x6f0] sm:$0xff]
    %v377 = vld [vmem:[#allocation12 + $0x6f8] sm:$0xff]
    %v378 = vld [vmem:[#allocation12 + $0x700] sm:$0xff]
    %v379 = vld [vmem:[#allocation12 + $0x708] sm:$0xff]
    %v380 = vld [vmem:[#allocation12 + $0x710] sm:$0xff]
    %v381 = vld [vmem:[#allocation12 + $0x718] sm:$0xff]
    %v382 = vld [vmem:[#allocation12 + $0x720] sm:$0xff]
    %v383 = vld [vmem:[#allocation12 + $0x728] sm:$0xff]
    %v384 = vld [vmem:[#allocation12 + $0x730] sm:$0xff]
    %v385 = vld [vmem:[#allocation12 + $0x738] sm:$0xff]
    %v386 = vld [vmem:[#allocation12 + $0x740] sm:$0xff]
    %v387 = vld [vmem:[#allocation12 + $0x748] sm:$0xff]
    %v388 = vld [vmem:[#allocation12 + $0x750] sm:$0xff]
    %v389 = vld [vmem:[#allocation12 + $0x758] sm:$0xff]
    %v390 = vld [vmem:[#allocation12 + $0x760] sm:$0xff]
    %v391 = vld [vmem:[#allocation12 + $0x768] sm:$0xff]
    %v392 = vld [vmem:[#allocation12 + $0x770] sm:$0xff]
    %v393 = vld [vmem:[#allocation12 + $0x778] sm:$0xff]
    %v394 = vld [vmem:[#allocation12 + $0x780] sm:$0xff]
    %v395 = vld [vmem:[#allocation12 + $0x788] sm:$0xff]
    %v396 = vld [vmem:[#allocation12 + $0x790] sm:$0xff]
    %v397 = vld [vmem:[#allocation12 + $0x798] sm:$0xff]
    %v398 = vld [vmem:[#allocation12 + $0x7a0] sm:$0xff]
    %v399 = vld [vmem:[#allocation12 + $0x7a8] sm:$0xff]
    %v400 = vld [vmem:[#allocation12 + $0x7b0] sm:$0xff]
    %v401 = vld [vmem:[#allocation12 + $0x7b8] sm:$0xff]
    %v402 = vld [vmem:[#allocation12 + $0x7c0] sm:$0xff]
    %v403 = vld [vmem:[#allocation12 + $0x7c8] sm:$0xff]
    %v404 = vld [vmem:[#allocation12 + $0x7d0] sm:$0xff]
    %v405 = vld [vmem:[#allocation12 + $0x7d8] sm:$0xff]
    %v406 = vld [vmem:[#allocation12 + $0x7e0] sm:$0xff]
    %v407 = vld [vmem:[#allocation12 + $0x7e8] sm:$0xff]
    %v408 = vld [vmem:[#allocation12 + $0x7f0] sm:$0xff]
    %v409 = vld [vmem:[#allocation12 + $0x7f8] sm:$0xff]
    %v410 = vld [vmem:[#allocation16] sm:$0xff]
    %v412 = vlaneseq
    %v413 = vshrl.u32 %v412, 7
    %v414 = vsub.s32 0, %v413
    %v415 = vrot.slane %v410, %v414
    %v416 = vlaneseq
    %v417 = vshrl.u32 %v416, 7
    %v418 = vsub.s32 1, %v417
    %v419 = vrot.slane %v410, %v418
    %v420 = vlaneseq
    %v421 = vshrl.u32 %v420, 7
    %v422 = vsub.s32 2, %v421
    %v423 = vrot.slane %v410, %v422
    %v424 = vlaneseq
    %v425 = vshrl.u32 %v424, 7
    %v426 = vsub.s32 3, %v425
    %v427 = vrot.slane %v410, %v426
    %v428 = vlaneseq
    %v429 = vshrl.u32 %v428, 7
    %v430 = vsub.s32 4, %v429
    %v431 = vrot.slane %v410, %v430
    %v432 = vlaneseq
    %v433 = vshrl.u32 %v432, 7
    %v434 = vsub.s32 5, %v433
    %v435 = vrot.slane %v410, %v434
    %v436 = vlaneseq
    %v437 = vshrl.u32 %v436, 7
    %v438 = vsub.s32 6, %v437
    %v439 = vrot.slane %v410, %v438
    %v440 = vlaneseq
    %v441 = vshrl.u32 %v440, 7
    %v442 = vsub.s32 7, %v441
    %v443 = vrot.slane %v410, %v442
    %v468 = vunpack.c.l.b16 %v138
    %v469 = vunpack.c.h.b16 %v138
    %v470 = vunpack.c.l.b16 %v139
    %v471 = vunpack.c.h.b16 %v139
    %v472 = vunpack.c.l.b16 %v140
    %v473 = vunpack.c.h.b16 %v140
    %v474 = vunpack.c.l.b16 %v141
    %v475 = vunpack.c.h.b16 %v141
    %v476 = vunpack.c.l.b16 %v142
    %v477 = vunpack.c.h.b16 %v142
    %v478 = vunpack.c.l.b16 %v143
    %v479 = vunpack.c.h.b16 %v143
    %v480 = vunpack.c.l.b16 %v144
    %v481 = vunpack.c.h.b16 %v144
    %v482 = vunpack.c.l.b16 %v145
    %v483 = vunpack.c.h.b16 %v145
    %v484 = vunpack.c.l.b16 %v146
    %v485 = vunpack.c.h.b16 %v146
    %v486 = vunpack.c.l.b16 %v147
    %v487 = vunpack.c.h.b16 %v147
    %v488 = vunpack.c.l.b16 %v148
    %v489 = vunpack.c.h.b16 %v148
    %v490 = vunpack.c.l.b16 %v149
    %v491 = vunpack.c.h.b16 %v149
    %v492 = vunpack.c.l.b16 %v150
    %v493 = vunpack.c.h.b16 %v150
    %v494 = vunpack.c.l.b16 %v151
    %v495 = vunpack.c.h.b16 %v151
    %v496 = vunpack.c.l.b16 %v152
    %v497 = vunpack.c.h.b16 %v152
    %v498 = vunpack.c.l.b16 %v153
    %v499 = vunpack.c.h.b16 %v153
    %v500 = vpack.c.b16 %v472, %v468
    %v501 = vpack.c.b16 %v473, %v469
    %v502 = vpack.c.b16 %v474, %v470
    %v503 = vpack.c.b16 %v475, %v471
    %v504 = vpack.c.b16 %v480, %v476
    %v505 = vpack.c.b16 %v481, %v477
    %v506 = vpack.c.b16 %v482, %v478
    %v507 = vpack.c.b16 %v483, %v479
    %v508 = vpack.c.b16 %v488, %v484
    %v509 = vpack.c.b16 %v489, %v485
    %v510 = vpack.c.b16 %v490, %v486
    %v511 = vpack.c.b16 %v491, %v487
    %v512 = vpack.c.b16 %v496, %v492
    %v513 = vpack.c.b16 %v497, %v493
    %v514 = vpack.c.b16 %v498, %v494
    %v515 = vpack.c.b16 %v499, %v495
    %v788 = vunpack.c.l.b16 %v154
    %v789 = vunpack.c.h.b16 %v154
    %v790 = vunpack.c.l.b16 %v155
    %v791 = vunpack.c.h.b16 %v155
    %v792 = vunpack.c.l.b16 %v156
    %v793 = vunpack.c.h.b16 %v156
    %v794 = vunpack.c.l.b16 %v157
    %v795 = vunpack.c.h.b16 %v157
    %v796 = vunpack.c.l.b16 %v158
    %v797 = vunpack.c.h.b16 %v158
    %v798 = vunpack.c.l.b16 %v159
    %v799 = vunpack.c.h.b16 %v159
    %v800 = vunpack.c.l.b16 %v160
    %v801 = vunpack.c.h.b16 %v160
    %v802 = vunpack.c.l.b16 %v161
    %v803 = vunpack.c.h.b16 %v161
    %v804 = vunpack.c.l.b16 %v162
    %v805 = vunpack.c.h.b16 %v162
    %v806 = vunpack.c.l.b16 %v163
    %v807 = vunpack.c.h.b16 %v163
    %v808 = vunpack.c.l.b16 %v164
    %v809 = vunpack.c.h.b16 %v164
    %v810 = vunpack.c.l.b16 %v165
    %v811 = vunpack.c.h.b16 %v165
    %v812 = vunpack.c.l.b16 %v166
    %v813 = vunpack.c.h.b16 %v166
    %v814 = vunpack.c.l.b16 %v167
    %v815 = vunpack.c.h.b16 %v167
    %v816 = vunpack.c.l.b16 %v168
    %v817 = vunpack.c.h.b16 %v168
    %v818 = vunpack.c.l.b16 %v169
    %v819 = vunpack.c.h.b16 %v169
    %v820 = vunpack.c.l.b16 %v170
    %v821 = vunpack.c.h.b16 %v170
    %v822 = vunpack.c.l.b16 %v171
    %v823 = vunpack.c.h.b16 %v171
    %v824 = vunpack.c.l.b16 %v172
    %v825 = vunpack.c.h.b16 %v172
    %v826 = vunpack.c.l.b16 %v173
    %v827 = vunpack.c.h.b16 %v173
    %v828 = vunpack.c.l.b16 %v174
    %v829 = vunpack.c.h.b16 %v174
    %v830 = vunpack.c.l.b16 %v175
    %v831 = vunpack.c.h.b16 %v175
    %v832 = vunpack.c.l.b16 %v176
    %v833 = vunpack.c.h.b16 %v176
    %v834 = vunpack.c.l.b16 %v177
    %v835 = vunpack.c.h.b16 %v177
    %v836 = vunpack.c.l.b16 %v178
    %v837 = vunpack.c.h.b16 %v178
    %v838 = vunpack.c.l.b16 %v179
    %v839 = vunpack.c.h.b16 %v179
    %v840 = vunpack.c.l.b16 %v180
    %v841 = vunpack.c.h.b16 %v180
    %v842 = vunpack.c.l.b16 %v181
    %v843 = vunpack.c.h.b16 %v181
    %v844 = vunpack.c.l.b16 %v182
    %v845 = vunpack.c.h.b16 %v182
    %v846 = vunpack.c.l.b16 %v183
    %v847 = vunpack.c.h.b16 %v183
    %v848 = vunpack.c.l.b16 %v184
    %v849 = vunpack.c.h.b16 %v184
    %v850 = vunpack.c.l.b16 %v185
    %v851 = vunpack.c.h.b16 %v185
    %v852 = vunpack.c.l.b16 %v186
    %v853 = vunpack.c.h.b16 %v186
    %v854 = vunpack.c.l.b16 %v187
    %v855 = vunpack.c.h.b16 %v187
    %v856 = vunpack.c.l.b16 %v188
    %v857 = vunpack.c.h.b16 %v188
    %v858 = vunpack.c.l.b16 %v189
    %v859 = vunpack.c.h.b16 %v189
    %v860 = vunpack.c.l.b16 %v190
    %v861 = vunpack.c.h.b16 %v190
    %v862 = vunpack.c.l.b16 %v191
    %v863 = vunpack.c.h.b16 %v191
    %v864 = vunpack.c.l.b16 %v192
    %v865 = vunpack.c.h.b16 %v192
    %v866 = vunpack.c.l.b16 %v193
    %v867 = vunpack.c.h.b16 %v193
    %v868 = vunpack.c.l.b16 %v194
    %v869 = vunpack.c.h.b16 %v194
    %v870 = vunpack.c.l.b16 %v195
    %v871 = vunpack.c.h.b16 %v195
    %v872 = vunpack.c.l.b16 %v196
    %v873 = vunpack.c.h.b16 %v196
    %v874 = vunpack.c.l.b16 %v197
    %v875 = vunpack.c.h.b16 %v197
    %v876 = vunpack.c.l.b16 %v198
    %v877 = vunpack.c.h.b16 %v198
    %v878 = vunpack.c.l.b16 %v199
    %v879 = vunpack.c.h.b16 %v199
    %v880 = vunpack.c.l.b16 %v200
    %v881 = vunpack.c.h.b16 %v200
    %v882 = vunpack.c.l.b16 %v201
    %v883 = vunpack.c.h.b16 %v201
    %v884 = vunpack.c.l.b16 %v202
    %v885 = vunpack.c.h.b16 %v202
    %v886 = vunpack.c.l.b16 %v203
    %v887 = vunpack.c.h.b16 %v203
    %v888 = vunpack.c.l.b16 %v204
    %v889 = vunpack.c.h.b16 %v204
    %v890 = vunpack.c.l.b16 %v205
    %v891 = vunpack.c.h.b16 %v205
    %v892 = vunpack.c.l.b16 %v206
    %v893 = vunpack.c.h.b16 %v206
    %v894 = vunpack.c.l.b16 %v207
    %v895 = vunpack.c.h.b16 %v207
    %v896 = vunpack.c.l.b16 %v208
    %v897 = vunpack.c.h.b16 %v208
    %v898 = vunpack.c.l.b16 %v209
    %v899 = vunpack.c.h.b16 %v209
    %v900 = vunpack.c.l.b16 %v210
    %v901 = vunpack.c.h.b16 %v210
    %v902 = vunpack.c.l.b16 %v211
    %v903 = vunpack.c.h.b16 %v211
    %v904 = vunpack.c.l.b16 %v212
    %v905 = vunpack.c.h.b16 %v212
    %v906 = vunpack.c.l.b16 %v213
    %v907 = vunpack.c.h.b16 %v213
    %v908 = vunpack.c.l.b16 %v214
    %v909 = vunpack.c.h.b16 %v214
    %v910 = vunpack.c.l.b16 %v215
    %v911 = vunpack.c.h.b16 %v215
    %v912 = vunpack.c.l.b16 %v216
    %v913 = vunpack.c.h.b16 %v216
    %v914 = vunpack.c.l.b16 %v217
    %v915 = vunpack.c.h.b16 %v217
    %v916 = vunpack.c.l.b16 %v218
    %v917 = vunpack.c.h.b16 %v218
    %v918 = vunpack.c.l.b16 %v219
    %v919 = vunpack.c.h.b16 %v219
    %v920 = vunpack.c.l.b16 %v220
    %v921 = vunpack.c.h.b16 %v220
    %v922 = vunpack.c.l.b16 %v221
    %v923 = vunpack.c.h.b16 %v221
    %v924 = vunpack.c.l.b16 %v222
    %v925 = vunpack.c.h.b16 %v222
    %v926 = vunpack.c.l.b16 %v223
    %v927 = vunpack.c.h.b16 %v223
    %v928 = vunpack.c.l.b16 %v224
    %v929 = vunpack.c.h.b16 %v224
    %v930 = vunpack.c.l.b16 %v225
    %v931 = vunpack.c.h.b16 %v225
    %v932 = vunpack.c.l.b16 %v226
    %v933 = vunpack.c.h.b16 %v226
    %v934 = vunpack.c.l.b16 %v227
    %v935 = vunpack.c.h.b16 %v227
    %v936 = vunpack.c.l.b16 %v228
    %v937 = vunpack.c.h.b16 %v228
    %v938 = vunpack.c.l.b16 %v229
    %v939 = vunpack.c.h.b16 %v229
    %v940 = vunpack.c.l.b16 %v230
    %v941 = vunpack.c.h.b16 %v230
    %v942 = vunpack.c.l.b16 %v231
    %v943 = vunpack.c.h.b16 %v231
    %v944 = vunpack.c.l.b16 %v232
    %v945 = vunpack.c.h.b16 %v232
    %v946 = vunpack.c.l.b16 %v233
    %v947 = vunpack.c.h.b16 %v233
    %v948 = vunpack.c.l.b16 %v234
    %v949 = vunpack.c.h.b16 %v234
    %v950 = vunpack.c.l.b16 %v235
    %v951 = vunpack.c.h.b16 %v235
    %v952 = vunpack.c.l.b16 %v236
    %v953 = vunpack.c.h.b16 %v236
    %v954 = vunpack.c.l.b16 %v237
    %v955 = vunpack.c.h.b16 %v237
    %v956 = vunpack.c.l.b16 %v238
    %v957 = vunpack.c.h.b16 %v238
    %v958 = vunpack.c.l.b16 %v239
    %v959 = vunpack.c.h.b16 %v239
    %v960 = vunpack.c.l.b16 %v240
    %v961 = vunpack.c.h.b16 %v240
    %v962 = vunpack.c.l.b16 %v241
    %v963 = vunpack.c.h.b16 %v241
    %v964 = vunpack.c.l.b16 %v242
    %v965 = vunpack.c.h.b16 %v242
    %v966 = vunpack.c.l.b16 %v243
    %v967 = vunpack.c.h.b16 %v243
    %v968 = vunpack.c.l.b16 %v244
    %v969 = vunpack.c.h.b16 %v244
    %v970 = vunpack.c.l.b16 %v245
    %v971 = vunpack.c.h.b16 %v245
    %v972 = vunpack.c.l.b16 %v246
    %v973 = vunpack.c.h.b16 %v246
    %v974 = vunpack.c.l.b16 %v247
    %v975 = vunpack.c.h.b16 %v247
    %v976 = vunpack.c.l.b16 %v248
    %v977 = vunpack.c.h.b16 %v248
    %v978 = vunpack.c.l.b16 %v249
    %v979 = vunpack.c.h.b16 %v249
    %v980 = vunpack.c.l.b16 %v250
    %v981 = vunpack.c.h.b16 %v250
    %v982 = vunpack.c.l.b16 %v251
    %v983 = vunpack.c.h.b16 %v251
    %v984 = vunpack.c.l.b16 %v252
    %v985 = vunpack.c.h.b16 %v252
    %v986 = vunpack.c.l.b16 %v253
    %v987 = vunpack.c.h.b16 %v253
    %v988 = vunpack.c.l.b16 %v254
    %v989 = vunpack.c.h.b16 %v254
    %v990 = vunpack.c.l.b16 %v255
    %v991 = vunpack.c.h.b16 %v255
    %v992 = vunpack.c.l.b16 %v256
    %v993 = vunpack.c.h.b16 %v256
    %v994 = vunpack.c.l.b16 %v257
    %v995 = vunpack.c.h.b16 %v257
    %v996 = vunpack.c.l.b16 %v258
    %v997 = vunpack.c.h.b16 %v258
    %v998 = vunpack.c.l.b16 %v259
    %v999 = vunpack.c.h.b16 %v259
    %v1000 = vunpack.c.l.b16 %v260
    %v1001 = vunpack.c.h.b16 %v260
    %v1002 = vunpack.c.l.b16 %v261
    %v1003 = vunpack.c.h.b16 %v261
    %v1004 = vunpack.c.l.b16 %v262
    %v1005 = vunpack.c.h.b16 %v262
    %v1006 = vunpack.c.l.b16 %v263
    %v1007 = vunpack.c.h.b16 %v263
    %v1008 = vunpack.c.l.b16 %v264
    %v1009 = vunpack.c.h.b16 %v264
    %v1010 = vunpack.c.l.b16 %v265
    %v1011 = vunpack.c.h.b16 %v265
    %v1012 = vunpack.c.l.b16 %v266
    %v1013 = vunpack.c.h.b16 %v266
    %v1014 = vunpack.c.l.b16 %v267
    %v1015 = vunpack.c.h.b16 %v267
    %v1016 = vunpack.c.l.b16 %v268
    %v1017 = vunpack.c.h.b16 %v268
    %v1018 = vunpack.c.l.b16 %v269
    %v1019 = vunpack.c.h.b16 %v269
    %v1020 = vunpack.c.l.b16 %v270
    %v1021 = vunpack.c.h.b16 %v270
    %v1022 = vunpack.c.l.b16 %v271
    %v1023 = vunpack.c.h.b16 %v271
    %v1024 = vunpack.c.l.b16 %v272
    %v1025 = vunpack.c.h.b16 %v272
    %v1026 = vunpack.c.l.b16 %v273
    %v1027 = vunpack.c.h.b16 %v273
    %v1028 = vunpack.c.l.b16 %v274
    %v1029 = vunpack.c.h.b16 %v274
    %v1030 = vunpack.c.l.b16 %v275
    %v1031 = vunpack.c.h.b16 %v275
    %v1032 = vunpack.c.l.b16 %v276
    %v1033 = vunpack.c.h.b16 %v276
    %v1034 = vunpack.c.l.b16 %v277
    %v1035 = vunpack.c.h.b16 %v277
    %v1036 = vunpack.c.l.b16 %v278
    %v1037 = vunpack.c.h.b16 %v278
    %v1038 = vunpack.c.l.b16 %v279
    %v1039 = vunpack.c.h.b16 %v279
    %v1040 = vunpack.c.l.b16 %v280
    %v1041 = vunpack.c.h.b16 %v280
    %v1042 = vunpack.c.l.b16 %v281
    %v1043 = vunpack.c.h.b16 %v281
    %v1044 = vunpack.c.l.b16 %v282
    %v1045 = vunpack.c.h.b16 %v282
    %v1046 = vunpack.c.l.b16 %v283
    %v1047 = vunpack.c.h.b16 %v283
    %v1048 = vunpack.c.l.b16 %v284
    %v1049 = vunpack.c.h.b16 %v284
    %v1050 = vunpack.c.l.b16 %v285
    %v1051 = vunpack.c.h.b16 %v285
    %v1052 = vunpack.c.l.b16 %v286
    %v1053 = vunpack.c.h.b16 %v286
    %v1054 = vunpack.c.l.b16 %v287
    %v1055 = vunpack.c.h.b16 %v287
    %v1056 = vunpack.c.l.b16 %v288
    %v1057 = vunpack.c.h.b16 %v288
    %v1058 = vunpack.c.l.b16 %v289
    %v1059 = vunpack.c.h.b16 %v289
    %v1060 = vunpack.c.l.b16 %v290
    %v1061 = vunpack.c.h.b16 %v290
    %v1062 = vunpack.c.l.b16 %v291
    %v1063 = vunpack.c.h.b16 %v291
    %v1064 = vunpack.c.l.b16 %v292
    %v1065 = vunpack.c.h.b16 %v292
    %v1066 = vunpack.c.l.b16 %v293
    %v1067 = vunpack.c.h.b16 %v293
    %v1068 = vunpack.c.l.b16 %v294
    %v1069 = vunpack.c.h.b16 %v294
    %v1070 = vunpack.c.l.b16 %v295
    %v1071 = vunpack.c.h.b16 %v295
    %v1072 = vunpack.c.l.b16 %v296
    %v1073 = vunpack.c.h.b16 %v296
    %v1074 = vunpack.c.l.b16 %v297
    %v1075 = vunpack.c.h.b16 %v297
    %v1076 = vunpack.c.l.b16 %v298
    %v1077 = vunpack.c.h.b16 %v298
    %v1078 = vunpack.c.l.b16 %v299
    %v1079 = vunpack.c.h.b16 %v299
    %v1080 = vunpack.c.l.b16 %v300
    %v1081 = vunpack.c.h.b16 %v300
    %v1082 = vunpack.c.l.b16 %v301
    %v1083 = vunpack.c.h.b16 %v301
    %v1084 = vunpack.c.l.b16 %v302
    %v1085 = vunpack.c.h.b16 %v302
    %v1086 = vunpack.c.l.b16 %v303
    %v1087 = vunpack.c.h.b16 %v303
    %v1088 = vunpack.c.l.b16 %v304
    %v1089 = vunpack.c.h.b16 %v304
    %v1090 = vunpack.c.l.b16 %v305
    %v1091 = vunpack.c.h.b16 %v305
    %v1092 = vunpack.c.l.b16 %v306
    %v1093 = vunpack.c.h.b16 %v306
    %v1094 = vunpack.c.l.b16 %v307
    %v1095 = vunpack.c.h.b16 %v307
    %v1096 = vunpack.c.l.b16 %v308
    %v1097 = vunpack.c.h.b16 %v308
    %v1098 = vunpack.c.l.b16 %v309
    %v1099 = vunpack.c.h.b16 %v309
    %v1100 = vunpack.c.l.b16 %v310
    %v1101 = vunpack.c.h.b16 %v310
    %v1102 = vunpack.c.l.b16 %v311
    %v1103 = vunpack.c.h.b16 %v311
    %v1104 = vunpack.c.l.b16 %v312
    %v1105 = vunpack.c.h.b16 %v312
    %v1106 = vunpack.c.l.b16 %v313
    %v1107 = vunpack.c.h.b16 %v313
    %v1108 = vunpack.c.l.b16 %v314
    %v1109 = vunpack.c.h.b16 %v314
    %v1110 = vunpack.c.l.b16 %v315
    %v1111 = vunpack.c.h.b16 %v315
    %v1112 = vunpack.c.l.b16 %v316
    %v1113 = vunpack.c.h.b16 %v316
    %v1114 = vunpack.c.l.b16 %v317
    %v1115 = vunpack.c.h.b16 %v317
    %v1116 = vunpack.c.l.b16 %v318
    %v1117 = vunpack.c.h.b16 %v318
    %v1118 = vunpack.c.l.b16 %v319
    %v1119 = vunpack.c.h.b16 %v319
    %v1120 = vunpack.c.l.b16 %v320
    %v1121 = vunpack.c.h.b16 %v320
    %v1122 = vunpack.c.l.b16 %v321
    %v1123 = vunpack.c.h.b16 %v321
    %v1124 = vunpack.c.l.b16 %v322
    %v1125 = vunpack.c.h.b16 %v322
    %v1126 = vunpack.c.l.b16 %v323
    %v1127 = vunpack.c.h.b16 %v323
    %v1128 = vunpack.c.l.b16 %v324
    %v1129 = vunpack.c.h.b16 %v324
    %v1130 = vunpack.c.l.b16 %v325
    %v1131 = vunpack.c.h.b16 %v325
    %v1132 = vunpack.c.l.b16 %v326
    %v1133 = vunpack.c.h.b16 %v326
    %v1134 = vunpack.c.l.b16 %v327
    %v1135 = vunpack.c.h.b16 %v327
    %v1136 = vunpack.c.l.b16 %v328
    %v1137 = vunpack.c.h.b16 %v328
    %v1138 = vunpack.c.l.b16 %v329
    %v1139 = vunpack.c.h.b16 %v329
    %v1140 = vunpack.c.l.b16 %v330
    %v1141 = vunpack.c.h.b16 %v330
    %v1142 = vunpack.c.l.b16 %v331
    %v1143 = vunpack.c.h.b16 %v331
    %v1144 = vunpack.c.l.b16 %v332
    %v1145 = vunpack.c.h.b16 %v332
    %v1146 = vunpack.c.l.b16 %v333
    %v1147 = vunpack.c.h.b16 %v333
    %v1148 = vunpack.c.l.b16 %v334
    %v1149 = vunpack.c.h.b16 %v334
    %v1150 = vunpack.c.l.b16 %v335
    %v1151 = vunpack.c.h.b16 %v335
    %v1152 = vunpack.c.l.b16 %v336
    %v1153 = vunpack.c.h.b16 %v336
    %v1154 = vunpack.c.l.b16 %v337
    %v1155 = vunpack.c.h.b16 %v337
    %v1156 = vunpack.c.l.b16 %v338
    %v1157 = vunpack.c.h.b16 %v338
    %v1158 = vunpack.c.l.b16 %v339
    %v1159 = vunpack.c.h.b16 %v339
    %v1160 = vunpack.c.l.b16 %v340
    %v1161 = vunpack.c.h.b16 %v340
    %v1162 = vunpack.c.l.b16 %v341
    %v1163 = vunpack.c.h.b16 %v341
    %v1164 = vunpack.c.l.b16 %v342
    %v1165 = vunpack.c.h.b16 %v342
    %v1166 = vunpack.c.l.b16 %v343
    %v1167 = vunpack.c.h.b16 %v343
    %v1168 = vunpack.c.l.b16 %v344
    %v1169 = vunpack.c.h.b16 %v344
    %v1170 = vunpack.c.l.b16 %v345
    %v1171 = vunpack.c.h.b16 %v345
    %v1172 = vunpack.c.l.b16 %v346
    %v1173 = vunpack.c.h.b16 %v346
    %v1174 = vunpack.c.l.b16 %v347
    %v1175 = vunpack.c.h.b16 %v347
    %v1176 = vunpack.c.l.b16 %v348
    %v1177 = vunpack.c.h.b16 %v348
    %v1178 = vunpack.c.l.b16 %v349
    %v1179 = vunpack.c.h.b16 %v349
    %v1180 = vunpack.c.l.b16 %v350
    %v1181 = vunpack.c.h.b16 %v350
    %v1182 = vunpack.c.l.b16 %v351
    %v1183 = vunpack.c.h.b16 %v351
    %v1184 = vunpack.c.l.b16 %v352
    %v1185 = vunpack.c.h.b16 %v352
    %v1186 = vunpack.c.l.b16 %v353
    %v1187 = vunpack.c.h.b16 %v353
    %v1188 = vunpack.c.l.b16 %v354
    %v1189 = vunpack.c.h.b16 %v354
    %v1190 = vunpack.c.l.b16 %v355
    %v1191 = vunpack.c.h.b16 %v355
    %v1192 = vunpack.c.l.b16 %v356
    %v1193 = vunpack.c.h.b16 %v356
    %v1194 = vunpack.c.l.b16 %v357
    %v1195 = vunpack.c.h.b16 %v357
    %v1196 = vunpack.c.l.b16 %v358
    %v1197 = vunpack.c.h.b16 %v358
    %v1198 = vunpack.c.l.b16 %v359
    %v1199 = vunpack.c.h.b16 %v359
    %v1200 = vunpack.c.l.b16 %v360
    %v1201 = vunpack.c.h.b16 %v360
    %v1202 = vunpack.c.l.b16 %v361
    %v1203 = vunpack.c.h.b16 %v361
    %v1204 = vunpack.c.l.b16 %v362
    %v1205 = vunpack.c.h.b16 %v362
    %v1206 = vunpack.c.l.b16 %v363
    %v1207 = vunpack.c.h.b16 %v363
    %v1208 = vunpack.c.l.b16 %v364
    %v1209 = vunpack.c.h.b16 %v364
    %v1210 = vunpack.c.l.b16 %v365
    %v1211 = vunpack.c.h.b16 %v365
    %v1212 = vunpack.c.l.b16 %v366
    %v1213 = vunpack.c.h.b16 %v366
    %v1214 = vunpack.c.l.b16 %v367
    %v1215 = vunpack.c.h.b16 %v367
    %v1216 = vunpack.c.l.b16 %v368
    %v1217 = vunpack.c.h.b16 %v368
    %v1218 = vunpack.c.l.b16 %v369
    %v1219 = vunpack.c.h.b16 %v369
    %v1220 = vunpack.c.l.b16 %v370
    %v1221 = vunpack.c.h.b16 %v370
    %v1222 = vunpack.c.l.b16 %v371
    %v1223 = vunpack.c.h.b16 %v371
    %v1224 = vunpack.c.l.b16 %v372
    %v1225 = vunpack.c.h.b16 %v372
    %v1226 = vunpack.c.l.b16 %v373
    %v1227 = vunpack.c.h.b16 %v373
    %v1228 = vunpack.c.l.b16 %v374
    %v1229 = vunpack.c.h.b16 %v374
    %v1230 = vunpack.c.l.b16 %v375
    %v1231 = vunpack.c.h.b16 %v375
    %v1232 = vunpack.c.l.b16 %v376
    %v1233 = vunpack.c.h.b16 %v376
    %v1234 = vunpack.c.l.b16 %v377
    %v1235 = vunpack.c.h.b16 %v377
    %v1236 = vunpack.c.l.b16 %v378
    %v1237 = vunpack.c.h.b16 %v378
    %v1238 = vunpack.c.l.b16 %v379
    %v1239 = vunpack.c.h.b16 %v379
    %v1240 = vunpack.c.l.b16 %v380
    %v1241 = vunpack.c.h.b16 %v380
    %v1242 = vunpack.c.l.b16 %v381
    %v1243 = vunpack.c.h.b16 %v381
    %v1244 = vunpack.c.l.b16 %v382
    %v1245 = vunpack.c.h.b16 %v382
    %v1246 = vunpack.c.l.b16 %v383
    %v1247 = vunpack.c.h.b16 %v383
    %v1248 = vunpack.c.l.b16 %v384
    %v1249 = vunpack.c.h.b16 %v384
    %v1250 = vunpack.c.l.b16 %v385
    %v1251 = vunpack.c.h.b16 %v385
    %v1252 = vunpack.c.l.b16 %v386
    %v1253 = vunpack.c.h.b16 %v386
    %v1254 = vunpack.c.l.b16 %v387
    %v1255 = vunpack.c.h.b16 %v387
    %v1256 = vunpack.c.l.b16 %v388
    %v1257 = vunpack.c.h.b16 %v388
    %v1258 = vunpack.c.l.b16 %v389
    %v1259 = vunpack.c.h.b16 %v389
    %v1260 = vunpack.c.l.b16 %v390
    %v1261 = vunpack.c.h.b16 %v390
    %v1262 = vunpack.c.l.b16 %v391
    %v1263 = vunpack.c.h.b16 %v391
    %v1264 = vunpack.c.l.b16 %v392
    %v1265 = vunpack.c.h.b16 %v392
    %v1266 = vunpack.c.l.b16 %v393
    %v1267 = vunpack.c.h.b16 %v393
    %v1268 = vunpack.c.l.b16 %v394
    %v1269 = vunpack.c.h.b16 %v394
    %v1270 = vunpack.c.l.b16 %v395
    %v1271 = vunpack.c.h.b16 %v395
    %v1272 = vunpack.c.l.b16 %v396
    %v1273 = vunpack.c.h.b16 %v396
    %v1274 = vunpack.c.l.b16 %v397
    %v1275 = vunpack.c.h.b16 %v397
    %v1276 = vunpack.c.l.b16 %v398
    %v1277 = vunpack.c.h.b16 %v398
    %v1278 = vunpack.c.l.b16 %v399
    %v1279 = vunpack.c.h.b16 %v399
    %v1280 = vunpack.c.l.b16 %v400
    %v1281 = vunpack.c.h.b16 %v400
    %v1282 = vunpack.c.l.b16 %v401
    %v1283 = vunpack.c.h.b16 %v401
    %v1284 = vunpack.c.l.b16 %v402
    %v1285 = vunpack.c.h.b16 %v402
    %v1286 = vunpack.c.l.b16 %v403
    %v1287 = vunpack.c.h.b16 %v403
    %v1288 = vunpack.c.l.b16 %v404
    %v1289 = vunpack.c.h.b16 %v404
    %v1290 = vunpack.c.l.b16 %v405
    %v1291 = vunpack.c.h.b16 %v405
    %v1292 = vunpack.c.l.b16 %v406
    %v1293 = vunpack.c.h.b16 %v406
    %v1294 = vunpack.c.l.b16 %v407
    %v1295 = vunpack.c.h.b16 %v407
    %v1296 = vunpack.c.l.b16 %v408
    %v1297 = vunpack.c.h.b16 %v408
    %v1298 = vunpack.c.l.b16 %v409
    %v1299 = vunpack.c.h.b16 %v409
    %v1300 = vpack.c.b16 %v796, %v788
    %v1301 = vpack.c.b16 %v797, %v789
    %v1302 = vpack.c.b16 %v798, %v790
    %v1303 = vpack.c.b16 %v799, %v791
    %v1304 = vpack.c.b16 %v800, %v792
    %v1305 = vpack.c.b16 %v801, %v793
    %v1306 = vpack.c.b16 %v802, %v794
    %v1307 = vpack.c.b16 %v803, %v795
    %v1308 = vpack.c.b16 %v812, %v804
    %v1309 = vpack.c.b16 %v813, %v805
    %v1310 = vpack.c.b16 %v814, %v806
    %v1311 = vpack.c.b16 %v815, %v807
    %v1312 = vpack.c.b16 %v816, %v808
    %v1313 = vpack.c.b16 %v817, %v809
    %v1314 = vpack.c.b16 %v818, %v810
    %v1315 = vpack.c.b16 %v819, %v811
    %v1316 = vpack.c.b16 %v828, %v820
    %v1317 = vpack.c.b16 %v829, %v821
    %v1318 = vpack.c.b16 %v830, %v822
    %v1319 = vpack.c.b16 %v831, %v823
    %v1320 = vpack.c.b16 %v832, %v824
    %v1321 = vpack.c.b16 %v833, %v825
    %v1322 = vpack.c.b16 %v834, %v826
    %v1323 = vpack.c.b16 %v835, %v827
    %v1324 = vpack.c.b16 %v844, %v836
    %v1325 = vpack.c.b16 %v845, %v837
    %v1326 = vpack.c.b16 %v846, %v838
    %v1327 = vpack.c.b16 %v847, %v839
    %v1328 = vpack.c.b16 %v848, %v840
    %v1329 = vpack.c.b16 %v849, %v841
    %v1330 = vpack.c.b16 %v850, %v842
    %v1331 = vpack.c.b16 %v851, %v843
    %v1332 = vpack.c.b16 %v860, %v852
    %v1333 = vpack.c.b16 %v861, %v853
    %v1334 = vpack.c.b16 %v862, %v854
    %v1335 = vpack.c.b16 %v863, %v855
    %v1336 = vpack.c.b16 %v864, %v856
    %v1337 = vpack.c.b16 %v865, %v857
    %v1338 = vpack.c.b16 %v866, %v858
    %v1339 = vpack.c.b16 %v867, %v859
    %v1340 = vpack.c.b16 %v876, %v868
    %v1341 = vpack.c.b16 %v877, %v869
    %v1342 = vpack.c.b16 %v878, %v870
    %v1343 = vpack.c.b16 %v879, %v871
    %v1344 = vpack.c.b16 %v880, %v872
    %v1345 = vpack.c.b16 %v881, %v873
    %v1346 = vpack.c.b16 %v882, %v874
    %v1347 = vpack.c.b16 %v883, %v875
    %v1348 = vpack.c.b16 %v892, %v884
    %v1349 = vpack.c.b16 %v893, %v885
    %v1350 = vpack.c.b16 %v894, %v886
    %v1351 = vpack.c.b16 %v895, %v887
    %v1352 = vpack.c.b16 %v896, %v888
    %v1353 = vpack.c.b16 %v897, %v889
    %v1354 = vpack.c.b16 %v898, %v890
    %v1355 = vpack.c.b16 %v899, %v891
    %v1356 = vpack.c.b16 %v908, %v900
    %v1357 = vpack.c.b16 %v909, %v901
    %v1358 = vpack.c.b16 %v910, %v902
    %v1359 = vpack.c.b16 %v911, %v903
    %v1360 = vpack.c.b16 %v912, %v904
    %v1361 = vpack.c.b16 %v913, %v905
    %v1362 = vpack.c.b16 %v914, %v906
    %v1363 = vpack.c.b16 %v915, %v907
    %v1364 = vpack.c.b16 %v924, %v916
    %v1365 = vpack.c.b16 %v925, %v917
    %v1366 = vpack.c.b16 %v926, %v918
    %v1367 = vpack.c.b16 %v927, %v919
    %v1368 = vpack.c.b16 %v928, %v920
    %v1369 = vpack.c.b16 %v929, %v921
    %v1370 = vpack.c.b16 %v930, %v922
    %v1371 = vpack.c.b16 %v931, %v923
    %v1372 = vpack.c.b16 %v940, %v932
    %v1373 = vpack.c.b16 %v941, %v933
    %v1374 = vpack.c.b16 %v942, %v934
    %v1375 = vpack.c.b16 %v943, %v935
    %v1376 = vpack.c.b16 %v944, %v936
    %v1377 = vpack.c.b16 %v945, %v937
    %v1378 = vpack.c.b16 %v946, %v938
    %v1379 = vpack.c.b16 %v947, %v939
    %v1380 = vpack.c.b16 %v956, %v948
    %v1381 = vpack.c.b16 %v957, %v949
    %v1382 = vpack.c.b16 %v958, %v950
    %v1383 = vpack.c.b16 %v959, %v951
    %v1384 = vpack.c.b16 %v960, %v952
    %v1385 = vpack.c.b16 %v961, %v953
    %v1386 = vpack.c.b16 %v962, %v954
    %v1387 = vpack.c.b16 %v963, %v955
    %v1388 = vpack.c.b16 %v972, %v964
    %v1389 = vpack.c.b16 %v973, %v965
    %v1390 = vpack.c.b16 %v974, %v966
    %v1391 = vpack.c.b16 %v975, %v967
    %v1392 = vpack.c.b16 %v976, %v968
    %v1393 = vpack.c.b16 %v977, %v969
    %v1394 = vpack.c.b16 %v978, %v970
    %v1395 = vpack.c.b16 %v979, %v971
    %v1396 = vpack.c.b16 %v988, %v980
    %v1397 = vpack.c.b16 %v989, %v981
    %v1398 = vpack.c.b16 %v990, %v982
    %v1399 = vpack.c.b16 %v991, %v983
    %v1400 = vpack.c.b16 %v992, %v984
    %v1401 = vpack.c.b16 %v993, %v985
    %v1402 = vpack.c.b16 %v994, %v986
    %v1403 = vpack.c.b16 %v995, %v987
    %v1404 = vpack.c.b16 %v1004, %v996
    %v1405 = vpack.c.b16 %v1005, %v997
    %v1406 = vpack.c.b16 %v1006, %v998
    %v1407 = vpack.c.b16 %v1007, %v999
    %v1408 = vpack.c.b16 %v1008, %v1000
    %v1409 = vpack.c.b16 %v1009, %v1001
    %v1410 = vpack.c.b16 %v1010, %v1002
    %v1411 = vpack.c.b16 %v1011, %v1003
    %v1412 = vpack.c.b16 %v1020, %v1012
    %v1413 = vpack.c.b16 %v1021, %v1013
    %v1414 = vpack.c.b16 %v1022, %v1014
    %v1415 = vpack.c.b16 %v1023, %v1015
    %v1416 = vpack.c.b16 %v1024, %v1016
    %v1417 = vpack.c.b16 %v1025, %v1017
    %v1418 = vpack.c.b16 %v1026, %v1018
    %v1419 = vpack.c.b16 %v1027, %v1019
    %v1420 = vpack.c.b16 %v1036, %v1028
    %v1421 = vpack.c.b16 %v1037, %v1029
    %v1422 = vpack.c.b16 %v1038, %v1030
    %v1423 = vpack.c.b16 %v1039, %v1031
    %v1424 = vpack.c.b16 %v1040, %v1032
    %v1425 = vpack.c.b16 %v1041, %v1033
    %v1426 = vpack.c.b16 %v1042, %v1034
    %v1427 = vpack.c.b16 %v1043, %v1035
    %v1428 = vpack.c.b16 %v1052, %v1044
    %v1429 = vpack.c.b16 %v1053, %v1045
    %v1430 = vpack.c.b16 %v1054, %v1046
    %v1431 = vpack.c.b16 %v1055, %v1047
    %v1432 = vpack.c.b16 %v1056, %v1048
    %v1433 = vpack.c.b16 %v1057, %v1049
    %v1434 = vpack.c.b16 %v1058, %v1050
    %v1435 = vpack.c.b16 %v1059, %v1051
    %v1436 = vpack.c.b16 %v1068, %v1060
    %v1437 = vpack.c.b16 %v1069, %v1061
    %v1438 = vpack.c.b16 %v1070, %v1062
    %v1439 = vpack.c.b16 %v1071, %v1063
    %v1440 = vpack.c.b16 %v1072, %v1064
    %v1441 = vpack.c.b16 %v1073, %v1065
    %v1442 = vpack.c.b16 %v1074, %v1066
    %v1443 = vpack.c.b16 %v1075, %v1067
    %v1444 = vpack.c.b16 %v1084, %v1076
    %v1445 = vpack.c.b16 %v1085, %v1077
    %v1446 = vpack.c.b16 %v1086, %v1078
    %v1447 = vpack.c.b16 %v1087, %v1079
    %v1448 = vpack.c.b16 %v1088, %v1080
    %v1449 = vpack.c.b16 %v1089, %v1081
    %v1450 = vpack.c.b16 %v1090, %v1082
    %v1451 = vpack.c.b16 %v1091, %v1083
    %v1452 = vpack.c.b16 %v1100, %v1092
    %v1453 = vpack.c.b16 %v1101, %v1093
    %v1454 = vpack.c.b16 %v1102, %v1094
    %v1455 = vpack.c.b16 %v1103, %v1095
    %v1456 = vpack.c.b16 %v1104, %v1096
    %v1457 = vpack.c.b16 %v1105, %v1097
    %v1458 = vpack.c.b16 %v1106, %v1098
    %v1459 = vpack.c.b16 %v1107, %v1099
    %v1460 = vpack.c.b16 %v1116, %v1108
    %v1461 = vpack.c.b16 %v1117, %v1109
    %v1462 = vpack.c.b16 %v1118, %v1110
    %v1463 = vpack.c.b16 %v1119, %v1111
    %v1464 = vpack.c.b16 %v1120, %v1112
    %v1465 = vpack.c.b16 %v1121, %v1113
    %v1466 = vpack.c.b16 %v1122, %v1114
    %v1467 = vpack.c.b16 %v1123, %v1115
    %v1468 = vpack.c.b16 %v1132, %v1124
    %v1469 = vpack.c.b16 %v1133, %v1125
    %v1470 = vpack.c.b16 %v1134, %v1126
    %v1471 = vpack.c.b16 %v1135, %v1127
    %v1472 = vpack.c.b16 %v1136, %v1128
    %v1473 = vpack.c.b16 %v1137, %v1129
    %v1474 = vpack.c.b16 %v1138, %v1130
    %v1475 = vpack.c.b16 %v1139, %v1131
    %v1476 = vpack.c.b16 %v1148, %v1140
    %v1477 = vpack.c.b16 %v1149, %v1141
    %v1478 = vpack.c.b16 %v1150, %v1142
    %v1479 = vpack.c.b16 %v1151, %v1143
    %v1480 = vpack.c.b16 %v1152, %v1144
    %v1481 = vpack.c.b16 %v1153, %v1145
    %v1482 = vpack.c.b16 %v1154, %v1146
    %v1483 = vpack.c.b16 %v1155, %v1147
    %v1484 = vpack.c.b16 %v1164, %v1156
    %v1485 = vpack.c.b16 %v1165, %v1157
    %v1486 = vpack.c.b16 %v1166, %v1158
    %v1487 = vpack.c.b16 %v1167, %v1159
    %v1488 = vpack.c.b16 %v1168, %v1160
    %v1489 = vpack.c.b16 %v1169, %v1161
    %v1490 = vpack.c.b16 %v1170, %v1162
    %v1491 = vpack.c.b16 %v1171, %v1163
    %v1492 = vpack.c.b16 %v1180, %v1172
    %v1493 = vpack.c.b16 %v1181, %v1173
    %v1494 = vpack.c.b16 %v1182, %v1174
    %v1495 = vpack.c.b16 %v1183, %v1175
    %v1496 = vpack.c.b16 %v1184, %v1176
    %v1497 = vpack.c.b16 %v1185, %v1177
    %v1498 = vpack.c.b16 %v1186, %v1178
    %v1499 = vpack.c.b16 %v1187, %v1179
    %v1500 = vpack.c.b16 %v1196, %v1188
    %v1501 = vpack.c.b16 %v1197, %v1189
    %v1502 = vpack.c.b16 %v1198, %v1190
    %v1503 = vpack.c.b16 %v1199, %v1191
    %v1504 = vpack.c.b16 %v1200, %v1192
    %v1505 = vpack.c.b16 %v1201, %v1193
    %v1506 = vpack.c.b16 %v1202, %v1194
    %v1507 = vpack.c.b16 %v1203, %v1195
    %v1508 = vpack.c.b16 %v1212, %v1204
    %v1509 = vpack.c.b16 %v1213, %v1205
    %v1510 = vpack.c.b16 %v1214, %v1206
    %v1511 = vpack.c.b16 %v1215, %v1207
    %v1512 = vpack.c.b16 %v1216, %v1208
    %v1513 = vpack.c.b16 %v1217, %v1209
    %v1514 = vpack.c.b16 %v1218, %v1210
    %v1515 = vpack.c.b16 %v1219, %v1211
    %v1516 = vpack.c.b16 %v1228, %v1220
    %v1517 = vpack.c.b16 %v1229, %v1221
    %v1518 = vpack.c.b16 %v1230, %v1222
    %v1519 = vpack.c.b16 %v1231, %v1223
    %v1520 = vpack.c.b16 %v1232, %v1224
    %v1521 = vpack.c.b16 %v1233, %v1225
    %v1522 = vpack.c.b16 %v1234, %v1226
    %v1523 = vpack.c.b16 %v1235, %v1227
    %v1524 = vpack.c.b16 %v1244, %v1236
    %v1525 = vpack.c.b16 %v1245, %v1237
    %v1526 = vpack.c.b16 %v1246, %v1238
    %v1527 = vpack.c.b16 %v1247, %v1239
    %v1528 = vpack.c.b16 %v1248, %v1240
    %v1529 = vpack.c.b16 %v1249, %v1241
    %v1530 = vpack.c.b16 %v1250, %v1242
    %v1531 = vpack.c.b16 %v1251, %v1243
    %v1532 = vpack.c.b16 %v1260, %v1252
    %v1533 = vpack.c.b16 %v1261, %v1253
    %v1534 = vpack.c.b16 %v1262, %v1254
    %v1535 = vpack.c.b16 %v1263, %v1255
    %v1536 = vpack.c.b16 %v1264, %v1256
    %v1537 = vpack.c.b16 %v1265, %v1257
    %v1538 = vpack.c.b16 %v1266, %v1258
    %v1539 = vpack.c.b16 %v1267, %v1259
    %v1540 = vpack.c.b16 %v1276, %v1268
    %v1541 = vpack.c.b16 %v1277, %v1269
    %v1542 = vpack.c.b16 %v1278, %v1270
    %v1543 = vpack.c.b16 %v1279, %v1271
    %v1544 = vpack.c.b16 %v1280, %v1272
    %v1545 = vpack.c.b16 %v1281, %v1273
    %v1546 = vpack.c.b16 %v1282, %v1274
    %v1547 = vpack.c.b16 %v1283, %v1275
    %v1548 = vpack.c.b16 %v1292, %v1284
    %v1549 = vpack.c.b16 %v1293, %v1285
    %v1550 = vpack.c.b16 %v1294, %v1286
    %v1551 = vpack.c.b16 %v1295, %v1287
    %v1552 = vpack.c.b16 %v1296, %v1288
    %v1553 = vpack.c.b16 %v1297, %v1289
    %v1554 = vpack.c.b16 %v1298, %v1290
    %v1555 = vpack.c.b16 %v1299, %v1291
    %1812 = vmatprep.subr.bf16.mxu0 %v1301
    %1813 = vmatpush1.bf16.msra.mxu0 %v1300
    %1814 = vmatprep.subr.bf16.mxu0 %v1309
    %1815 = vmatpush1.bf16.msra.mxu0 %v1308
    %1816 = vmatprep.subr.bf16.mxu0 %v1317
    %1817 = vmatpush1.bf16.msra.mxu0 %v1316
    %1818 = vmatprep.subr.bf16.mxu0 %v1325
    %1819 = vmatpush1.bf16.msra.mxu0 %v1324
    %1820 = vmatprep.subr.bf16.mxu0 %v1333
    %1821 = vmatpush1.bf16.msra.mxu0 %v1332
    %1822 = vmatprep.subr.bf16.mxu0 %v1341
    %1823 = vmatpush1.bf16.msra.mxu0 %v1340
    %1824 = vmatprep.subr.bf16.mxu0 %v1349
    %1825 = vmatpush1.bf16.msra.mxu0 %v1348
    %1826 = vmatprep.subr.bf16.mxu0 %v1357
    %1827 = vmatpush1.bf16.msra.mxu0 %v1356
    %1828 = vmatprep.subr.bf16.mxu0 %v1365
    %1829 = vmatpush1.bf16.msra.mxu0 %v1364
    %1830 = vmatprep.subr.bf16.mxu0 %v1373
    %1831 = vmatpush1.bf16.msra.mxu0 %v1372
    %1832 = vmatprep.subr.bf16.mxu0 %v1381
    %1833 = vmatpush1.bf16.msra.mxu0 %v1380
    %1834 = vmatprep.subr.bf16.mxu0 %v1389
    %1835 = vmatpush1.bf16.msra.mxu0 %v1388
    %1836 = vmatprep.subr.bf16.mxu0 %v1397
    %1837 = vmatpush1.bf16.msra.mxu0 %v1396
    %1838 = vmatprep.subr.bf16.mxu0 %v1405
    %1839 = vmatpush1.bf16.msra.mxu0 %v1404
    %1840 = vmatprep.subr.bf16.mxu0 %v1413
    %1841 = vmatpush1.bf16.msra.mxu0 %v1412
    %1842 = vmatprep.subr.bf16.mxu0 %v1421
    %1843 = vmatpush1.bf16.msra.mxu0 %v1420
    %1844 = vmatprep.mubr.bf16.mxu0 %v501
    %1845 = vmatmul.mubr.bf16.gmra.mrb[0].mxu0 %v500
    %v1846 = vpop.f32.mrb[0].mxu0
    %v1847 = vadd.f32 %v415, %v1846
    %v1848 = vpop.f32.mrb[0].mxu0
    %v1849 = vadd.f32 %v419, %v1848
    %v1850 = vpop.f32.mrb[0].mxu0
    %v1851 = vadd.f32 %v415, %v1850
    %v1852 = vpop.f32.mrb[0].mxu0
    %v1853 = vadd.f32 %v419, %v1852
    %1854 = vmatprep.mubr.bf16.mxu0 %v505
    %1855 = vmatmul.mubr.bf16.gmra.mrb[0].mxu0 %v504
    %v1856 = vpop.f32.mrb[0].mxu0
    %v1857 = vadd.f32 %v415, %v1856
    %v1858 = vpop.f32.mrb[0].mxu0
    %v1859 = vadd.f32 %v419, %v1858
    %v1860 = vpop.f32.mrb[0].mxu0
    %v1861 = vadd.f32 %v415, %v1860
    %v1862 = vpop.f32.mrb[0].mxu0
    %v1863 = vadd.f32 %v419, %v1862
    %1864 = vmatprep.mubr.bf16.mxu0 %v509
    %1865 = vmatmul.mubr.bf16.gmra.mrb[0].mxu0 %v508
    %v1866 = vpop.f32.mrb[0].mxu0
    %v1867 = vadd.f32 %v415, %v1866
    %v1868 = vpop.f32.mrb[0].mxu0
    %v1869 = vadd.f32 %v419, %v1868
    %v1870 = vpop.f32.mrb[0].mxu0
    %v1871 = vadd.f32 %v415, %v1870
    %v1872 = vpop.f32.mrb[0].mxu0
    %v1873 = vadd.f32 %v419, %v1872
    %1874 = vmatprep.mubr.bf16.mxu0 %v513
    %1875 = vmatmul.mubr.bf16.gmra.mrb[0].mxu0 %v512
    %v1876 = vpop.f32.mrb[0].mxu0
    %v1877 = vadd.f32 %v415, %v1876
    %v1878 = vpop.f32.mrb[0].mxu0
    %v1879 = vadd.f32 %v419, %v1878
    %v1880 = vpop.f32.mrb[0].mxu0
    %v1881 = vadd.f32 %v415, %v1880
    %v1882 = vpop.f32.mrb[0].mxu0
    %v1883 = vadd.f32 %v419, %v1882
    %1884 = vdwg.mxu0
    %1885 = vmatprep.subr.bf16.mxu0 %v1429
    %1886 = vmatpush1.bf16.msra.mxu0 %v1428
    %1887 = vmatprep.subr.bf16.mxu0 %v1437
    %1888 = vmatpush1.bf16.msra.mxu0 %v1436
    %1889 = vmatprep.subr.bf16.mxu0 %v1445
    %1890 = vmatpush1.bf16.msra.mxu0 %v1444
    %1891 = vmatprep.subr.bf16.mxu0 %v1453
    %1892 = vmatpush1.bf16.msra.mxu0 %v1452
    %1893 = vmatprep.subr.bf16.mxu0 %v1461
    %1894 = vmatpush1.bf16.msra.mxu0 %v1460
    %1895 = vmatprep.subr.bf16.mxu0 %v1469
    %1896 = vmatpush1.bf16.msra.mxu0 %v1468
    %1897 = vmatprep.subr.bf16.mxu0 %v1477
    %1898 = vmatpush1.bf16.msra.mxu0 %v1476
    %1899 = vmatprep.subr.bf16.mxu0 %v1485
    %1900 = vmatpush1.bf16.msra.mxu0 %v1484
    %1901 = vmatprep.subr.bf16.mxu0 %v1493
    %1902 = vmatpush1.bf16.msra.mxu0 %v1492
    %1903 = vmatprep.subr.bf16.mxu0 %v1501
    %1904 = vmatpush1.bf16.msra.mxu0 %v1500
    %1905 = vmatprep.subr.bf16.mxu0 %v1509
    %1906 = vmatpush1.bf16.msra.mxu0 %v1508
    %1907 = vmatprep.subr.bf16.mxu0 %v1517
    %1908 = vmatpush1.bf16.msra.mxu0 %v1516
    %1909 = vmatprep.subr.bf16.mxu0 %v1525
    %1910 = vmatpush1.bf16.msra.mxu0 %v1524
    %1911 = vmatprep.subr.bf16.mxu0 %v1533
    %1912 = vmatpush1.bf16.msra.mxu0 %v1532
    %1913 = vmatprep.subr.bf16.mxu0 %v1541
    %1914 = vmatpush1.bf16.msra.mxu0 %v1540
    %1915 = vmatprep.subr.bf16.mxu0 %v1549
    %1916 = vmatpush1.bf16.msra.mxu0 %v1548
    %1917 = vmatprep.mubr.bf16.mxu0 %v503
    %1918 = vmatmul.mubr.bf16.gmra.mrb[0].mxu0 %v502
    %v1919 = vpop.f32.mrb[0].mxu0
    %v1920 = vadd.f32 %v1847, %v1919
    %v1921 = vpop.f32.mrb[0].mxu0
    %v1922 = vadd.f32 %v1849, %v1921
    %v1923 = vpop.f32.mrb[0].mxu0
    %v1924 = vadd.f32 %v1851, %v1923
    %v1925 = vpop.f32.mrb[0].mxu0
    %v1926 = vadd.f32 %v1853, %v1925
    %1927 = vmatprep.mubr.bf16.mxu0 %v507
    %1928 = vmatmul.mubr.bf16.gmra.mrb[0].mxu0 %v506
    %v1929 = vpop.f32.mrb[0].mxu0
    %v1930 = vadd.f32 %v1857, %v1929
    %v1931 = vpop.f32.mrb[0].mxu0
    %v1932 = vadd.f32 %v1859, %v1931
    %v1933 = vpop.f32.mrb[0].mxu0
    %v1934 = vadd.f32 %v1861, %v1933
    %v1935 = vpop.f32.mrb[0].mxu0
    %v1936 = vadd.f32 %v1863, %v1935
    %1937 = vmatprep.mubr.bf16.mxu0 %v511
    %1938 = vmatmul.mubr.bf16.gmra.mrb[0].mxu0 %v510
    %v1939 = vpop.f32.mrb[0].mxu0
    %v1940 = vadd.f32 %v1867, %v1939
    %v1941 = vpop.f32.mrb[0].mxu0
    %v1942 = vadd.f32 %v1869, %v1941
    %v1943 = vpop.f32.mrb[0].mxu0
    %v1944 = vadd.f32 %v1871, %v1943
    %v1945 = vpop.f32.mrb[0].mxu0
    %v1946 = vadd.f32 %v1873, %v1945
    %1947 = vmatprep.mubr.bf16.mxu0 %v515
    %1948 = vmatmul.mubr.bf16.gmra.mrb[0].mxu0 %v514
    %v1949 = vpop.f32.mrb[0].mxu0
    %v1950 = vadd.f32 %v1877, %v1949
    %v1951 = vpop.f32.mrb[0].mxu0
    %v1952 = vadd.f32 %v1879, %v1951
    %v1953 = vpop.f32.mrb[0].mxu0
    %v1954 = vadd.f32 %v1881, %v1953
    %v1955 = vpop.f32.mrb[0].mxu0
    %v1956 = vadd.f32 %v1883, %v1955
    %1957 = vdwg.mxu0
    %1958 = vmatprep.subr.bf16.mxu0 %v1303
    %1959 = vmatpush1.bf16.msra.mxu0 %v1302
    %1960 = vmatprep.subr.bf16.mxu0 %v1311
    %1961 = vmatpush1.bf16.msra.mxu0 %v1310
    %1962 = vmatprep.subr.bf16.mxu0 %v1319
    %1963 = vmatpush1.bf16.msra.mxu0 %v1318
    %1964 = vmatprep.subr.bf16.mxu0 %v1327
    %1965 = vmatpush1.bf16.msra.mxu0 %v1326
    %1966 = vmatprep.subr.bf16.mxu0 %v1335
    %1967 = vmatpush1.bf16.msra.mxu0 %v1334
    %1968 = vmatprep.subr.bf16.mxu0 %v1343
    %1969 = vmatpush1.bf16.msra.mxu0 %v1342
    %1970 = vmatprep.subr.bf16.mxu0 %v1351
    %1971 = vmatpush1.bf16.msra.mxu0 %v1350
    %1972 = vmatprep.subr.bf16.mxu0 %v1359
    %1973 = vmatpush1.bf16.msra.mxu0 %v1358
    %1974 = vmatprep.subr.bf16.mxu0 %v1367
    %1975 = vmatpush1.bf16.msra.mxu0 %v1366
    %1976 = vmatprep.subr.bf16.mxu0 %v1375
    %1977 = vmatpush1.bf16.msra.mxu0 %v1374
    %1978 = vmatprep.subr.bf16.mxu0 %v1383
    %1979 = vmatpush1.bf16.msra.mxu0 %v1382
    %1980 = vmatprep.subr.bf16.mxu0 %v1391
    %1981 = vmatpush1.bf16.msra.mxu0 %v1390
    %1982 = vmatprep.subr.bf16.mxu0 %v1399
    %1983 = vmatpush1.bf16.msra.mxu0 %v1398
    %1984 = vmatprep.subr.bf16.mxu0 %v1407
    %1985 = vmatpush1.bf16.msra.mxu0 %v1406
    %1986 = vmatprep.subr.bf16.mxu0 %v1415
    %1987 = vmatpush1.bf16.msra.mxu0 %v1414
    %1988 = vmatprep.subr.bf16.mxu0 %v1423
    %1989 = vmatpush1.bf16.msra.mxu0 %v1422
    %1990 = vmatprep.mubr.bf16.mxu0 %v501
    %1991 = vmatmul.mubr.bf16.gmra.mrb[0].mxu0 %v500
    %v1992 = vpop.f32.mrb[0].mxu0
    %v1993 = vadd.f32 %v423, %v1992
    %v1994 = vpop.f32.mrb[0].mxu0
    %v1995 = vadd.f32 %v427, %v1994
    %v1996 = vpop.f32.mrb[0].mxu0
    %v1997 = vadd.f32 %v423, %v1996
    %v1998 = vpop.f32.mrb[0].mxu0
    %v1999 = vadd.f32 %v427, %v1998
    %2000 = vmatprep.mubr.bf16.mxu0 %v505
    %2001 = vmatmul.mubr.bf16.gmra.mrb[0].mxu0 %v504
    %v2002 = vpop.f32.mrb[0].mxu0
    %v2003 = vadd.f32 %v423, %v2002
    %v2004 = vpop.f32.mrb[0].mxu0
    %v2005 = vadd.f32 %v427, %v2004
    %v2006 = vpop.f32.mrb[0].mxu0
    %v2007 = vadd.f32 %v423, %v2006
    %v2008 = vpop.f32.mrb[0].mxu0
    %v2009 = vadd.f32 %v427, %v2008
    %2010 = vmatprep.mubr.bf16.mxu0 %v509
    %2011 = vmatmul.mubr.bf16.gmra.mrb[0].mxu0 %v508
    %v2012 = vpop.f32.mrb[0].mxu0
    %v2013 = vadd.f32 %v423, %v2012
    %v2014 = vpop.f32.mrb[0].mxu0
    %v2015 = vadd.f32 %v427, %v2014
    %v2016 = vpop.f32.mrb[0].mxu0
    %v2017 = vadd.f32 %v423, %v2016
    %v2018 = vpop.f32.mrb[0].mxu0
    %v2019 = vadd.f32 %v427, %v2018
    %2020 = vmatprep.mubr.bf16.mxu0 %v513
    %2021 = vmatmul.mubr.bf16.gmra.mrb[0].mxu0 %v512
    %v2022 = vpop.f32.mrb[0].mxu0
    %v2023 = vadd.f32 %v423, %v2022
    %v2024 = vpop.f32.mrb[0].mxu0
    %v2025 = vadd.f32 %v427, %v2024
    %v2026 = vpop.f32.mrb[0].mxu0
    %v2027 = vadd.f32 %v423, %v2026
    %v2028 = vpop.f32.mrb[0].mxu0
    %v2029 = vadd.f32 %v427, %v2028
    %2030 = vdwg.mxu0
    %2031 = vmatprep.subr.bf16.mxu0 %v1431
    %2032 = vmatpush1.bf16.msra.mxu0 %v1430
    %2033 = vmatprep.subr.bf16.mxu0 %v1439
    %2034 = vmatpush1.bf16.msra.mxu0 %v1438
    %2035 = vmatprep.subr.bf16.mxu0 %v1447
    %2036 = vmatpush1.bf16.msra.mxu0 %v1446
    %2037 = vmatprep.subr.bf16.mxu0 %v1455
    %2038 = vmatpush1.bf16.msra.mxu0 %v1454
    %2039 = vmatprep.subr.bf16.mxu0 %v1463
    %2040 = vmatpush1.bf16.msra.mxu0 %v1462
    %2041 = vmatprep.subr.bf16.mxu0 %v1471
    %2042 = vmatpush1.bf16.msra.mxu0 %v1470
    %2043 = vmatprep.subr.bf16.mxu0 %v1479
    %2044 = vmatpush1.bf16.msra.mxu0 %v1478
    %2045 = vmatprep.subr.bf16.mxu0 %v1487
    %2046 = vmatpush1.bf16.msra.mxu0 %v1486
    %2047 = vmatprep.subr.bf16.mxu0 %v1495
    %2048 = vmatpush1.bf16.msra.mxu0 %v1494
    %2049 = vmatprep.subr.bf16.mxu0 %v1503
    %2050 = vmatpush1.bf16.msra.mxu0 %v1502
    %2051 = vmatprep.subr.bf16.mxu0 %v1511
    %2052 = vmatpush1.bf16.msra.mxu0 %v1510
    %2053 = vmatprep.subr.bf16.mxu0 %v1519
    %2054 = vmatpush1.bf16.msra.mxu0 %v1518
    %2055 = vmatprep.subr.bf16.mxu0 %v1527
    %2056 = vmatpush1.bf16.msra.mxu0 %v1526
    %2057 = vmatprep.subr.bf16.mxu0 %v1535
    %2058 = vmatpush1.bf16.msra.mxu0 %v1534
    %2059 = vmatprep.subr.bf16.mxu0 %v1543
    %2060 = vmatpush1.bf16.msra.mxu0 %v1542
    %2061 = vmatprep.subr.bf16.mxu0 %v1551
    %2062 = vmatpush1.bf16.msra.mxu0 %v1550
    %2063 = vmatprep.mubr.bf16.mxu0 %v503
    %2064 = vmatmul.mubr.bf16.gmra.mrb[0].mxu0 %v502
    %v2065 = vpop.f32.mrb[0].mxu0
    %v2066 = vadd.f32 %v1993, %v2065
    %v2067 = vpop.f32.mrb[0].mxu0
    %v2068 = vadd.f32 %v1995, %v2067
    %v2069 = vpop.f32.mrb[0].mxu0
    %v2070 = vadd.f32 %v1997, %v2069
    %v2071 = vpop.f32.mrb[0].mxu0
    %v2072 = vadd.f32 %v1999, %v2071
    %2073 = vmatprep.mubr.bf16.mxu0 %v507
    %2074 = vmatmul.mubr.bf16.gmra.mrb[0].mxu0 %v506
    %v2075 = vpop.f32.mrb[0].mxu0
    %v2076 = vadd.f32 %v2003, %v2075
    %v2077 = vpop.f32.mrb[0].mxu0
    %v2078 = vadd.f32 %v2005, %v2077
    %v2079 = vpop.f32.mrb[0].mxu0
    %v2080 = vadd.f32 %v2007, %v2079
    %v2081 = vpop.f32.mrb[0].mxu0
    %v2082 = vadd.f32 %v2009, %v2081
    %2083 = vmatprep.mubr.bf16.mxu0 %v511
    %2084 = vmatmul.mubr.bf16.gmra.mrb[0].mxu0 %v510
    %v2085 = vpop.f32.mrb[0].mxu0
    %v2086 = vadd.f32 %v2013, %v2085
    %v2087 = vpop.f32.mrb[0].mxu0
    %v2088 = vadd.f32 %v2015, %v2087
    %v2089 = vpop.f32.mrb[0].mxu0
    %v2090 = vadd.f32 %v2017, %v2089
    %v2091 = vpop.f32.mrb[0].mxu0
    %v2092 = vadd.f32 %v2019, %v2091
    %2093 = vmatprep.mubr.bf16.mxu0 %v515
    %2094 = vmatmul.mubr.bf16.gmra.mrb[0].mxu0 %v514
    %v2095 = vpop.f32.mrb[0].mxu0
    %v2096 = vadd.f32 %v2023, %v2095
    %v2097 = vpop.f32.mrb[0].mxu0
    %v2098 = vadd.f32 %v2025, %v2097
    %v2099 = vpop.f32.mrb[0].mxu0
    %v2100 = vadd.f32 %v2027, %v2099
    %v2101 = vpop.f32.mrb[0].mxu0
    %v2102 = vadd.f32 %v2029, %v2101
    %2103 = vdwg.mxu0
    %2104 = vmatprep.subr.bf16.mxu0 %v1305
    %2105 = vmatpush1.bf16.msra.mxu0 %v1304
    %2106 = vmatprep.subr.bf16.mxu0 %v1313
    %2107 = vmatpush1.bf16.msra.mxu0 %v1312
    %2108 = vmatprep.subr.bf16.mxu0 %v1321
    %2109 = vmatpush1.bf16.msra.mxu0 %v1320
    %2110 = vmatprep.subr.bf16.mxu0 %v1329
    %2111 = vmatpush1.bf16.msra.mxu0 %v1328
    %2112 = vmatprep.subr.bf16.mxu0 %v1337
    %2113 = vmatpush1.bf16.msra.mxu0 %v1336
    %2114 = vmatprep.subr.bf16.mxu0 %v1345
    %2115 = vmatpush1.bf16.msra.mxu0 %v1344
    %2116 = vmatprep.subr.bf16.mxu0 %v1353
    %2117 = vmatpush1.bf16.msra.mxu0 %v1352
    %2118 = vmatprep.subr.bf16.mxu0 %v1361
    %2119 = vmatpush1.bf16.msra.mxu0 %v1360
    %2120 = vmatprep.subr.bf16.mxu0 %v1369
    %2121 = vmatpush1.bf16.msra.mxu0 %v1368
    %2122 = vmatprep.subr.bf16.mxu0 %v1377
    %2123 = vmatpush1.bf16.msra.mxu0 %v1376
    %2124 = vmatprep.subr.bf16.mxu0 %v1385
    %2125 = vmatpush1.bf16.msra.mxu0 %v1384
    %2126 = vmatprep.subr.bf16.mxu0 %v1393
    %2127 = vmatpush1.bf16.msra.mxu0 %v1392
    %2128 = vmatprep.subr.bf16.mxu0 %v1401
    %2129 = vmatpush1.bf16.msra.mxu0 %v1400
    %2130 = vmatprep.subr.bf16.mxu0 %v1409
    %2131 = vmatpush1.bf16.msra.mxu0 %v1408
    %2132 = vmatprep.subr.bf16.mxu0 %v1417
    %2133 = vmatpush1.bf16.msra.mxu0 %v1416
    %2134 = vmatprep.subr.bf16.mxu0 %v1425
    %2135 = vmatpush1.bf16.msra.mxu0 %v1424
    %2136 = vmatprep.mubr.bf16.mxu0 %v501
    %2137 = vmatmul.mubr.bf16.gmra.mrb[0].mxu0 %v500
    %v2138 = vpop.f32.mrb[0].mxu0
    %v2139 = vadd.f32 %v431, %v2138
    %v2140 = vpop.f32.mrb[0].mxu0
    %v2141 = vadd.f32 %v435, %v2140
    %v2142 = vpop.f32.mrb[0].mxu0
    %v2143 = vadd.f32 %v431, %v2142
    %v2144 = vpop.f32.mrb[0].mxu0
    %v2145 = vadd.f32 %v435, %v2144
    %2146 = vmatprep.mubr.bf16.mxu0 %v505
    %2147 = vmatmul.mubr.bf16.gmra.mrb[0].mxu0 %v504
    %v2148 = vpop.f32.mrb[0].mxu0
    %v2149 = vadd.f32 %v431, %v2148
    %v2150 = vpop.f32.mrb[0].mxu0
    %v2151 = vadd.f32 %v435, %v2150
    %v2152 = vpop.f32.mrb[0].mxu0
    %v2153 = vadd.f32 %v431, %v2152
    %v2154 = vpop.f32.mrb[0].mxu0
    %v2155 = vadd.f32 %v435, %v2154
    %2156 = vmatprep.mubr.bf16.mxu0 %v509
    %2157 = vmatmul.mubr.bf16.gmra.mrb[0].mxu0 %v508
    %v2158 = vpop.f32.mrb[0].mxu0
    %v2159 = vadd.f32 %v431, %v2158
    %v2160 = vpop.f32.mrb[0].mxu0
    %v2161 = vadd.f32 %v435, %v2160
    %v2162 = vpop.f32.mrb[0].mxu0
    %v2163 = vadd.f32 %v431, %v2162
    %v2164 = vpop.f32.mrb[0].mxu0
    %v2165 = vadd.f32 %v435, %v2164
    %2166 = vmatprep.mubr.bf16.mxu0 %v513
    %2167 = vmatmul.mubr.bf16.gmra.mrb[0].mxu0 %v512
    %v2168 = vpop.f32.mrb[0].mxu0
    %v2169 = vadd.f32 %v431, %v2168
    %v2170 = vpop.f32.mrb[0].mxu0
    %v2171 = vadd.f32 %v435, %v2170
    %v2172 = vpop.f32.mrb[0].mxu0
    %v2173 = vadd.f32 %v431, %v2172
    %v2174 = vpop.f32.mrb[0].mxu0
    %v2175 = vadd.f32 %v435, %v2174
    %2176 = vdwg.mxu0
    %2177 = vmatprep.subr.bf16.mxu0 %v1433
    %2178 = vmatpush1.bf16.msra.mxu0 %v1432
    %2179 = vmatprep.subr.bf16.mxu0 %v1441
    %2180 = vmatpush1.bf16.msra.mxu0 %v1440
    %2181 = vmatprep.subr.bf16.mxu0 %v1449
    %2182 = vmatpush1.bf16.msra.mxu0 %v1448
    %2183 = vmatprep.subr.bf16.mxu0 %v1457
    %2184 = vmatpush1.bf16.msra.mxu0 %v1456
    %2185 = vmatprep.subr.bf16.mxu0 %v1465
    %2186 = vmatpush1.bf16.msra.mxu0 %v1464
    %2187 = vmatprep.subr.bf16.mxu0 %v1473
    %2188 = vmatpush1.bf16.msra.mxu0 %v1472
    %2189 = vmatprep.subr.bf16.mxu0 %v1481
    %2190 = vmatpush1.bf16.msra.mxu0 %v1480
    %2191 = vmatprep.subr.bf16.mxu0 %v1489
    %2192 = vmatpush1.bf16.msra.mxu0 %v1488
    %2193 = vmatprep.subr.bf16.mxu0 %v1497
    %2194 = vmatpush1.bf16.msra.mxu0 %v1496
    %2195 = vmatprep.subr.bf16.mxu0 %v1505
    %2196 = vmatpush1.bf16.msra.mxu0 %v1504
    %2197 = vmatprep.subr.bf16.mxu0 %v1513
    %2198 = vmatpush1.bf16.msra.mxu0 %v1512
    %2199 = vmatprep.subr.bf16.mxu0 %v1521
    %2200 = vmatpush1.bf16.msra.mxu0 %v1520
    %2201 = vmatprep.subr.bf16.mxu0 %v1529
    %2202 = vmatpush1.bf16.msra.mxu0 %v1528
    %2203 = vmatprep.subr.bf16.mxu0 %v1537
    %2204 = vmatpush1.bf16.msra.mxu0 %v1536
    %2205 = vmatprep.subr.bf16.mxu0 %v1545
    %2206 = vmatpush1.bf16.msra.mxu0 %v1544
    %2207 = vmatprep.subr.bf16.mxu0 %v1553
    %2208 = vmatpush1.bf16.msra.mxu0 %v1552
    %2209 = vmatprep.mubr.bf16.mxu0 %v503
    %2210 = vmatmul.mubr.bf16.gmra.mrb[0].mxu0 %v502
    %v2211 = vpop.f32.mrb[0].mxu0
    %v2212 = vadd.f32 %v2139, %v2211
    %v2213 = vpop.f32.mrb[0].mxu0
    %v2214 = vadd.f32 %v2141, %v2213
    %v2215 = vpop.f32.mrb[0].mxu0
    %v2216 = vadd.f32 %v2143, %v2215
    %v2217 = vpop.f32.mrb[0].mxu0
    %v2218 = vadd.f32 %v2145, %v2217
    %2219 = vmatprep.mubr.bf16.mxu0 %v507
    %2220 = vmatmul.mubr.bf16.gmra.mrb[0].mxu0 %v506
    %v2221 = vpop.f32.mrb[0].mxu0
    %v2222 = vadd.f32 %v2149, %v2221
    %v2223 = vpop.f32.mrb[0].mxu0
    %v2224 = vadd.f32 %v2151, %v2223
    %v2225 = vpop.f32.mrb[0].mxu0
    %v2226 = vadd.f32 %v2153, %v2225
    %v2227 = vpop.f32.mrb[0].mxu0
    %v2228 = vadd.f32 %v2155, %v2227
    %2229 = vmatprep.mubr.bf16.mxu0 %v511
    %2230 = vmatmul.mubr.bf16.gmra.mrb[0].mxu0 %v510
    %v2231 = vpop.f32.mrb[0].mxu0
    %v2232 = vadd.f32 %v2159, %v2231
    %v2233 = vpop.f32.mrb[0].mxu0
    %v2234 = vadd.f32 %v2161, %v2233
    %v2235 = vpop.f32.mrb[0].mxu0
    %v2236 = vadd.f32 %v2163, %v2235
    %v2237 = vpop.f32.mrb[0].mxu0
    %v2238 = vadd.f32 %v2165, %v2237
    %2239 = vmatprep.mubr.bf16.mxu0 %v515
    %2240 = vmatmul.mubr.bf16.gmra.mrb[0].mxu0 %v514
    %v2241 = vpop.f32.mrb[0].mxu0
    %v2242 = vadd.f32 %v2169, %v2241
    %v2243 = vpop.f32.mrb[0].mxu0
    %v2244 = vadd.f32 %v2171, %v2243
    %v2245 = vpop.f32.mrb[0].mxu0
    %v2246 = vadd.f32 %v2173, %v2245
    %v2247 = vpop.f32.mrb[0].mxu0
    %v2248 = vadd.f32 %v2175, %v2247
    %2249 = vdwg.mxu0
    %2250 = vmatprep.subr.bf16.mxu0 %v1307
    %2251 = vmatpush1.bf16.msra.mxu0 %v1306
    %2252 = vmatprep.subr.bf16.mxu0 %v1315
    %2253 = vmatpush1.bf16.msra.mxu0 %v1314
    %2254 = vmatprep.subr.bf16.mxu0 %v1323
    %2255 = vmatpush1.bf16.msra.mxu0 %v1322
    %2256 = vmatprep.subr.bf16.mxu0 %v1331
    %2257 = vmatpush1.bf16.msra.mxu0 %v1330
    %2258 = vmatprep.subr.bf16.mxu0 %v1339
    %2259 = vmatpush1.bf16.msra.mxu0 %v1338
    %2260 = vmatprep.subr.bf16.mxu0 %v1347
    %2261 = vmatpush1.bf16.msra.mxu0 %v1346
    %2262 = vmatprep.subr.bf16.mxu0 %v1355
    %2263 = vmatpush1.bf16.msra.mxu0 %v1354
    %2264 = vmatprep.subr.bf16.mxu0 %v1363
    %2265 = vmatpush1.bf16.msra.mxu0 %v1362
    %2266 = vmatprep.subr.bf16.mxu0 %v1371
    %2267 = vmatpush1.bf16.msra.mxu0 %v1370
    %2268 = vmatprep.subr.bf16.mxu0 %v1379
    %2269 = vmatpush1.bf16.msra.mxu0 %v1378
    %2270 = vmatprep.subr.bf16.mxu0 %v1387
    %2271 = vmatpush1.bf16.msra.mxu0 %v1386
    %2272 = vmatprep.subr.bf16.mxu0 %v1395
    %2273 = vmatpush1.bf16.msra.mxu0 %v1394
    %2274 = vmatprep.subr.bf16.mxu0 %v1403
    %2275 = vmatpush1.bf16.msra.mxu0 %v1402
    %2276 = vmatprep.subr.bf16.mxu0 %v1411
    %2277 = vmatpush1.bf16.msra.mxu0 %v1410
    %2278 = vmatprep.subr.bf16.mxu0 %v1419
    %2279 = vmatpush1.bf16.msra.mxu0 %v1418
    %2280 = vmatprep.subr.bf16.mxu0 %v1427
    %2281 = vmatpush1.bf16.msra.mxu0 %v1426
    %2282 = vmatprep.mubr.bf16.mxu0 %v501
    %2283 = vmatmul.mubr.bf16.gmra.mrb[0].mxu0 %v500
    %v2284 = vpop.f32.mrb[0].mxu0
    %v2285 = vadd.f32 %v439, %v2284
    %v2286 = vpop.f32.mrb[0].mxu0
    %v2287 = vadd.f32 %v443, %v2286
    %v2288 = vpop.f32.mrb[0].mxu0
    %v2289 = vadd.f32 %v439, %v2288
    %v2290 = vpop.f32.mrb[0].mxu0
    %v2291 = vadd.f32 %v443, %v2290
    %2292 = vmatprep.mubr.bf16.mxu0 %v505
    %2293 = vmatmul.mubr.bf16.gmra.mrb[0].mxu0 %v504
    %v2294 = vpop.f32.mrb[0].mxu0
    %v2295 = vadd.f32 %v439, %v2294
    %v2296 = vpop.f32.mrb[0].mxu0
    %v2297 = vadd.f32 %v443, %v2296
    %v2298 = vpop.f32.mrb[0].mxu0
    %v2299 = vadd.f32 %v439, %v2298
    %v2300 = vpop.f32.mrb[0].mxu0
    %v2301 = vadd.f32 %v443, %v2300
    %2302 = vmatprep.mubr.bf16.mxu0 %v509
    %2303 = vmatmul.mubr.bf16.gmra.mrb[0].mxu0 %v508
    %v2304 = vpop.f32.mrb[0].mxu0
    %v2305 = vadd.f32 %v439, %v2304
    %v2306 = vpop.f32.mrb[0].mxu0
    %v2307 = vadd.f32 %v443, %v2306
    %v2308 = vpop.f32.mrb[0].mxu0
    %v2309 = vadd.f32 %v439, %v2308
    %v2310 = vpop.f32.mrb[0].mxu0
    %v2311 = vadd.f32 %v443, %v2310
    %2312 = vmatprep.mubr.bf16.mxu0 %v513
    %2313 = vmatmul.mubr.bf16.gmra.mrb[0].mxu0 %v512
    %v2314 = vpop.f32.mrb[0].mxu0
    %v2315 = vadd.f32 %v439, %v2314
    %v2316 = vpop.f32.mrb[0].mxu0
    %v2317 = vadd.f32 %v443, %v2316
    %v2318 = vpop.f32.mrb[0].mxu0
    %v2319 = vadd.f32 %v439, %v2318
    %v2320 = vpop.f32.mrb[0].mxu0
    %v2321 = vadd.f32 %v443, %v2320
    %2322 = vdwg.mxu0
    %2323 = vmatprep.subr.bf16.mxu0 %v1435
    %2324 = vmatpush1.bf16.msra.mxu0 %v1434
    %2325 = vmatprep.subr.bf16.mxu0 %v1443
    %2326 = vmatpush1.bf16.msra.mxu0 %v1442
    %2327 = vmatprep.subr.bf16.mxu0 %v1451
    %2328 = vmatpush1.bf16.msra.mxu0 %v1450
    %2329 = vmatprep.subr.bf16.mxu0 %v1459
    %2330 = vmatpush1.bf16.msra.mxu0 %v1458
    %2331 = vmatprep.subr.bf16.mxu0 %v1467
    %2332 = vmatpush1.bf16.msra.mxu0 %v1466
    %2333 = vmatprep.subr.bf16.mxu0 %v1475
    %2334 = vmatpush1.bf16.msra.mxu0 %v1474
    %2335 = vmatprep.subr.bf16.mxu0 %v1483
    %2336 = vmatpush1.bf16.msra.mxu0 %v1482
    %2337 = vmatprep.subr.bf16.mxu0 %v1491
    %2338 = vmatpush1.bf16.msra.mxu0 %v1490
    %2339 = vmatprep.subr.bf16.mxu0 %v1499
    %2340 = vmatpush1.bf16.msra.mxu0 %v1498
    %2341 = vmatprep.subr.bf16.mxu0 %v1507
    %2342 = vmatpush1.bf16.msra.mxu0 %v1506
    %2343 = vmatprep.subr.bf16.mxu0 %v1515
    %2344 = vmatpush1.bf16.msra.mxu0 %v1514
    %2345 = vmatprep.subr.bf16.mxu0 %v1523
    %2346 = vmatpush1.bf16.msra.mxu0 %v1522
    %2347 = vmatprep.subr.bf16.mxu0 %v1531
    %2348 = vmatpush1.bf16.msra.mxu0 %v1530
    %2349 = vmatprep.subr.bf16.mxu0 %v1539
    %2350 = vmatpush1.bf16.msra.mxu0 %v1538
    %2351 = vmatprep.subr.bf16.mxu0 %v1547
    %2352 = vmatpush1.bf16.msra.mxu0 %v1546
    %2353 = vmatprep.subr.bf16.mxu0 %v1555
    %2354 = vmatpush1.bf16.msra.mxu0 %v1554
    %2355 = vmatprep.mubr.bf16.mxu0 %v503
    %2356 = vmatmul.mubr.bf16.gmra.mrb[0].mxu0 %v502
    %v2357 = vpop.f32.mrb[0].mxu0
    %v2358 = vadd.f32 %v2285, %v2357
    %v2359 = vpop.f32.mrb[0].mxu0
    %v2360 = vadd.f32 %v2287, %v2359
    %v2361 = vpop.f32.mrb[0].mxu0
    %v2362 = vadd.f32 %v2289, %v2361
    %v2363 = vpop.f32.mrb[0].mxu0
    %v2364 = vadd.f32 %v2291, %v2363
    %2365 = vmatprep.mubr.bf16.mxu0 %v507
    %2366 = vmatmul.mubr.bf16.gmra.mrb[0].mxu0 %v506
    %v2367 = vpop.f32.mrb[0].mxu0
    %v2368 = vadd.f32 %v2295, %v2367
    %v2369 = vpop.f32.mrb[0].mxu0
    %v2370 = vadd.f32 %v2297, %v2369
    %v2371 = vpop.f32.mrb[0].mxu0
    %v2372 = vadd.f32 %v2299, %v2371
    %v2373 = vpop.f32.mrb[0].mxu0
    %v2374 = vadd.f32 %v2301, %v2373
    %2375 = vmatprep.mubr.bf16.mxu0 %v511
    %2376 = vmatmul.mubr.bf16.gmra.mrb[0].mxu0 %v510
    %v2377 = vpop.f32.mrb[0].mxu0
    %v2378 = vadd.f32 %v2305, %v2377
    %v2379 = vpop.f32.mrb[0].mxu0
    %v2380 = vadd.f32 %v2307, %v2379
    %v2381 = vpop.f32.mrb[0].mxu0
    %v2382 = vadd.f32 %v2309, %v2381
    %v2383 = vpop.f32.mrb[0].mxu0
    %v2384 = vadd.f32 %v2311, %v2383
    %2385 = vmatprep.mubr.bf16.mxu0 %v515
    %2386 = vmatmul.mubr.bf16.gmra.mrb[0].mxu0 %v514
    %v2387 = vpop.f32.mrb[0].mxu0
    %v2388 = vadd.f32 %v2315, %v2387
    %v2389 = vpop.f32.mrb[0].mxu0
    %v2390 = vadd.f32 %v2317, %v2389
    %v2391 = vpop.f32.mrb[0].mxu0
    %v2392 = vadd.f32 %v2319, %v2391
    %v2393 = vpop.f32.mrb[0].mxu0
    %v2394 = vadd.f32 %v2321, %v2393
    %2395 = vdwg.mxu0
    %2396 = vst [vmem:[#allocation2] sm:$0xff] %v1920
    %2397 = vst [vmem:[#allocation2 + $0x8] sm:$0xff] %v1922
    %2398 = vst [vmem:[#allocation2 + $0x10] sm:$0xff] %v2066
    %2399 = vst [vmem:[#allocation2 + $0x18] sm:$0xff] %v2068
    %2400 = vst [vmem:[#allocation2 + $0x20] sm:$0xff] %v1924
    %2401 = vst [vmem:[#allocation2 + $0x28] sm:$0xff] %v1926
    %2402 = vst [vmem:[#allocation2 + $0x30] sm:$0xff] %v2070
    %2403 = vst [vmem:[#allocation2 + $0x38] sm:$0xff] %v2072
    %2404 = vst [vmem:[#allocation2 + $0x40] sm:$0xff] %v1930
    %2405 = vst [vmem:[#allocation2 + $0x48] sm:$0xff] %v1932
    %2406 = vst [vmem:[#allocation2 + $0x50] sm:$0xff] %v2076
    %2407 = vst [vmem:[#allocation2 + $0x58] sm:$0xff] %v2078
    %2408 = vst [vmem:[#allocation2 + $0x60] sm:$0xff] %v1934
    %2409 = vst [vmem:[#allocation2 + $0x68] sm:$0xff] %v1936
    %2410 = vst [vmem:[#allocation2 + $0x70] sm:$0xff] %v2080
    %2411 = vst [vmem:[#allocation2 + $0x78] sm:$0xff] %v2082
    %2412 = vst [vmem:[#allocation2 + $0x80] sm:$0xff] %v1940
    %2413 = vst [vmem:[#allocation2 + $0x88] sm:$0xff] %v1942
    %2414 = vst [vmem:[#allocation2 + $0x90] sm:$0xff] %v2086
    %2415 = vst [vmem:[#allocation2 + $0x98] sm:$0xff] %v2088
    %2416 = vst [vmem:[#allocation2 + $0xa0] sm:$0xff] %v1944
    %2417 = vst [vmem:[#allocation2 + $0xa8] sm:$0xff] %v1946
    %2418 = vst [vmem:[#allocation2 + $0xb0] sm:$0xff] %v2090
    %2419 = vst [vmem:[#allocation2 + $0xb8] sm:$0xff] %v2092
    %2420 = vst [vmem:[#allocation2 + $0xc0] sm:$0xff] %v1950
    %2421 = vst [vmem:[#allocation2 + $0xc8] sm:$0xff] %v1952
    %2422 = vst [vmem:[#allocation2 + $0xd0] sm:$0xff] %v2096
    %2423 = vst [vmem:[#allocation2 + $0xd8] sm:$0xff] %v2098
    %2424 = vst [vmem:[#allocation2 + $0xe0] sm:$0xff] %v1954
    %2425 = vst [vmem:[#allocation2 + $0xe8] sm:$0xff] %v1956
    %2426 = vst [vmem:[#allocation2 + $0xf0] sm:$0xff] %v2100
    %2427 = vst [vmem:[#allocation2 + $0xf8] sm:$0xff] %v2102
    %2428 = vst [vmem:[#allocation3] sm:$0xff] %v2212
    %2429 = vst [vmem:[#allocation3 + $0x8] sm:$0xff] %v2214
    %2430 = vst [vmem:[#allocation3 + $0x10] sm:$0xff] %v2358
    %2431 = vst [vmem:[#allocation3 + $0x18] sm:$0xff] %v2360
    %2432 = vst [vmem:[#allocation3 + $0x20] sm:$0xff] %v2216
    %2433 = vst [vmem:[#allocation3 + $0x28] sm:$0xff] %v2218
    %2434 = vst [vmem:[#allocation3 + $0x30] sm:$0xff] %v2362
    %2435 = vst [vmem:[#allocation3 + $0x38] sm:$0xff] %v2364
    %2436 = vst [vmem:[#allocation3 + $0x40] sm:$0xff] %v2222
    %2437 = vst [vmem:[#allocation3 + $0x48] sm:$0xff] %v2224
    %2438 = vst [vmem:[#allocation3 + $0x50] sm:$0xff] %v2368
    %2439 = vst [vmem:[#allocation3 + $0x58] sm:$0xff] %v2370
    %2440 = vst [vmem:[#allocation3 + $0x60] sm:$0xff] %v2226
    %2441 = vst [vmem:[#allocation3 + $0x68] sm:$0xff] %v2228
    %2442 = vst [vmem:[#allocation3 + $0x70] sm:$0xff] %v2372
    %2443 = vst [vmem:[#allocation3 + $0x78] sm:$0xff] %v2374
    %2444 = vst [vmem:[#allocation3 + $0x80] sm:$0xff] %v2232
    %2445 = vst [vmem:[#allocation3 + $0x88] sm:$0xff] %v2234
    %2446 = vst [vmem:[#allocation3 + $0x90] sm:$0xff] %v2378
    %2447 = vst [vmem:[#allocation3 + $0x98] sm:$0xff] %v2380
    %2448 = vst [vmem:[#allocation3 + $0xa0] sm:$0xff] %v2236
    %2449 = vst [vmem:[#allocation3 + $0xa8] sm:$0xff] %v2238
    %2450 = vst [vmem:[#allocation3 + $0xb0] sm:$0xff] %v2382
    %2451 = vst [vmem:[#allocation3 + $0xb8] sm:$0xff] %v2384
    %2452 = vst [vmem:[#allocation3 + $0xc0] sm:$0xff] %v2242
    %2453 = vst [vmem:[#allocation3 + $0xc8] sm:$0xff] %v2244
    %2454 = vst [vmem:[#allocation3 + $0xd0] sm:$0xff] %v2388
    %2455 = vst [vmem:[#allocation3 + $0xd8] sm:$0xff] %v2390
    %2456 = vst [vmem:[#allocation3 + $0xe0] sm:$0xff] %v2246
    %2457 = vst [vmem:[#allocation3 + $0xe8] sm:$0xff] %v2248
    %2458 = vst [vmem:[#allocation3 + $0xf0] sm:$0xff] %v2392
    %2459 = vst [vmem:[#allocation3 + $0xf8] sm:$0xff] %v2394
    %v2460 = vld [vmem:[#allocation13] sm:$0xff]
    %v2461 = vld [vmem:[#allocation13 + $0x8] sm:$0xff]
    %v2462 = vld [vmem:[#allocation13 + $0x10] sm:$0xff]
    %v2463 = vld [vmem:[#allocation13 + $0x18] sm:$0xff]
    %v2464 = vld [vmem:[#allocation13 + $0x20] sm:$0xff]
    %v2465 = vld [vmem:[#allocation13 + $0x28] sm:$0xff]
    %v2466 = vld [vmem:[#allocation13 + $0x30] sm:$0xff]
    %v2467 = vld [vmem:[#allocation13 + $0x38] sm:$0xff]
    %v2468 = vld [vmem:[#allocation13 + $0x40] sm:$0xff]
    %v2469 = vld [vmem:[#allocation13 + $0x48] sm:$0xff]
    %v2470 = vld [vmem:[#allocation13 + $0x50] sm:$0xff]
    %v2471 = vld [vmem:[#allocation13 + $0x58] sm:$0xff]
    %v2472 = vld [vmem:[#allocation13 + $0x60] sm:$0xff]
    %v2473 = vld [vmem:[#allocation13 + $0x68] sm:$0xff]
    %v2474 = vld [vmem:[#allocation13 + $0x70] sm:$0xff]
    %v2475 = vld [vmem:[#allocation13 + $0x78] sm:$0xff]
    %v2476 = vld [vmem:[#allocation13 + $0x80] sm:$0xff]
    %v2477 = vld [vmem:[#allocation13 + $0x88] sm:$0xff]
    %v2478 = vld [vmem:[#allocation13 + $0x90] sm:$0xff]
    %v2479 = vld [vmem:[#allocation13 + $0x98] sm:$0xff]
    %v2480 = vld [vmem:[#allocation13 + $0xa0] sm:$0xff]
    %v2481 = vld [vmem:[#allocation13 + $0xa8] sm:$0xff]
    %v2482 = vld [vmem:[#allocation13 + $0xb0] sm:$0xff]
    %v2483 = vld [vmem:[#allocation13 + $0xb8] sm:$0xff]
    %v2484 = vld [vmem:[#allocation13 + $0xc0] sm:$0xff]
    %v2485 = vld [vmem:[#allocation13 + $0xc8] sm:$0xff]
    %v2486 = vld [vmem:[#allocation13 + $0xd0] sm:$0xff]
    %v2487 = vld [vmem:[#allocation13 + $0xd8] sm:$0xff]
    %v2488 = vld [vmem:[#allocation13 + $0xe0] sm:$0xff]
    %v2489 = vld [vmem:[#allocation13 + $0xe8] sm:$0xff]
    %v2490 = vld [vmem:[#allocation13 + $0xf0] sm:$0xff]
    %v2491 = vld [vmem:[#allocation13 + $0xf8] sm:$0xff]
    %v2492 = vld [vmem:[#allocation15] sm:$0xff]
    %v2493 = vld [vmem:[#allocation15 + $0x8] sm:$0xff]
    %v2494 = vld [vmem:[#allocation15 + $0x10] sm:$0xff]
    %v2495 = vld [vmem:[#allocation15 + $0x18] sm:$0xff]
    %v2496 = vld [vmem:[#allocation15 + $0x20] sm:$0xff]
    %v2497 = vld [vmem:[#allocation15 + $0x28] sm:$0xff]
    %v2498 = vld [vmem:[#allocation15 + $0x30] sm:$0xff]
    %v2499 = vld [vmem:[#allocation15 + $0x38] sm:$0xff]
    %v2500 = vld [vmem:[#allocation15 + $0x40] sm:$0xff]
    %v2501 = vld [vmem:[#allocation15 + $0x48] sm:$0xff]
    %v2502 = vld [vmem:[#allocation15 + $0x50] sm:$0xff]
    %v2503 = vld [vmem:[#allocation15 + $0x58] sm:$0xff]
    %v2504 = vld [vmem:[#allocation15 + $0x60] sm:$0xff]
    %v2505 = vld [vmem:[#allocation15 + $0x68] sm:$0xff]
    %v2506 = vld [vmem:[#allocation15 + $0x70] sm:$0xff]
    %v2507 = vld [vmem:[#allocation15 + $0x78] sm:$0xff]
    %v2508 = vld [vmem:[#allocation15 + $0x80] sm:$0xff]
    %v2509 = vld [vmem:[#allocation15 + $0x88] sm:$0xff]
    %v2510 = vld [vmem:[#allocation15 + $0x90] sm:$0xff]
    %v2511 = vld [vmem:[#allocation15 + $0x98] sm:$0xff]
    %v2512 = vld [vmem:[#allocation15 + $0xa0] sm:$0xff]
    %v2513 = vld [vmem:[#allocation15 + $0xa8] sm:$0xff]
    %v2514 = vld [vmem:[#allocation15 + $0xb0] sm:$0xff]
    %v2515 = vld [vmem:[#allocation15 + $0xb8] sm:$0xff]
    %v2516 = vld [vmem:[#allocation15 + $0xc0] sm:$0xff]
    %v2517 = vld [vmem:[#allocation15 + $0xc8] sm:$0xff]
    %v2518 = vld [vmem:[#allocation15 + $0xd0] sm:$0xff]
    %v2519 = vld [vmem:[#allocation15 + $0xd8] sm:$0xff]
    %v2520 = vld [vmem:[#allocation15 + $0xe0] sm:$0xff]
    %v2521 = vld [vmem:[#allocation15 + $0xe8] sm:$0xff]
    %v2522 = vld [vmem:[#allocation15 + $0xf0] sm:$0xff]
    %v2523 = vld [vmem:[#allocation15 + $0xf8] sm:$0xff]
    %v2524 = vld [vmem:[#allocation9] sm:$0xff]
    %v2525 = vld [vmem:[#allocation9 + $0x8] sm:$0xff]
    %v2526 = vld [vmem:[#allocation10] sm:$0xff]
    %v2527 = vld [vmem:[#allocation10 + $0x8] sm:$0xff]
    %v2528 = vpack.c.bf16 %v2524, %v2524
    %v2561 = vunpack.c.l.b16 %v2460
    %v2562 = vunpack.c.h.b16 %v2460
    %v2563 = vunpack.c.l.b16 %v2461
    %v2564 = vunpack.c.h.b16 %v2461
    %v2565 = vunpack.c.l.b16 %v2462
    %v2566 = vunpack.c.h.b16 %v2462
    %v2567 = vunpack.c.l.b16 %v2463
    %v2568 = vunpack.c.h.b16 %v2463
    %v2569 = vunpack.c.l.b16 %v2464
    %v2570 = vunpack.c.h.b16 %v2464
    %v2571 = vunpack.c.l.b16 %v2465
    %v2572 = vunpack.c.h.b16 %v2465
    %v2573 = vunpack.c.l.b16 %v2466
    %v2574 = vunpack.c.h.b16 %v2466
    %v2575 = vunpack.c.l.b16 %v2467
    %v2576 = vunpack.c.h.b16 %v2467
    %v2577 = vunpack.c.l.b16 %v2468
    %v2578 = vunpack.c.h.b16 %v2468
    %v2579 = vunpack.c.l.b16 %v2469
    %v2580 = vunpack.c.h.b16 %v2469
    %v2581 = vunpack.c.l.b16 %v2470
    %v2582 = vunpack.c.h.b16 %v2470
    %v2583 = vunpack.c.l.b16 %v2471
    %v2584 = vunpack.c.h.b16 %v2471
    %v2585 = vunpack.c.l.b16 %v2472
    %v2586 = vunpack.c.h.b16 %v2472
    %v2587 = vunpack.c.l.b16 %v2473
    %v2588 = vunpack.c.h.b16 %v2473
    %v2589 = vunpack.c.l.b16 %v2474
    %v2590 = vunpack.c.h.b16 %v2474
    %v2591 = vunpack.c.l.b16 %v2475
    %v2592 = vunpack.c.h.b16 %v2475
    %v2593 = vunpack.c.l.b16 %v2476
    %v2594 = vunpack.c.h.b16 %v2476
    %v2595 = vunpack.c.l.b16 %v2477
    %v2596 = vunpack.c.h.b16 %v2477
    %v2597 = vunpack.c.l.b16 %v2478
    %v2598 = vunpack.c.h.b16 %v2478
    %v2599 = vunpack.c.l.b16 %v2479
    %v2600 = vunpack.c.h.b16 %v2479
    %v2601 = vunpack.c.l.b16 %v2480
    %v2602 = vunpack.c.h.b16 %v2480
    %v2603 = vunpack.c.l.b16 %v2481
    %v2604 = vunpack.c.h.b16 %v2481
    %v2605 = vunpack.c.l.b16 %v2482
    %v2606 = vunpack.c.h.b16 %v2482
    %v2607 = vunpack.c.l.b16 %v2483
    %v2608 = vunpack.c.h.b16 %v2483
    %v2609 = vunpack.c.l.b16 %v2484
    %v2610 = vunpack.c.h.b16 %v2484
    %v2611 = vunpack.c.l.b16 %v2485
    %v2612 = vunpack.c.h.b16 %v2485
    %v2613 = vunpack.c.l.b16 %v2486
    %v2614 = vunpack.c.h.b16 %v2486
    %v2615 = vunpack.c.l.b16 %v2487
    %v2616 = vunpack.c.h.b16 %v2487
    %v2617 = vunpack.c.l.b16 %v2488
    %v2618 = vunpack.c.h.b16 %v2488
    %v2619 = vunpack.c.l.b16 %v2489
    %v2620 = vunpack.c.h.b16 %v2489
    %v2621 = vunpack.c.l.b16 %v2490
    %v2622 = vunpack.c.h.b16 %v2490
    %v2623 = vunpack.c.l.b16 %v2491
    %v2624 = vunpack.c.h.b16 %v2491
    %v2625 = vpack.c.b16 %v2565, %v2561
    %v2626 = vpack.c.b16 %v2566, %v2562
    %v2627 = vpack.c.b16 %v2567, %v2563
    %v2628 = vpack.c.b16 %v2568, %v2564
    %v2629 = vpack.c.b16 %v2573, %v2569
    %v2630 = vpack.c.b16 %v2574, %v2570
    %v2631 = vpack.c.b16 %v2575, %v2571
    %v2632 = vpack.c.b16 %v2576, %v2572
    %v2633 = vpack.c.b16 %v2581, %v2577
    %v2634 = vpack.c.b16 %v2582, %v2578
    %v2635 = vpack.c.b16 %v2583, %v2579
    %v2636 = vpack.c.b16 %v2584, %v2580
    %v2637 = vpack.c.b16 %v2589, %v2585
    %v2638 = vpack.c.b16 %v2590, %v2586
    %v2639 = vpack.c.b16 %v2591, %v2587
    %v2640 = vpack.c.b16 %v2592, %v2588
    %v2641 = vpack.c.b16 %v2597, %v2593
    %v2642 = vpack.c.b16 %v2598, %v2594
    %v2643 = vpack.c.b16 %v2599, %v2595
    %v2644 = vpack.c.b16 %v2600, %v2596
    %v2645 = vpack.c.b16 %v2605, %v2601
    %v2646 = vpack.c.b16 %v2606, %v2602
    %v2647 = vpack.c.b16 %v2607, %v2603
    %v2648 = vpack.c.b16 %v2608, %v2604
    %v2649 = vpack.c.b16 %v2613, %v2609
    %v2650 = vpack.c.b16 %v2614, %v2610
    %v2651 = vpack.c.b16 %v2615, %v2611
    %v2652 = vpack.c.b16 %v2616, %v2612
    %v2653 = vpack.c.b16 %v2621, %v2617
    %v2654 = vpack.c.b16 %v2622, %v2618
    %v2655 = vpack.c.b16 %v2623, %v2619
    %v2656 = vpack.c.b16 %v2624, %v2620
    %2689 = vmatprep.subr.bf16.mxu0 %v2626
    %2690 = vmatpush1.bf16.msra.mxu0 %v2625
    %2691 = vmatprep.subr.bf16.mxu0 %v2630
    %2692 = vmatpush1.bf16.msra.mxu0 %v2629
    %2693 = vmatprep.subr.bf16.mxu0 %v2634
    %2694 = vmatpush1.bf16.msra.mxu0 %v2633
    %2695 = vmatprep.subr.bf16.mxu0 %v2638
    %2696 = vmatpush1.bf16.msra.mxu0 %v2637
    %2697 = vmatprep.subr.bf16.mxu0 %v2642
    %2698 = vmatpush1.bf16.msra.mxu0 %v2641
    %2699 = vmatprep.subr.bf16.mxu0 %v2646
    %2700 = vmatpush1.bf16.msra.mxu0 %v2645
    %2701 = vmatprep.subr.bf16.mxu0 %v2650
    %2702 = vmatpush1.bf16.msra.mxu0 %v2649
    %2703 = vmatprep.subr.bf16.mxu0 %v2654
    %2704 = vmatpush1.bf16.msra.mxu0 %v2653
    %2705 = vmatprep.subr.bf16.mxu0 0
    %2706 = vmatpush1.bf16.msra.mxu0 0
    %2707 = vmatprep.subr.bf16.mxu0 0
    %2708 = vmatpush1.bf16.msra.mxu0 0
    %2709 = vmatprep.subr.bf16.mxu0 0
    %2710 = vmatpush1.bf16.msra.mxu0 0
    %2711 = vmatprep.subr.bf16.mxu0 0
    %2712 = vmatpush1.bf16.msra.mxu0 0
    %2713 = vmatprep.subr.bf16.mxu0 0
    %2714 = vmatpush1.bf16.msra.mxu0 0
    %2715 = vmatprep.subr.bf16.mxu0 0
    %2716 = vmatpush1.bf16.msra.mxu0 0
    %2717 = vmatprep.subr.bf16.mxu0 0
    %2718 = vmatpush1.bf16.msra.mxu0 0
    %2719 = vmatprep.subr.bf16.mxu0 0
    %2720 = vmatpush1.bf16.msra.mxu0 0
    %2721 = vmatprep.mubr.bf16.mxu0 0
    %2722 = vmatmul.mubr.bf16.gmra.mrb[0].mxu0 %v2528
    %v2723 = vpop.f32.mrb[0].mxu0
    %v2724 = vadd.f32 0.0, %v2723
    %v2725 = vpop.f32.mrb[0].mxu0
    %v2726 = vadd.f32 0.0, %v2725
    %v2727 = vpop.f32.mrb[0].mxu0
    %v2728 = vpop.f32.mrb[0].mxu0
    %2729 = vdwg.mxu0
    %2730 = vmatprep.subr.bf16.mxu0 %v2628
    %2731 = vmatpush1.bf16.msra.mxu0 %v2627
    %2732 = vmatprep.subr.bf16.mxu0 %v2632
    %2733 = vmatpush1.bf16.msra.mxu0 %v2631
    %2734 = vmatprep.subr.bf16.mxu0 %v2636
    %2735 = vmatpush1.bf16.msra.mxu0 %v2635
    %2736 = vmatprep.subr.bf16.mxu0 %v2640
    %2737 = vmatpush1.bf16.msra.mxu0 %v2639
    %2738 = vmatprep.subr.bf16.mxu0 %v2644
    %2739 = vmatpush1.bf16.msra.mxu0 %v2643
    %2740 = vmatprep.subr.bf16.mxu0 %v2648
    %2741 = vmatpush1.bf16.msra.mxu0 %v2647
    %2742 = vmatprep.subr.bf16.mxu0 %v2652
    %2743 = vmatpush1.bf16.msra.mxu0 %v2651
    %2744 = vmatprep.subr.bf16.mxu0 %v2656
    %2745 = vmatpush1.bf16.msra.mxu0 %v2655
    %2746 = vmatprep.subr.bf16.mxu0 0
    %2747 = vmatpush1.bf16.msra.mxu0 0
    %2748 = vmatprep.subr.bf16.mxu0 0
    %2749 = vmatpush1.bf16.msra.mxu0 0
    %2750 = vmatprep.subr.bf16.mxu0 0
    %2751 = vmatpush1.bf16.msra.mxu0 0
    %2752 = vmatprep.subr.bf16.mxu0 0
    %2753 = vmatpush1.bf16.msra.mxu0 0
    %2754 = vmatprep.subr.bf16.mxu0 0
    %2755 = vmatpush1.bf16.msra.mxu0 0
    %2756 = vmatprep.subr.bf16.mxu0 0
    %2757 = vmatpush1.bf16.msra.mxu0 0
    %2758 = vmatprep.subr.bf16.mxu0 0
    %2759 = vmatpush1.bf16.msra.mxu0 0
    %2760 = vmatprep.subr.bf16.mxu0 0
    %2761 = vmatpush1.bf16.msra.mxu0 0
    %2762 = vmatprep.mubr.bf16.mxu0 0
    %2763 = vmatmul.mubr.bf16.gmra.mrb[0].mxu0 %v2528
    %v2764 = vpop.f32.mrb[0].mxu0
    %v2765 = vadd.f32 0.0, %v2764
    %v2766 = vpop.f32.mrb[0].mxu0
    %v2767 = vadd.f32 0.0, %v2766
    %v2768 = vpop.f32.mrb[0].mxu0
    %v2769 = vpop.f32.mrb[0].mxu0
    %2770 = vdwg.mxu0
    %v2771 = vpack.c.bf16 %v2525, %v2525
    %v2804 = vunpack.c.l.b16 %v2492
    %v2805 = vunpack.c.h.b16 %v2492
    %v2806 = vunpack.c.l.b16 %v2493
    %v2807 = vunpack.c.h.b16 %v2493
    %v2808 = vunpack.c.l.b16 %v2494
    %v2809 = vunpack.c.h.b16 %v2494
    %v2810 = vunpack.c.l.b16 %v2495
    %v2811 = vunpack.c.h.b16 %v2495
    %v2812 = vunpack.c.l.b16 %v2496
    %v2813 = vunpack.c.h.b16 %v2496
    %v2814 = vunpack.c.l.b16 %v2497
    %v2815 = vunpack.c.h.b16 %v2497
    %v2816 = vunpack.c.l.b16 %v2498
    %v2817 = vunpack.c.h.b16 %v2498
    %v2818 = vunpack.c.l.b16 %v2499
    %v2819 = vunpack.c.h.b16 %v2499
    %v2820 = vunpack.c.l.b16 %v2500
    %v2821 = vunpack.c.h.b16 %v2500
    %v2822 = vunpack.c.l.b16 %v2501
    %v2823 = vunpack.c.h.b16 %v2501
    %v2824 = vunpack.c.l.b16 %v2502
    %v2825 = vunpack.c.h.b16 %v2502
    %v2826 = vunpack.c.l.b16 %v2503
    %v2827 = vunpack.c.h.b16 %v2503
    %v2828 = vunpack.c.l.b16 %v2504
    %v2829 = vunpack.c.h.b16 %v2504
    %v2830 = vunpack.c.l.b16 %v2505
    %v2831 = vunpack.c.h.b16 %v2505
    %v2832 = vunpack.c.l.b16 %v2506
    %v2833 = vunpack.c.h.b16 %v2506
    %v2834 = vunpack.c.l.b16 %v2507
    %v2835 = vunpack.c.h.b16 %v2507
    %v2836 = vunpack.c.l.b16 %v2508
    %v2837 = vunpack.c.h.b16 %v2508
    %v2838 = vunpack.c.l.b16 %v2509
    %v2839 = vunpack.c.h.b16 %v2509
    %v2840 = vunpack.c.l.b16 %v2510
    %v2841 = vunpack.c.h.b16 %v2510
    %v2842 = vunpack.c.l.b16 %v2511
    %v2843 = vunpack.c.h.b16 %v2511
    %v2844 = vunpack.c.l.b16 %v2512
    %v2845 = vunpack.c.h.b16 %v2512
    %v2846 = vunpack.c.l.b16 %v2513
    %v2847 = vunpack.c.h.b16 %v2513
    %v2848 = vunpack.c.l.b16 %v2514
    %v2849 = vunpack.c.h.b16 %v2514
    %v2850 = vunpack.c.l.b16 %v2515
    %v2851 = vunpack.c.h.b16 %v2515
    %v2852 = vunpack.c.l.b16 %v2516
    %v2853 = vunpack.c.h.b16 %v2516
    %v2854 = vunpack.c.l.b16 %v2517
    %v2855 = vunpack.c.h.b16 %v2517
    %v2856 = vunpack.c.l.b16 %v2518
    %v2857 = vunpack.c.h.b16 %v2518
    %v2858 = vunpack.c.l.b16 %v2519
    %v2859 = vunpack.c.h.b16 %v2519
    %v2860 = vunpack.c.l.b16 %v2520
    %v2861 = vunpack.c.h.b16 %v2520
    %v2862 = vunpack.c.l.b16 %v2521
    %v2863 = vunpack.c.h.b16 %v2521
    %v2864 = vunpack.c.l.b16 %v2522
    %v2865 = vunpack.c.h.b16 %v2522
    %v2866 = vunpack.c.l.b16 %v2523
    %v2867 = vunpack.c.h.b16 %v2523
    %v2868 = vpack.c.b16 %v2808, %v2804
    %v2869 = vpack.c.b16 %v2809, %v2805
    %v2870 = vpack.c.b16 %v2810, %v2806
    %v2871 = vpack.c.b16 %v2811, %v2807
    %v2872 = vpack.c.b16 %v2816, %v2812
    %v2873 = vpack.c.b16 %v2817, %v2813
    %v2874 = vpack.c.b16 %v2818, %v2814
    %v2875 = vpack.c.b16 %v2819, %v2815
    %v2876 = vpack.c.b16 %v2824, %v2820
    %v2877 = vpack.c.b16 %v2825, %v2821
    %v2878 = vpack.c.b16 %v2826, %v2822
    %v2879 = vpack.c.b16 %v2827, %v2823
    %v2880 = vpack.c.b16 %v2832, %v2828
    %v2881 = vpack.c.b16 %v2833, %v2829
    %v2882 = vpack.c.b16 %v2834, %v2830
    %v2883 = vpack.c.b16 %v2835, %v2831
    %v2884 = vpack.c.b16 %v2840, %v2836
    %v2885 = vpack.c.b16 %v2841, %v2837
    %v2886 = vpack.c.b16 %v2842, %v2838
    %v2887 = vpack.c.b16 %v2843, %v2839
    %v2888 = vpack.c.b16 %v2848, %v2844
    %v2889 = vpack.c.b16 %v2849, %v2845
    %v2890 = vpack.c.b16 %v2850, %v2846
    %v2891 = vpack.c.b16 %v2851, %v2847
    %v2892 = vpack.c.b16 %v2856, %v2852
    %v2893 = vpack.c.b16 %v2857, %v2853
    %v2894 = vpack.c.b16 %v2858, %v2854
    %v2895 = vpack.c.b16 %v2859, %v2855
    %v2896 = vpack.c.b16 %v2864, %v2860
    %v2897 = vpack.c.b16 %v2865, %v2861
    %v2898 = vpack.c.b16 %v2866, %v2862
    %v2899 = vpack.c.b16 %v2867, %v2863
    %2932 = vmatprep.subr.bf16.mxu0 %v2869
    %2933 = vmatpush1.bf16.msra.mxu0 %v2868
    %2934 = vmatprep.subr.bf16.mxu0 %v2873
    %2935 = vmatpush1.bf16.msra.mxu0 %v2872
    %2936 = vmatprep.subr.bf16.mxu0 %v2877
    %2937 = vmatpush1.bf16.msra.mxu0 %v2876
    %2938 = vmatprep.subr.bf16.mxu0 %v2881
    %2939 = vmatpush1.bf16.msra.mxu0 %v2880
    %2940 = vmatprep.subr.bf16.mxu0 %v2885
    %2941 = vmatpush1.bf16.msra.mxu0 %v2884
    %2942 = vmatprep.subr.bf16.mxu0 %v2889
    %2943 = vmatpush1.bf16.msra.mxu0 %v2888
    %2944 = vmatprep.subr.bf16.mxu0 %v2893
    %2945 = vmatpush1.bf16.msra.mxu0 %v2892
    %2946 = vmatprep.subr.bf16.mxu0 %v2897
    %2947 = vmatpush1.bf16.msra.mxu0 %v2896
    %2948 = vmatprep.subr.bf16.mxu0 0
    %2949 = vmatpush1.bf16.msra.mxu0 0
    %2950 = vmatprep.subr.bf16.mxu0 0
    %2951 = vmatpush1.bf16.msra.mxu0 0
    %2952 = vmatprep.subr.bf16.mxu0 0
    %2953 = vmatpush1.bf16.msra.mxu0 0
    %2954 = vmatprep.subr.bf16.mxu0 0
    %2955 = vmatpush1.bf16.msra.mxu0 0
    %2956 = vmatprep.subr.bf16.mxu0 0
    %2957 = vmatpush1.bf16.msra.mxu0 0
    %2958 = vmatprep.subr.bf16.mxu0 0
    %2959 = vmatpush1.bf16.msra.mxu0 0
    %2960 = vmatprep.subr.bf16.mxu0 0
    %2961 = vmatpush1.bf16.msra.mxu0 0
    %2962 = vmatprep.subr.bf16.mxu0 0
    %2963 = vmatpush1.bf16.msra.mxu0 0
    %2964 = vmatprep.mubr.bf16.mxu0 0
    %2965 = vmatmul.mubr.bf16.gmra.mrb[0].mxu0 %v2771
    %v2966 = vpop.f32.mrb[0].mxu0
    %v2967 = vadd.f32 0.0, %v2966
    %v2968 = vpop.f32.mrb[0].mxu0
    %v2969 = vadd.f32 0.0, %v2968
    %v2970 = vpop.f32.mrb[0].mxu0
    %v2971 = vpop.f32.mrb[0].mxu0
    %2972 = vdwg.mxu0
    %2973 = vmatprep.subr.bf16.mxu0 %v2871
    %2974 = vmatpush1.bf16.msra.mxu0 %v2870
    %2975 = vmatprep.subr.bf16.mxu0 %v2875
    %2976 = vmatpush1.bf16.msra.mxu0 %v2874
    %2977 = vmatprep.subr.bf16.mxu0 %v2879
    %2978 = vmatpush1.bf16.msra.mxu0 %v2878
    %2979 = vmatprep.subr.bf16.mxu0 %v2883
    %2980 = vmatpush1.bf16.msra.mxu0 %v2882
    %2981 = vmatprep.subr.bf16.mxu0 %v2887
    %2982 = vmatpush1.bf16.msra.mxu0 %v2886
    %2983 = vmatprep.subr.bf16.mxu0 %v2891
    %2984 = vmatpush1.bf16.msra.mxu0 %v2890
    %2985 = vmatprep.subr.bf16.mxu0 %v2895
    %2986 = vmatpush1.bf16.msra.mxu0 %v2894
    %2987 = vmatprep.subr.bf16.mxu0 %v2899
    %2988 = vmatpush1.bf16.msra.mxu0 %v2898
    %2989 = vmatprep.subr.bf16.mxu0 0
    %2990 = vmatpush1.bf16.msra.mxu0 0
    %2991 = vmatprep.subr.bf16.mxu0 0
    %2992 = vmatpush1.bf16.msra.mxu0 0
    %2993 = vmatprep.subr.bf16.mxu0 0
    %2994 = vmatpush1.bf16.msra.mxu0 0
    %2995 = vmatprep.subr.bf16.mxu0 0
    %2996 = vmatpush1.bf16.msra.mxu0 0
    %2997 = vmatprep.subr.bf16.mxu0 0
    %2998 = vmatpush1.bf16.msra.mxu0 0
    %2999 = vmatprep.subr.bf16.mxu0 0
    %3000 = vmatpush1.bf16.msra.mxu0 0
    %3001 = vmatprep.subr.bf16.mxu0 0
    %3002 = vmatpush1.bf16.msra.mxu0 0
    %3003 = vmatprep.subr.bf16.mxu0 0
    %3004 = vmatpush1.bf16.msra.mxu0 0
    %3005 = vmatprep.mubr.bf16.mxu0 0
    %3006 = vmatmul.mubr.bf16.gmra.mrb[0].mxu0 %v2771
    %v3007 = vpop.f32.mrb[0].mxu0
    %v3008 = vadd.f32 0.0, %v3007
    %v3009 = vpop.f32.mrb[0].mxu0
    %v3010 = vadd.f32 0.0, %v3009
    %v3011 = vpop.f32.mrb[0].mxu0
    %v3012 = vpop.f32.mrb[0].mxu0
    %3013 = vdwg.mxu0
    %s3014 = smul.u32 0, 4
    %s3015 = smul.addr %s3014, 8
    %s3016 = scalar_lea.vmem [#allocation2], %s3015
    %v3017 = vld [vmem:[%s3016] sm:$0xff]
    %v3018 = vld [vmem:[%s3016 + $0x8] sm:$0xff]
    %v3019 = vld [vmem:[%s3016 + $0x10] sm:$0xff]
    %v3020 = vld [vmem:[%s3016 + $0x18] sm:$0xff]
    %v3021 = vadd.f32 %v3017, %v2724
    %v3022 = vadd.f32 %v3018, %v2726
    %v3023 = vadd.f32 %v3019, %v2765
    %v3024 = vadd.f32 %v3020, %v2767
    %s3025 = smul.u32 7, 4
    %s3026 = smul.addr %s3025, 8
    %s3027 = scalar_lea.vmem [#allocation3], %s3026
    %v3028 = vld [vmem:[%s3027] sm:$0xff]
    %v3029 = vld [vmem:[%s3027 + $0x8] sm:$0xff]
    %v3030 = vld [vmem:[%s3027 + $0x10] sm:$0xff]
    %v3031 = vld [vmem:[%s3027 + $0x18] sm:$0xff]
    %v3032 = vadd.f32 %v3028, %v2967
    %v3033 = vadd.f32 %v3029, %v2969
    %v3034 = vadd.f32 %v3030, %v3008
    %v3035 = vadd.f32 %v3031, %v3010
    %v3036 = vxor.u32 %v3021, 2147483648
    %v3037 = vmul.f32 %v3036, 1.442695
    %v3038 = vpow.pop %v3037
    %v3039 = vadd.f32 %v3038, 1.0
    %v3040 = vrcp.pop %v3039
    %v3041 = vmul.f32 1.0, %v3040
    %v3042 = vxor.u32 %v3022, 2147483648
    %v3043 = vmul.f32 %v3042, 1.442695
    %v3044 = vpow.pop %v3043
    %v3045 = vadd.f32 %v3044, 1.0
    %v3046 = vrcp.pop %v3045
    %v3047 = vmul.f32 1.0, %v3046
    %v3048 = vtanh.pop %v3023
    %v3049 = vxor.u32 %v3024, 2147483648
    %v3050 = vmul.f32 %v3049, 1.442695
    %v3051 = vpow.pop %v3050
    %v3052 = vadd.f32 %v3051, 1.0
    %v3053 = vrcp.pop %v3052
    %v3054 = vmul.f32 1.0, %v3053
    %v3055 = vmul.f32 %v3047, %v2526
    %v3056 = vmul.f32 %v3041, %v3048
    %v3057 = vadd.f32 %v3055, %v3056
    %v3058 = vtanh.pop %v3057
    %v3059 = vmul.f32 %v3054, %v3058
    %v3060 = vxor.u32 %v3032, 2147483648
    %v3061 = vmul.f32 %v3060, 1.442695
    %v3062 = vpow.pop %v3061
    %v3063 = vadd.f32 %v3062, 1.0
    %v3064 = vrcp.pop %v3063
    %v3065 = vmul.f32 1.0, %v3064
    %v3066 = vxor.u32 %v3033, 2147483648
    %v3067 = vmul.f32 %v3066, 1.442695
    %v3068 = vpow.pop %v3067
    %v3069 = vadd.f32 %v3068, 1.0
    %v3070 = vrcp.pop %v3069
    %v3071 = vmul.f32 1.0, %v3070
    %v3072 = vtanh.pop %v3034
    %v3073 = vxor.u32 %v3035, 2147483648
    %v3074 = vmul.f32 %v3073, 1.442695
    %v3075 = vpow.pop %v3074
    %v3076 = vadd.f32 %v3075, 1.0
    %v3077 = vrcp.pop %v3076
    %v3078 = vmul.f32 1.0, %v3077
    %v3079 = vmul.f32 %v3071, %v2527
    %v3080 = vmul.f32 %v3065, %v3072
    %v3081 = vadd.f32 %v3079, %v3080
    %v3082 = vtanh.pop %v3081
    %v3083 = vmul.f32 %v3078, %v3082
    %v3084 = vld [vmem:[#allocation7] sm:$0xff]
    %s3085 = scalar_lea.vmem [#allocation7], 56
    %v3086 = vld [vmem:[%s3085] sm:$0xff]
    %3088 = vset.pattern.permute.xlu0 0
    %3089 = vperm.xlu0 %3088, %v3084
    %v3090 = vpop.permute.xlu0 %3089
    %v3092 = vmul.f32 %v3090, %v3059
    %3093 = vst [vmem:[#allocation18] sm:$0xff] %v3092
    %3095 = vset.pattern.permute.xlu0 0
    %3096 = vperm.xlu0 %3095, %v3086
    %v3097 = vpop.permute.xlu0 %3096
    %v3099 = vmul.f32 %v3097, %v3083
    %s3100 = scalar_lea.vmem [#allocation18], 112
    %3101 = vst [vmem:[%s3100 + $0x8] sm:$0xff] %v3099
    %v3102 = vsub.f32 %v3059, %v2524
    %v3103 = vmul.f32 %v3090, %v3102
    %v3104 = vadd.f32 %v2524, %v3103
    %v3105 = vsub.f32 %v3083, %v2525
    %v3106 = vmul.f32 %v3097, %v3105
    %v3107 = vadd.f32 %v2525, %v3106
    %v3108 = vsub.f32 %v3057, %v2526
    %v3109 = vmul.f32 %v3090, %v3108
    %v3110 = vadd.f32 %v2526, %v3109
    %v3111 = vsub.f32 %v3081, %v2527
    %v3112 = vmul.f32 %v3097, %v3111
    %v3113 = vadd.f32 %v2527, %v3112
    %v3114 = vpack.c.bf16 %v3104, %v3104
    %3115 = vmatprep.subr.bf16.mxu0 %v2626
    %3116 = vmatpush1.bf16.msra.mxu0 %v2625
    %3117 = vmatprep.subr.bf16.mxu0 %v2630
    %3118 = vmatpush1.bf16.msra.mxu0 %v2629
    %3119 = vmatprep.subr.bf16.mxu0 %v2634
    %3120 = vmatpush1.bf16.msra.mxu0 %v2633
    %3121 = vmatprep.subr.bf16.mxu0 %v2638
    %3122 = vmatpush1.bf16.msra.mxu0 %v2637
    %3123 = vmatprep.subr.bf16.mxu0 %v2642
    %3124 = vmatpush1.bf16.msra.mxu0 %v2641
    %3125 = vmatprep.subr.bf16.mxu0 %v2646
    %3126 = vmatpush1.bf16.msra.mxu0 %v2645
    %3127 = vmatprep.subr.bf16.mxu0 %v2650
    %3128 = vmatpush1.bf16.msra.mxu0 %v2649
    %3129 = vmatprep.subr.bf16.mxu0 %v2654
    %3130 = vmatpush1.bf16.msra.mxu0 %v2653
    %3131 = vmatprep.subr.bf16.mxu0 0
    %3132 = vmatpush1.bf16.msra.mxu0 0
    %3133 = vmatprep.subr.bf16.mxu0 0
    %3134 = vmatpush1.bf16.msra.mxu0 0
    %3135 = vmatprep.subr.bf16.mxu0 0
    %3136 = vmatpush1.bf16.msra.mxu0 0
    %3137 = vmatprep.subr.bf16.mxu0 0
    %3138 = vmatpush1.bf16.msra.mxu0 0
    %3139 = vmatprep.subr.bf16.mxu0 0
    %3140 = vmatpush1.bf16.msra.mxu0 0
    %3141 = vmatprep.subr.bf16.mxu0 0
    %3142 = vmatpush1.bf16.msra.mxu0 0
    %3143 = vmatprep.subr.bf16.mxu0 0
    %3144 = vmatpush1.bf16.msra.mxu0 0
    %3145 = vmatprep.subr.bf16.mxu0 0
    %3146 = vmatpush1.bf16.msra.mxu0 0
    %3147 = vmatprep.mubr.bf16.mxu0 0
    %3148 = vmatmul.mubr.bf16.gmra.mrb[0].mxu0 %v3114
    %v3149 = vpop.f32.mrb[0].mxu0
    %v3150 = vadd.f32 0.0, %v3149
    %v3151 = vpop.f32.mrb[0].mxu0
    %v3152 = vadd.f32 0.0, %v3151
    %v3153 = vpop.f32.mrb[0].mxu0
    %v3154 = vpop.f32.mrb[0].mxu0
    %3155 = vdwg.mxu0
    %3156 = vmatprep.subr.bf16.mxu0 %v2628
    %3157 = vmatpush1.bf16.msra.mxu0 %v2627
    %3158 = vmatprep.subr.bf16.mxu0 %v2632
    %3159 = vmatpush1.bf16.msra.mxu0 %v2631
    %3160 = vmatprep.subr.bf16.mxu0 %v2636
    %3161 = vmatpush1.bf16.msra.mxu0 %v2635
    %3162 = vmatprep.subr.bf16.mxu0 %v2640
    %3163 = vmatpush1.bf16.msra.mxu0 %v2639
    %3164 = vmatprep.subr.bf16.mxu0 %v2644
    %3165 = vmatpush1.bf16.msra.mxu0 %v2643
    %3166 = vmatprep.subr.bf16.mxu0 %v2648
    %3167 = vmatpush1.bf16.msra.mxu0 %v2647
    %3168 = vmatprep.subr.bf16.mxu0 %v2652
    %3169 = vmatpush1.bf16.msra.mxu0 %v2651
    %3170 = vmatprep.subr.bf16.mxu0 %v2656
    %3171 = vmatpush1.bf16.msra.mxu0 %v2655
    %3172 = vmatprep.subr.bf16.mxu0 0
    %3173 = vmatpush1.bf16.msra.mxu0 0
    %3174 = vmatprep.subr.bf16.mxu0 0
    %3175 = vmatpush1.bf16.msra.mxu0 0
    %3176 = vmatprep.subr.bf16.mxu0 0
    %3177 = vmatpush1.bf16.msra.mxu0 0
    %3178 = vmatprep.subr.bf16.mxu0 0
    %3179 = vmatpush1.bf16.msra.mxu0 0
    %3180 = vmatprep.subr.bf16.mxu0 0
    %3181 = vmatpush1.bf16.msra.mxu0 0
    %3182 = vmatprep.subr.bf16.mxu0 0
    %3183 = vmatpush1.bf16.msra.mxu0 0
    %3184 = vmatprep.subr.bf16.mxu0 0
    %3185 = vmatpush1.bf16.msra.mxu0 0
    %3186 = vmatprep.subr.bf16.mxu0 0
    %3187 = vmatpush1.bf16.msra.mxu0 0
    %3188 = vmatprep.mubr.bf16.mxu0 0
    %3189 = vmatmul.mubr.bf16.gmra.mrb[0].mxu0 %v3114
    %v3190 = vpop.f32.mrb[0].mxu0
    %v3191 = vadd.f32 0.0, %v3190
    %v3192 = vpop.f32.mrb[0].mxu0
    %v3193 = vadd.f32 0.0, %v3192
    %v3194 = vpop.f32.mrb[0].mxu0
    %v3195 = vpop.f32.mrb[0].mxu0
    %3196 = vdwg.mxu0
    %v3197 = vpack.c.bf16 %v3107, %v3107
    %3198 = vmatprep.subr.bf16.mxu0 %v2869
    %3199 = vmatpush1.bf16.msra.mxu0 %v2868
    %3200 = vmatprep.subr.bf16.mxu0 %v2873
    %3201 = vmatpush1.bf16.msra.mxu0 %v2872
    %3202 = vmatprep.subr.bf16.mxu0 %v2877
    %3203 = vmatpush1.bf16.msra.mxu0 %v2876
    %3204 = vmatprep.subr.bf16.mxu0 %v2881
    %3205 = vmatpush1.bf16.msra.mxu0 %v2880
    %3206 = vmatprep.subr.bf16.mxu0 %v2885
    %3207 = vmatpush1.bf16.msra.mxu0 %v2884
    %3208 = vmatprep.subr.bf16.mxu0 %v2889
    %3209 = vmatpush1.bf16.msra.mxu0 %v2888
    %3210 = vmatprep.subr.bf16.mxu0 %v2893
    %3211 = vmatpush1.bf16.msra.mxu0 %v2892
    %3212 = vmatprep.subr.bf16.mxu0 %v2897
    %3213 = vmatpush1.bf16.msra.mxu0 %v2896
    %3214 = vmatprep.subr.bf16.mxu0 0
    %3215 = vmatpush1.bf16.msra.mxu0 0
    %3216 = vmatprep.subr.bf16.mxu0 0
    %3217 = vmatpush1.bf16.msra.mxu0 0
    %3218 = vmatprep.subr.bf16.mxu0 0
    %3219 = vmatpush1.bf16.msra.mxu0 0
    %3220 = vmatprep.subr.bf16.mxu0 0
    %3221 = vmatpush1.bf16.msra.mxu0 0
    %3222 = vmatprep.subr.bf16.mxu0 0
    %3223 = vmatpush1.bf16.msra.mxu0 0
    %3224 = vmatprep.subr.bf16.mxu0 0
    %3225 = vmatpush1.bf16.msra.mxu0 0
    %3226 = vmatprep.subr.bf16.mxu0 0
    %3227 = vmatpush1.bf16.msra.mxu0 0
    %3228 = vmatprep.subr.bf16.mxu0 0
    %3229 = vmatpush1.bf16.msra.mxu0 0
    %3230 = vmatprep.mubr.bf16.mxu0 0
    %3231 = vmatmul.mubr.bf16.gmra.mrb[0].mxu0 %v3197
    %v3232 = vpop.f32.mrb[0].mxu0
    %v3233 = vadd.f32 0.0, %v3232
    %v3234 = vpop.f32.mrb[0].mxu0
    %v3235 = vadd.f32 0.0, %v3234
    %v3236 = vpop.f32.mrb[0].mxu0
    %v3237 = vpop.f32.mrb[0].mxu0
    %3238 = vdwg.mxu0
    %3239 = vmatprep.subr.bf16.mxu0 %v2871
    %3240 = vmatpush1.bf16.msra.mxu0 %v2870
    %3241 = vmatprep.subr.bf16.mxu0 %v2875
    %3242 = vmatpush1.bf16.msra.mxu0 %v2874
    %3243 = vmatprep.subr.bf16.mxu0 %v2879
    %3244 = vmatpush1.bf16.msra.mxu0 %v2878
    %3245 = vmatprep.subr.bf16.mxu0 %v2883
    %3246 = vmatpush1.bf16.msra.mxu0 %v2882
    %3247 = vmatprep.subr.bf16.mxu0 %v2887
    %3248 = vmatpush1.bf16.msra.mxu0 %v2886
    %3249 = vmatprep.subr.bf16.mxu0 %v2891
    %3250 = vmatpush1.bf16.msra.mxu0 %v2890
    %3251 = vmatprep.subr.bf16.mxu0 %v2895
    %3252 = vmatpush1.bf16.msra.mxu0 %v2894
    %3253 = vmatprep.subr.bf16.mxu0 %v2899
    %3254 = vmatpush1.bf16.msra.mxu0 %v2898
    %3255 = vmatprep.subr.bf16.mxu0 0
    %3256 = vmatpush1.bf16.msra.mxu0 0
    %3257 = vmatprep.subr.bf16.mxu0 0
    %3258 = vmatpush1.bf16.msra.mxu0 0
    %3259 = vmatprep.subr.bf16.mxu0 0
    %3260 = vmatpush1.bf16.msra.mxu0 0
    %3261 = vmatprep.subr.bf16.mxu0 0
    %3262 = vmatpush1.bf16.msra.mxu0 0
    %3263 = vmatprep.subr.bf16.mxu0 0
    %3264 = vmatpush1.bf16.msra.mxu0 0
    %3265 = vmatprep.subr.bf16.mxu0 0
    %3266 = vmatpush1.bf16.msra.mxu0 0
    %3267 = vmatprep.subr.bf16.mxu0 0
    %3268 = vmatpush1.bf16.msra.mxu0 0
    %3269 = vmatprep.subr.bf16.mxu0 0
    %3270 = vmatpush1.bf16.msra.mxu0 0
    %3271 = vmatprep.mubr.bf16.mxu0 0
    %3272 = vmatmul.mubr.bf16.gmra.mrb[0].mxu0 %v3197
    %v3273 = vpop.f32.mrb[0].mxu0
    %v3274 = vadd.f32 0.0, %v3273
    %v3275 = vpop.f32.mrb[0].mxu0
    %v3276 = vadd.f32 0.0, %v3275
    %v3277 = vpop.f32.mrb[0].mxu0
    %v3278 = vpop.f32.mrb[0].mxu0
    %3279 = vdwg.mxu0
    %s3280 = smul.u32 1, 4
    %s3281 = smul.addr %s3280, 8
    %s3282 = scalar_lea.vmem [#allocation2], %s3281
    %v3283 = vld [vmem:[%s3282] sm:$0xff]
    %v3284 = vld [vmem:[%s3282 + $0x8] sm:$0xff]
    %v3285 = vld [vmem:[%s3282 + $0x10] sm:$0xff]
    %v3286 = vld [vmem:[%s3282 + $0x18] sm:$0xff]
    %v3287 = vadd.f32 %v3283, %v3150
    %v3288 = vadd.f32 %v3284, %v3152
    %v3289 = vadd.f32 %v3285, %v3191
    %v3290 = vadd.f32 %v3286, %v3193
    %s3291 = smul.u32 6, 4
    %s3292 = smul.addr %s3291, 8
    %s3293 = scalar_lea.vmem [#allocation3], %s3292
    %v3294 = vld [vmem:[%s3293] sm:$0xff]
    %v3295 = vld [vmem:[%s3293 + $0x8] sm:$0xff]
    %v3296 = vld [vmem:[%s3293 + $0x10] sm:$0xff]
    %v3297 = vld [vmem:[%s3293 + $0x18] sm:$0xff]
    %v3298 = vadd.f32 %v3294, %v3233
    %v3299 = vadd.f32 %v3295, %v3235
    %v3300 = vadd.f32 %v3296, %v3274
    %v3301 = vadd.f32 %v3297, %v3276
    %v3302 = vxor.u32 %v3287, 2147483648
    %v3303 = vmul.f32 %v3302, 1.442695
    %v3304 = vpow.pop %v3303
    %v3305 = vadd.f32 %v3304, 1.0
    %v3306 = vrcp.pop %v3305
    %v3307 = vmul.f32 1.0, %v3306
    %v3308 = vxor.u32 %v3288, 2147483648
    %v3309 = vmul.f32 %v3308, 1.442695
    %v3310 = vpow.pop %v3309
    %v3311 = vadd.f32 %v3310, 1.0
    %v3312 = vrcp.pop %v3311
    %v3313 = vmul.f32 1.0, %v3312
    %v3314 = vtanh.pop %v3289
    %v3315 = vxor.u32 %v3290, 2147483648
    %v3316 = vmul.f32 %v3315, 1.442695
    %v3317 = vpow.pop %v3316
    %v3318 = vadd.f32 %v3317, 1.0
    %v3319 = vrcp.pop %v3318
    %v3320 = vmul.f32 1.0, %v3319
    %v3321 = vmul.f32 %v3313, %v3110
    %v3322 = vmul.f32 %v3307, %v3314
    %v3323 = vadd.f32 %v3321, %v3322
    %v3324 = vtanh.pop %v3323
    %v3325 = vmul.f32 %v3320, %v3324
    %v3326 = vxor.u32 %v3298, 2147483648
    %v3327 = vmul.f32 %v3326, 1.442695
    %v3328 = vpow.pop %v3327
    %v3329 = vadd.f32 %v3328, 1.0
    %v3330 = vrcp.pop %v3329
    %v3331 = vmul.f32 1.0, %v3330
    %v3332 = vxor.u32 %v3299, 2147483648
    %v3333 = vmul.f32 %v3332, 1.442695
    %v3334 = vpow.pop %v3333
    %v3335 = vadd.f32 %v3334, 1.0
    %v3336 = vrcp.pop %v3335
    %v3337 = vmul.f32 1.0, %v3336
    %v3338 = vtanh.pop %v3300
    %v3339 = vxor.u32 %v3301, 2147483648
    %v3340 = vmul.f32 %v3339, 1.442695
    %v3341 = vpow.pop %v3340
    %v3342 = vadd.f32 %v3341, 1.0
    %v3343 = vrcp.pop %v3342
    %v3344 = vmul.f32 1.0, %v3343
    %v3345 = vmul.f32 %v3337, %v3113
    %v3346 = vmul.f32 %v3331, %v3338
    %v3347 = vadd.f32 %v3345, %v3346
    %v3348 = vtanh.pop %v3347
    %v3349 = vmul.f32 %v3344, %v3348
    %s3350 = scalar_lea.vmem [#allocation7], 8
    %v3351 = vld [vmem:[%s3350] sm:$0xff]
    %s3352 = scalar_lea.vmem [#allocation7], 48
    %v3353 = vld [vmem:[%s3352] sm:$0xff]
    %3355 = vset.pattern.permute.xlu0 0
    %3356 = vperm.xlu0 %3355, %v3351
    %v3357 = vpop.permute.xlu0 %3356
    %v3359 = vmul.f32 %v3357, %v3325
    %s3360 = scalar_lea.vmem [#allocation18], 16
    %3361 = vst [vmem:[%s3360] sm:$0xff] %v3359
    %3363 = vset.pattern.permute.xlu0 0
    %3364 = vperm.xlu0 %3363, %v3353
    %v3365 = vpop.permute.xlu0 %3364
    %v3367 = vmul.f32 %v3365, %v3349
    %s3368 = scalar_lea.vmem [#allocation18], 96
    %3369 = vst [vmem:[%s3368 + $0x8] sm:$0xff] %v3367
    %v3370 = vsub.f32 %v3325, %v3104
    %v3371 = vmul.f32 %v3357, %v3370
    %v3372 = vadd.f32 %v3104, %v3371
    %v3373 = vsub.f32 %v3349, %v3107
    %v3374 = vmul.f32 %v3365, %v3373
    %v3375 = vadd.f32 %v3107, %v3374
    %v3376 = vsub.f32 %v3323, %v3110
    %v3377 = vmul.f32 %v3357, %v3376
    %v3378 = vadd.f32 %v3110, %v3377
    %v3379 = vsub.f32 %v3347, %v3113
    %v3380 = vmul.f32 %v3365, %v3379
    %v3381 = vadd.f32 %v3113, %v3380
    %v3382 = vpack.c.bf16 %v3372, %v3372
    %3383 = vmatprep.subr.bf16.mxu0 %v2626
    %3384 = vmatpush1.bf16.msra.mxu0 %v2625
    %3385 = vmatprep.subr.bf16.mxu0 %v2630
    %3386 = vmatpush1.bf16.msra.mxu0 %v2629
    %3387 = vmatprep.subr.bf16.mxu0 %v2634
    %3388 = vmatpush1.bf16.msra.mxu0 %v2633
    %3389 = vmatprep.subr.bf16.mxu0 %v2638
    %3390 = vmatpush1.bf16.msra.mxu0 %v2637
    %3391 = vmatprep.subr.bf16.mxu0 %v2642
    %3392 = vmatpush1.bf16.msra.mxu0 %v2641
    %3393 = vmatprep.subr.bf16.mxu0 %v2646
    %3394 = vmatpush1.bf16.msra.mxu0 %v2645
    %3395 = vmatprep.subr.bf16.mxu0 %v2650
    %3396 = vmatpush1.bf16.msra.mxu0 %v2649
    %3397 = vmatprep.subr.bf16.mxu0 %v2654
    %3398 = vmatpush1.bf16.msra.mxu0 %v2653
    %3399 = vmatprep.subr.bf16.mxu0 0
    %3400 = vmatpush1.bf16.msra.mxu0 0
    %3401 = vmatprep.subr.bf16.mxu0 0
    %3402 = vmatpush1.bf16.msra.mxu0 0
    %3403 = vmatprep.subr.bf16.mxu0 0
    %3404 = vmatpush1.bf16.msra.mxu0 0
    %3405 = vmatprep.subr.bf16.mxu0 0
    %3406 = vmatpush1.bf16.msra.mxu0 0
    %3407 = vmatprep.subr.bf16.mxu0 0
    %3408 = vmatpush1.bf16.msra.mxu0 0
    %3409 = vmatprep.subr.bf16.mxu0 0
    %3410 = vmatpush1.bf16.msra.mxu0 0
    %3411 = vmatprep.subr.bf16.mxu0 0
    %3412 = vmatpush1.bf16.msra.mxu0 0
    %3413 = vmatprep.subr.bf16.mxu0 0
    %3414 = vmatpush1.bf16.msra.mxu0 0
    %3415 = vmatprep.mubr.bf16.mxu0 0
    %3416 = vmatmul.mubr.bf16.gmra.mrb[0].mxu0 %v3382
    %v3417 = vpop.f32.mrb[0].mxu0
    %v3418 = vadd.f32 0.0, %v3417
    %v3419 = vpop.f32.mrb[0].mxu0
    %v3420 = vadd.f32 0.0, %v3419
    %v3421 = vpop.f32.mrb[0].mxu0
    %v3422 = vpop.f32.mrb[0].mxu0
    %3423 = vdwg.mxu0
    %3424 = vmatprep.subr.bf16.mxu0 %v2628
    %3425 = vmatpush1.bf16.msra.mxu0 %v2627
    %3426 = vmatprep.subr.bf16.mxu0 %v2632
    %3427 = vmatpush1.bf16.msra.mxu0 %v2631
    %3428 = vmatprep.subr.bf16.mxu0 %v2636
    %3429 = vmatpush1.bf16.msra.mxu0 %v2635
    %3430 = vmatprep.subr.bf16.mxu0 %v2640
    %3431 = vmatpush1.bf16.msra.mxu0 %v2639
    %3432 = vmatprep.subr.bf16.mxu0 %v2644
    %3433 = vmatpush1.bf16.msra.mxu0 %v2643
    %3434 = vmatprep.subr.bf16.mxu0 %v2648
    %3435 = vmatpush1.bf16.msra.mxu0 %v2647
    %3436 = vmatprep.subr.bf16.mxu0 %v2652
    %3437 = vmatpush1.bf16.msra.mxu0 %v2651
    %3438 = vmatprep.subr.bf16.mxu0 %v2656
    %3439 = vmatpush1.bf16.msra.mxu0 %v2655
    %3440 = vmatprep.subr.bf16.mxu0 0
    %3441 = vmatpush1.bf16.msra.mxu0 0
    %3442 = vmatprep.subr.bf16.mxu0 0
    %3443 = vmatpush1.bf16.msra.mxu0 0
    %3444 = vmatprep.subr.bf16.mxu0 0
    %3445 = vmatpush1.bf16.msra.mxu0 0
    %3446 = vmatprep.subr.bf16.mxu0 0
    %3447 = vmatpush1.bf16.msra.mxu0 0
    %3448 = vmatprep.subr.bf16.mxu0 0
    %3449 = vmatpush1.bf16.msra.mxu0 0
    %3450 = vmatprep.subr.bf16.mxu0 0
    %3451 = vmatpush1.bf16.msra.mxu0 0
    %3452 = vmatprep.subr.bf16.mxu0 0
    %3453 = vmatpush1.bf16.msra.mxu0 0
    %3454 = vmatprep.subr.bf16.mxu0 0
    %3455 = vmatpush1.bf16.msra.mxu0 0
    %3456 = vmatprep.mubr.bf16.mxu0 0
    %3457 = vmatmul.mubr.bf16.gmra.mrb[0].mxu0 %v3382
    %v3458 = vpop.f32.mrb[0].mxu0
    %v3459 = vadd.f32 0.0, %v3458
    %v3460 = vpop.f32.mrb[0].mxu0
    %v3461 = vadd.f32 0.0, %v3460
    %v3462 = vpop.f32.mrb[0].mxu0
    %v3463 = vpop.f32.mrb[0].mxu0
    %3464 = vdwg.mxu0
    %v3465 = vpack.c.bf16 %v3375, %v3375
    %3466 = vmatprep.subr.bf16.mxu0 %v2869
    %3467 = vmatpush1.bf16.msra.mxu0 %v2868
    %3468 = vmatprep.subr.bf16.mxu0 %v2873
    %3469 = vmatpush1.bf16.msra.mxu0 %v2872
    %3470 = vmatprep.subr.bf16.mxu0 %v2877
    %3471 = vmatpush1.bf16.msra.mxu0 %v2876
    %3472 = vmatprep.subr.bf16.mxu0 %v2881
    %3473 = vmatpush1.bf16.msra.mxu0 %v2880
    %3474 = vmatprep.subr.bf16.mxu0 %v2885
    %3475 = vmatpush1.bf16.msra.mxu0 %v2884
    %3476 = vmatprep.subr.bf16.mxu0 %v2889
    %3477 = vmatpush1.bf16.msra.mxu0 %v2888
    %3478 = vmatprep.subr.bf16.mxu0 %v2893
    %3479 = vmatpush1.bf16.msra.mxu0 %v2892
    %3480 = vmatprep.subr.bf16.mxu0 %v2897
    %3481 = vmatpush1.bf16.msra.mxu0 %v2896
    %3482 = vmatprep.subr.bf16.mxu0 0
    %3483 = vmatpush1.bf16.msra.mxu0 0
    %3484 = vmatprep.subr.bf16.mxu0 0
    %3485 = vmatpush1.bf16.msra.mxu0 0
    %3486 = vmatprep.subr.bf16.mxu0 0
    %3487 = vmatpush1.bf16.msra.mxu0 0
    %3488 = vmatprep.subr.bf16.mxu0 0
    %3489 = vmatpush1.bf16.msra.mxu0 0
    %3490 = vmatprep.subr.bf16.mxu0 0
    %3491 = vmatpush1.bf16.msra.mxu0 0
    %3492 = vmatprep.subr.bf16.mxu0 0
    %3493 = vmatpush1.bf16.msra.mxu0 0
    %3494 = vmatprep.subr.bf16.mxu0 0
    %3495 = vmatpush1.bf16.msra.mxu0 0
    %3496 = vmatprep.subr.bf16.mxu0 0
    %3497 = vmatpush1.bf16.msra.mxu0 0
    %3498 = vmatprep.mubr.bf16.mxu0 0
    %3499 = vmatmul.mubr.bf16.gmra.mrb[0].mxu0 %v3465
    %v3500 = vpop.f32.mrb[0].mxu0
    %v3501 = vadd.f32 0.0, %v3500
    %v3502 = vpop.f32.mrb[0].mxu0
    %v3503 = vadd.f32 0.0, %v3502
    %v3504 = vpop.f32.mrb[0].mxu0
    %v3505 = vpop.f32.mrb[0].mxu0
    %3506 = vdwg.mxu0
    %3507 = vmatprep.subr.bf16.mxu0 %v2871
    %3508 = vmatpush1.bf16.msra.mxu0 %v2870
    %3509 = vmatprep.subr.bf16.mxu0 %v2875
    %3510 = vmatpush1.bf16.msra.mxu0 %v2874
    %3511 = vmatprep.subr.bf16.mxu0 %v2879
    %3512 = vmatpush1.bf16.msra.mxu0 %v2878
    %3513 = vmatprep.subr.bf16.mxu0 %v2883
    %3514 = vmatpush1.bf16.msra.mxu0 %v2882
    %3515 = vmatprep.subr.bf16.mxu0 %v2887
    %3516 = vmatpush1.bf16.msra.mxu0 %v2886
    %3517 = vmatprep.subr.bf16.mxu0 %v2891
    %3518 = vmatpush1.bf16.msra.mxu0 %v2890
    %3519 = vmatprep.subr.bf16.mxu0 %v2895
    %3520 = vmatpush1.bf16.msra.mxu0 %v2894
    %3521 = vmatprep.subr.bf16.mxu0 %v2899
    %3522 = vmatpush1.bf16.msra.mxu0 %v2898
    %3523 = vmatprep.subr.bf16.mxu0 0
    %3524 = vmatpush1.bf16.msra.mxu0 0
    %3525 = vmatprep.subr.bf16.mxu0 0
    %3526 = vmatpush1.bf16.msra.mxu0 0
    %3527 = vmatprep.subr.bf16.mxu0 0
    %3528 = vmatpush1.bf16.msra.mxu0 0
    %3529 = vmatprep.subr.bf16.mxu0 0
    %3530 = vmatpush1.bf16.msra.mxu0 0
    %3531 = vmatprep.subr.bf16.mxu0 0
    %3532 = vmatpush1.bf16.msra.mxu0 0
    %3533 = vmatprep.subr.bf16.mxu0 0
    %3534 = vmatpush1.bf16.msra.mxu0 0
    %3535 = vmatprep.subr.bf16.mxu0 0
    %3536 = vmatpush1.bf16.msra.mxu0 0
    %3537 = vmatprep.subr.bf16.mxu0 0
    %3538 = vmatpush1.bf16.msra.mxu0 0
    %3539 = vmatprep.mubr.bf16.mxu0 0
    %3540 = vmatmul.mubr.bf16.gmra.mrb[0].mxu0 %v3465
    %v3541 = vpop.f32.mrb[0].mxu0
    %v3542 = vadd.f32 0.0, %v3541
    %v3543 = vpop.f32.mrb[0].mxu0
    %v3544 = vadd.f32 0.0, %v3543
    %v3545 = vpop.f32.mrb[0].mxu0
    %v3546 = vpop.f32.mrb[0].mxu0
    %3547 = vdwg.mxu0
    %s3548 = smul.u32 2, 4
    %s3549 = smul.addr %s3548, 8
    %s3550 = scalar_lea.vmem [#allocation2], %s3549
    %v3551 = vld [vmem:[%s3550] sm:$0xff]
    %v3552 = vld [vmem:[%s3550 + $0x8] sm:$0xff]
    %v3553 = vld [vmem:[%s3550 + $0x10] sm:$0xff]
    %v3554 = vld [vmem:[%s3550 + $0x18] sm:$0xff]
    %v3555 = vadd.f32 %v3551, %v3418
    %v3556 = vadd.f32 %v3552, %v3420
    %v3557 = vadd.f32 %v3553, %v3459
    %v3558 = vadd.f32 %v3554, %v3461
    %s3559 = smul.u32 5, 4
    %s3560 = smul.addr %s3559, 8
    %s3561 = scalar_lea.vmem [#allocation3], %s3560
    %v3562 = vld [vmem:[%s3561] sm:$0xff]
    %v3563 = vld [vmem:[%s3561 + $0x8] sm:$0xff]
    %v3564 = vld [vmem:[%s3561 + $0x10] sm:$0xff]
    %v3565 = vld [vmem:[%s3561 + $0x18] sm:$0xff]
    %v3566 = vadd.f32 %v3562, %v3501
    %v3567 = vadd.f32 %v3563, %v3503
    %v3568 = vadd.f32 %v3564, %v3542
    %v3569 = vadd.f32 %v3565, %v3544
    %v3570 = vxor.u32 %v3555, 2147483648
    %v3571 = vmul.f32 %v3570, 1.442695
    %v3572 = vpow.pop %v3571
    %v3573 = vadd.f32 %v3572, 1.0
    %v3574 = vrcp.pop %v3573
    %v3575 = vmul.f32 1.0, %v3574
    %v3576 = vxor.u32 %v3556, 2147483648
    %v3577 = vmul.f32 %v3576, 1.442695
    %v3578 = vpow.pop %v3577
    %v3579 = vadd.f32 %v3578, 1.0
    %v3580 = vrcp.pop %v3579
    %v3581 = vmul.f32 1.0, %v3580
    %v3582 = vtanh.pop %v3557
    %v3583 = vxor.u32 %v3558, 2147483648
    %v3584 = vmul.f32 %v3583, 1.442695
    %v3585 = vpow.pop %v3584
    %v3586 = vadd.f32 %v3585, 1.0
    %v3587 = vrcp.pop %v3586
    %v3588 = vmul.f32 1.0, %v3587
    %v3589 = vmul.f32 %v3581, %v3378
    %v3590 = vmul.f32 %v3575, %v3582
    %v3591 = vadd.f32 %v3589, %v3590
    %v3592 = vtanh.pop %v3591
    %v3593 = vmul.f32 %v3588, %v3592
    %v3594 = vxor.u32 %v3566, 2147483648
    %v3595 = vmul.f32 %v3594, 1.442695
    %v3596 = vpow.pop %v3595
    %v3597 = vadd.f32 %v3596, 1.0
    %v3598 = vrcp.pop %v3597
    %v3599 = vmul.f32 1.0, %v3598
    %v3600 = vxor.u32 %v3567, 2147483648
    %v3601 = vmul.f32 %v3600, 1.442695
    %v3602 = vpow.pop %v3601
    %v3603 = vadd.f32 %v3602, 1.0
    %v3604 = vrcp.pop %v3603
    %v3605 = vmul.f32 1.0, %v3604
    %v3606 = vtanh.pop %v3568
    %v3607 = vxor.u32 %v3569, 2147483648
    %v3608 = vmul.f32 %v3607, 1.442695
    %v3609 = vpow.pop %v3608
    %v3610 = vadd.f32 %v3609, 1.0
    %v3611 = vrcp.pop %v3610
    %v3612 = vmul.f32 1.0, %v3611
    %v3613 = vmul.f32 %v3605, %v3381
    %v3614 = vmul.f32 %v3599, %v3606
    %v3615 = vadd.f32 %v3613, %v3614
    %v3616 = vtanh.pop %v3615
    %v3617 = vmul.f32 %v3612, %v3616
    %s3618 = scalar_lea.vmem [#allocation7], 16
    %v3619 = vld [vmem:[%s3618] sm:$0xff]
    %s3620 = scalar_lea.vmem [#allocation7], 40
    %v3621 = vld [vmem:[%s3620] sm:$0xff]
    %3623 = vset.pattern.permute.xlu0 0
    %3624 = vperm.xlu0 %3623, %v3619
    %v3625 = vpop.permute.xlu0 %3624
    %v3627 = vmul.f32 %v3625, %v3593
    %s3628 = scalar_lea.vmem [#allocation18], 32
    %3629 = vst [vmem:[%s3628] sm:$0xff] %v3627
    %3631 = vset.pattern.permute.xlu0 0
    %3632 = vperm.xlu0 %3631, %v3621
    %v3633 = vpop.permute.xlu0 %3632
    %v3635 = vmul.f32 %v3633, %v3617
    %s3636 = scalar_lea.vmem [#allocation18], 80
    %3637 = vst [vmem:[%s3636 + $0x8] sm:$0xff] %v3635
    %v3638 = vsub.f32 %v3593, %v3372
    %v3639 = vmul.f32 %v3625, %v3638
    %v3640 = vadd.f32 %v3372, %v3639
    %v3641 = vsub.f32 %v3617, %v3375
    %v3642 = vmul.f32 %v3633, %v3641
    %v3643 = vadd.f32 %v3375, %v3642
    %v3644 = vsub.f32 %v3591, %v3378
    %v3645 = vmul.f32 %v3625, %v3644
    %v3646 = vadd.f32 %v3378, %v3645
    %v3647 = vsub.f32 %v3615, %v3381
    %v3648 = vmul.f32 %v3633, %v3647
    %v3649 = vadd.f32 %v3381, %v3648
    %v3650 = vpack.c.bf16 %v3640, %v3640
    %3651 = vmatprep.subr.bf16.mxu0 %v2626
    %3652 = vmatpush1.bf16.msra.mxu0 %v2625
    %3653 = vmatprep.subr.bf16.mxu0 %v2630
    %3654 = vmatpush1.bf16.msra.mxu0 %v2629
    %3655 = vmatprep.subr.bf16.mxu0 %v2634
    %3656 = vmatpush1.bf16.msra.mxu0 %v2633
    %3657 = vmatprep.subr.bf16.mxu0 %v2638
    %3658 = vmatpush1.bf16.msra.mxu0 %v2637
    %3659 = vmatprep.subr.bf16.mxu0 %v2642
    %3660 = vmatpush1.bf16.msra.mxu0 %v2641
    %3661 = vmatprep.subr.bf16.mxu0 %v2646
    %3662 = vmatpush1.bf16.msra.mxu0 %v2645
    %3663 = vmatprep.subr.bf16.mxu0 %v2650
    %3664 = vmatpush1.bf16.msra.mxu0 %v2649
    %3665 = vmatprep.subr.bf16.mxu0 %v2654
    %3666 = vmatpush1.bf16.msra.mxu0 %v2653
    %3667 = vmatprep.subr.bf16.mxu0 0
    %3668 = vmatpush1.bf16.msra.mxu0 0
    %3669 = vmatprep.subr.bf16.mxu0 0
    %3670 = vmatpush1.bf16.msra.mxu0 0
    %3671 = vmatprep.subr.bf16.mxu0 0
    %3672 = vmatpush1.bf16.msra.mxu0 0
    %3673 = vmatprep.subr.bf16.mxu0 0
    %3674 = vmatpush1.bf16.msra.mxu0 0
    %3675 = vmatprep.subr.bf16.mxu0 0
    %3676 = vmatpush1.bf16.msra.mxu0 0
    %3677 = vmatprep.subr.bf16.mxu0 0
    %3678 = vmatpush1.bf16.msra.mxu0 0
    %3679 = vmatprep.subr.bf16.mxu0 0
    %3680 = vmatpush1.bf16.msra.mxu0 0
    %3681 = vmatprep.subr.bf16.mxu0 0
    %3682 = vmatpush1.bf16.msra.mxu0 0
    %3683 = vmatprep.mubr.bf16.mxu0 0
    %3684 = vmatmul.mubr.bf16.gmra.mrb[0].mxu0 %v3650
    %v3685 = vpop.f32.mrb[0].mxu0
    %v3686 = vadd.f32 0.0, %v3685
    %v3687 = vpop.f32.mrb[0].mxu0
    %v3688 = vadd.f32 0.0, %v3687
    %v3689 = vpop.f32.mrb[0].mxu0
    %v3690 = vpop.f32.mrb[0].mxu0
    %3691 = vdwg.mxu0
    %3692 = vmatprep.subr.bf16.mxu0 %v2628
    %3693 = vmatpush1.bf16.msra.mxu0 %v2627
    %3694 = vmatprep.subr.bf16.mxu0 %v2632
    %3695 = vmatpush1.bf16.msra.mxu0 %v2631
    %3696 = vmatprep.subr.bf16.mxu0 %v2636
    %3697 = vmatpush1.bf16.msra.mxu0 %v2635
    %3698 = vmatprep.subr.bf16.mxu0 %v2640
    %3699 = vmatpush1.bf16.msra.mxu0 %v2639
    %3700 = vmatprep.subr.bf16.mxu0 %v2644
    %3701 = vmatpush1.bf16.msra.mxu0 %v2643
    %3702 = vmatprep.subr.bf16.mxu0 %v2648
    %3703 = vmatpush1.bf16.msra.mxu0 %v2647
    %3704 = vmatprep.subr.bf16.mxu0 %v2652
    %3705 = vmatpush1.bf16.msra.mxu0 %v2651
    %3706 = vmatprep.subr.bf16.mxu0 %v2656
    %3707 = vmatpush1.bf16.msra.mxu0 %v2655
    %3708 = vmatprep.subr.bf16.mxu0 0
    %3709 = vmatpush1.bf16.msra.mxu0 0
    %3710 = vmatprep.subr.bf16.mxu0 0
    %3711 = vmatpush1.bf16.msra.mxu0 0
    %3712 = vmatprep.subr.bf16.mxu0 0
    %3713 = vmatpush1.bf16.msra.mxu0 0
    %3714 = vmatprep.subr.bf16.mxu0 0
    %3715 = vmatpush1.bf16.msra.mxu0 0
    %3716 = vmatprep.subr.bf16.mxu0 0
    %3717 = vmatpush1.bf16.msra.mxu0 0
    %3718 = vmatprep.subr.bf16.mxu0 0
    %3719 = vmatpush1.bf16.msra.mxu0 0
    %3720 = vmatprep.subr.bf16.mxu0 0
    %3721 = vmatpush1.bf16.msra.mxu0 0
    %3722 = vmatprep.subr.bf16.mxu0 0
    %3723 = vmatpush1.bf16.msra.mxu0 0
    %3724 = vmatprep.mubr.bf16.mxu0 0
    %3725 = vmatmul.mubr.bf16.gmra.mrb[0].mxu0 %v3650
    %v3726 = vpop.f32.mrb[0].mxu0
    %v3727 = vadd.f32 0.0, %v3726
    %v3728 = vpop.f32.mrb[0].mxu0
    %v3729 = vadd.f32 0.0, %v3728
    %v3730 = vpop.f32.mrb[0].mxu0
    %v3731 = vpop.f32.mrb[0].mxu0
    %3732 = vdwg.mxu0
    %v3733 = vpack.c.bf16 %v3643, %v3643
    %3734 = vmatprep.subr.bf16.mxu0 %v2869
    %3735 = vmatpush1.bf16.msra.mxu0 %v2868
    %3736 = vmatprep.subr.bf16.mxu0 %v2873
    %3737 = vmatpush1.bf16.msra.mxu0 %v2872
    %3738 = vmatprep.subr.bf16.mxu0 %v2877
    %3739 = vmatpush1.bf16.msra.mxu0 %v2876
    %3740 = vmatprep.subr.bf16.mxu0 %v2881
    %3741 = vmatpush1.bf16.msra.mxu0 %v2880
    %3742 = vmatprep.subr.bf16.mxu0 %v2885
    %3743 = vmatpush1.bf16.msra.mxu0 %v2884
    %3744 = vmatprep.subr.bf16.mxu0 %v2889
    %3745 = vmatpush1.bf16.msra.mxu0 %v2888
    %3746 = vmatprep.subr.bf16.mxu0 %v2893
    %3747 = vmatpush1.bf16.msra.mxu0 %v2892
    %3748 = vmatprep.subr.bf16.mxu0 %v2897
    %3749 = vmatpush1.bf16.msra.mxu0 %v2896
    %3750 = vmatprep.subr.bf16.mxu0 0
    %3751 = vmatpush1.bf16.msra.mxu0 0
    %3752 = vmatprep.subr.bf16.mxu0 0
    %3753 = vmatpush1.bf16.msra.mxu0 0
    %3754 = vmatprep.subr.bf16.mxu0 0
    %3755 = vmatpush1.bf16.msra.mxu0 0
    %3756 = vmatprep.subr.bf16.mxu0 0
    %3757 = vmatpush1.bf16.msra.mxu0 0
    %3758 = vmatprep.subr.bf16.mxu0 0
    %3759 = vmatpush1.bf16.msra.mxu0 0
    %3760 = vmatprep.subr.bf16.mxu0 0
    %3761 = vmatpush1.bf16.msra.mxu0 0
    %3762 = vmatprep.subr.bf16.mxu0 0
    %3763 = vmatpush1.bf16.msra.mxu0 0
    %3764 = vmatprep.subr.bf16.mxu0 0
    %3765 = vmatpush1.bf16.msra.mxu0 0
    %3766 = vmatprep.mubr.bf16.mxu0 0
    %3767 = vmatmul.mubr.bf16.gmra.mrb[0].mxu0 %v3733
    %v3768 = vpop.f32.mrb[0].mxu0
    %v3769 = vadd.f32 0.0, %v3768
    %v3770 = vpop.f32.mrb[0].mxu0
    %v3771 = vadd.f32 0.0, %v3770
    %v3772 = vpop.f32.mrb[0].mxu0
    %v3773 = vpop.f32.mrb[0].mxu0
    %3774 = vdwg.mxu0
    %3775 = vmatprep.subr.bf16.mxu0 %v2871
    %3776 = vmatpush1.bf16.msra.mxu0 %v2870
    %3777 = vmatprep.subr.bf16.mxu0 %v2875
    %3778 = vmatpush1.bf16.msra.mxu0 %v2874
    %3779 = vmatprep.subr.bf16.mxu0 %v2879
    %3780 = vmatpush1.bf16.msra.mxu0 %v2878
    %3781 = vmatprep.subr.bf16.mxu0 %v2883
    %3782 = vmatpush1.bf16.msra.mxu0 %v2882
    %3783 = vmatprep.subr.bf16.mxu0 %v2887
    %3784 = vmatpush1.bf16.msra.mxu0 %v2886
    %3785 = vmatprep.subr.bf16.mxu0 %v2891
    %3786 = vmatpush1.bf16.msra.mxu0 %v2890
    %3787 = vmatprep.subr.bf16.mxu0 %v2895
    %3788 = vmatpush1.bf16.msra.mxu0 %v2894
    %3789 = vmatprep.subr.bf16.mxu0 %v2899
    %3790 = vmatpush1.bf16.msra.mxu0 %v2898
    %3791 = vmatprep.subr.bf16.mxu0 0
    %3792 = vmatpush1.bf16.msra.mxu0 0
    %3793 = vmatprep.subr.bf16.mxu0 0
    %3794 = vmatpush1.bf16.msra.mxu0 0
    %3795 = vmatprep.subr.bf16.mxu0 0
    %3796 = vmatpush1.bf16.msra.mxu0 0
    %3797 = vmatprep.subr.bf16.mxu0 0
    %3798 = vmatpush1.bf16.msra.mxu0 0
    %3799 = vmatprep.subr.bf16.mxu0 0
    %3800 = vmatpush1.bf16.msra.mxu0 0
    %3801 = vmatprep.subr.bf16.mxu0 0
    %3802 = vmatpush1.bf16.msra.mxu0 0
    %3803 = vmatprep.subr.bf16.mxu0 0
    %3804 = vmatpush1.bf16.msra.mxu0 0
    %3805 = vmatprep.subr.bf16.mxu0 0
    %3806 = vmatpush1.bf16.msra.mxu0 0
    %3807 = vmatprep.mubr.bf16.mxu0 0
    %3808 = vmatmul.mubr.bf16.gmra.mrb[0].mxu0 %v3733
    %v3809 = vpop.f32.mrb[0].mxu0
    %v3810 = vadd.f32 0.0, %v3809
    %v3811 = vpop.f32.mrb[0].mxu0
    %v3812 = vadd.f32 0.0, %v3811
    %v3813 = vpop.f32.mrb[0].mxu0
    %v3814 = vpop.f32.mrb[0].mxu0
    %3815 = vdwg.mxu0
    %s3816 = smul.u32 3, 4
    %s3817 = smul.addr %s3816, 8
    %s3818 = scalar_lea.vmem [#allocation2], %s3817
    %v3819 = vld [vmem:[%s3818] sm:$0xff]
    %v3820 = vld [vmem:[%s3818 + $0x8] sm:$0xff]
    %v3821 = vld [vmem:[%s3818 + $0x10] sm:$0xff]
    %v3822 = vld [vmem:[%s3818 + $0x18] sm:$0xff]
    %v3823 = vadd.f32 %v3819, %v3686
    %v3824 = vadd.f32 %v3820, %v3688
    %v3825 = vadd.f32 %v3821, %v3727
    %v3826 = vadd.f32 %v3822, %v3729
    %s3827 = smul.u32 4, 4
    %s3828 = smul.addr %s3827, 8
    %s3829 = scalar_lea.vmem [#allocation3], %s3828
    %v3830 = vld [vmem:[%s3829] sm:$0xff]
    %v3831 = vld [vmem:[%s3829 + $0x8] sm:$0xff]
    %v3832 = vld [vmem:[%s3829 + $0x10] sm:$0xff]
    %v3833 = vld [vmem:[%s3829 + $0x18] sm:$0xff]
    %v3834 = vadd.f32 %v3830, %v3769
    %v3835 = vadd.f32 %v3831, %v3771
    %v3836 = vadd.f32 %v3832, %v3810
    %v3837 = vadd.f32 %v3833, %v3812
    %v3838 = vxor.u32 %v3823, 2147483648
    %v3839 = vmul.f32 %v3838, 1.442695
    %v3840 = vpow.pop %v3839
    %v3841 = vadd.f32 %v3840, 1.0
    %v3842 = vrcp.pop %v3841
    %v3843 = vmul.f32 1.0, %v3842
    %v3844 = vxor.u32 %v3824, 2147483648
    %v3845 = vmul.f32 %v3844, 1.442695
    %v3846 = vpow.pop %v3845
    %v3847 = vadd.f32 %v3846, 1.0
    %v3848 = vrcp.pop %v3847
    %v3849 = vmul.f32 1.0, %v3848
    %v3850 = vtanh.pop %v3825
    %v3851 = vxor.u32 %v3826, 2147483648
    %v3852 = vmul.f32 %v3851, 1.442695
    %v3853 = vpow.pop %v3852
    %v3854 = vadd.f32 %v3853, 1.0
    %v3855 = vrcp.pop %v3854
    %v3856 = vmul.f32 1.0, %v3855
    %v3857 = vmul.f32 %v3849, %v3646
    %v3858 = vmul.f32 %v3843, %v3850
    %v3859 = vadd.f32 %v3857, %v3858
    %v3860 = vtanh.pop %v3859
    %v3861 = vmul.f32 %v3856, %v3860
    %v3862 = vxor.u32 %v3834, 2147483648
    %v3863 = vmul.f32 %v3862, 1.442695
    %v3864 = vpow.pop %v3863
    %v3865 = vadd.f32 %v3864, 1.0
    %v3866 = vrcp.pop %v3865
    %v3867 = vmul.f32 1.0, %v3866
    %v3868 = vxor.u32 %v3835, 2147483648
    %v3869 = vmul.f32 %v3868, 1.442695
    %v3870 = vpow.pop %v3869
    %v3871 = vadd.f32 %v3870, 1.0
    %v3872 = vrcp.pop %v3871
    %v3873 = vmul.f32 1.0, %v3872
    %v3874 = vtanh.pop %v3836
    %v3875 = vxor.u32 %v3837, 2147483648
    %v3876 = vmul.f32 %v3875, 1.442695
    %v3877 = vpow.pop %v3876
    %v3878 = vadd.f32 %v3877, 1.0
    %v3879 = vrcp.pop %v3878
    %v3880 = vmul.f32 1.0, %v3879
    %v3881 = vmul.f32 %v3873, %v3649
    %v3882 = vmul.f32 %v3867, %v3874
    %v3883 = vadd.f32 %v3881, %v3882
    %v3884 = vtanh.pop %v3883
    %v3885 = vmul.f32 %v3880, %v3884
    %s3886 = scalar_lea.vmem [#allocation7], 24
    %v3887 = vld [vmem:[%s3886] sm:$0xff]
    %s3888 = scalar_lea.vmem [#allocation7], 32
    %v3889 = vld [vmem:[%s3888] sm:$0xff]
    %3891 = vset.pattern.permute.xlu0 0
    %3892 = vperm.xlu0 %3891, %v3887
    %v3893 = vpop.permute.xlu0 %3892
    %v3895 = vmul.f32 %v3893, %v3861
    %s3896 = scalar_lea.vmem [#allocation18], 48
    %3897 = vst [vmem:[%s3896] sm:$0xff] %v3895
    %3899 = vset.pattern.permute.xlu0 0
    %3900 = vperm.xlu0 %3899, %v3889
    %v3901 = vpop.permute.xlu0 %3900
    %v3903 = vmul.f32 %v3901, %v3885
    %s3904 = scalar_lea.vmem [#allocation18], 64
    %3905 = vst [vmem:[%s3904 + $0x8] sm:$0xff] %v3903
    %v3906 = vsub.f32 %v3861, %v3640
    %v3907 = vmul.f32 %v3893, %v3906
    %v3908 = vadd.f32 %v3640, %v3907
    %v3909 = vsub.f32 %v3885, %v3643
    %v3910 = vmul.f32 %v3901, %v3909
    %v3911 = vadd.f32 %v3643, %v3910
    %v3912 = vsub.f32 %v3859, %v3646
    %v3913 = vmul.f32 %v3893, %v3912
    %v3914 = vadd.f32 %v3646, %v3913
    %v3915 = vsub.f32 %v3883, %v3649
    %v3916 = vmul.f32 %v3901, %v3915
    %v3917 = vadd.f32 %v3649, %v3916
    %v3918 = vpack.c.bf16 %v3908, %v3908
    %3919 = vmatprep.subr.bf16.mxu0 %v2626
    %3920 = vmatpush1.bf16.msra.mxu0 %v2625
    %3921 = vmatprep.subr.bf16.mxu0 %v2630
    %3922 = vmatpush1.bf16.msra.mxu0 %v2629
    %3923 = vmatprep.subr.bf16.mxu0 %v2634
    %3924 = vmatpush1.bf16.msra.mxu0 %v2633
    %3925 = vmatprep.subr.bf16.mxu0 %v2638
    %3926 = vmatpush1.bf16.msra.mxu0 %v2637
    %3927 = vmatprep.subr.bf16.mxu0 %v2642
    %3928 = vmatpush1.bf16.msra.mxu0 %v2641
    %3929 = vmatprep.subr.bf16.mxu0 %v2646
    %3930 = vmatpush1.bf16.msra.mxu0 %v2645
    %3931 = vmatprep.subr.bf16.mxu0 %v2650
    %3932 = vmatpush1.bf16.msra.mxu0 %v2649
    %3933 = vmatprep.subr.bf16.mxu0 %v2654
    %3934 = vmatpush1.bf16.msra.mxu0 %v2653
    %3935 = vmatprep.subr.bf16.mxu0 0
    %3936 = vmatpush1.bf16.msra.mxu0 0
    %3937 = vmatprep.subr.bf16.mxu0 0
    %3938 = vmatpush1.bf16.msra.mxu0 0
    %3939 = vmatprep.subr.bf16.mxu0 0
    %3940 = vmatpush1.bf16.msra.mxu0 0
    %3941 = vmatprep.subr.bf16.mxu0 0
    %3942 = vmatpush1.bf16.msra.mxu0 0
    %3943 = vmatprep.subr.bf16.mxu0 0
    %3944 = vmatpush1.bf16.msra.mxu0 0
    %3945 = vmatprep.subr.bf16.mxu0 0
    %3946 = vmatpush1.bf16.msra.mxu0 0
    %3947 = vmatprep.subr.bf16.mxu0 0
    %3948 = vmatpush1.bf16.msra.mxu0 0
    %3949 = vmatprep.subr.bf16.mxu0 0
    %3950 = vmatpush1.bf16.msra.mxu0 0
    %3951 = vmatprep.mubr.bf16.mxu0 0
    %3952 = vmatmul.mubr.bf16.gmra.mrb[0].mxu0 %v3918
    %v3953 = vpop.f32.mrb[0].mxu0
    %v3954 = vadd.f32 0.0, %v3953
    %v3955 = vpop.f32.mrb[0].mxu0
    %v3956 = vadd.f32 0.0, %v3955
    %v3957 = vpop.f32.mrb[0].mxu0
    %v3958 = vpop.f32.mrb[0].mxu0
    %3959 = vdwg.mxu0
    %3960 = vmatprep.subr.bf16.mxu0 %v2628
    %3961 = vmatpush1.bf16.msra.mxu0 %v2627
    %3962 = vmatprep.subr.bf16.mxu0 %v2632
    %3963 = vmatpush1.bf16.msra.mxu0 %v2631
    %3964 = vmatprep.subr.bf16.mxu0 %v2636
    %3965 = vmatpush1.bf16.msra.mxu0 %v2635
    %3966 = vmatprep.subr.bf16.mxu0 %v2640
    %3967 = vmatpush1.bf16.msra.mxu0 %v2639
    %3968 = vmatprep.subr.bf16.mxu0 %v2644
    %3969 = vmatpush1.bf16.msra.mxu0 %v2643
    %3970 = vmatprep.subr.bf16.mxu0 %v2648
    %3971 = vmatpush1.bf16.msra.mxu0 %v2647
    %3972 = vmatprep.subr.bf16.mxu0 %v2652
    %3973 = vmatpush1.bf16.msra.mxu0 %v2651
    %3974 = vmatprep.subr.bf16.mxu0 %v2656
    %3975 = vmatpush1.bf16.msra.mxu0 %v2655
    %3976 = vmatprep.subr.bf16.mxu0 0
    %3977 = vmatpush1.bf16.msra.mxu0 0
    %3978 = vmatprep.subr.bf16.mxu0 0
    %3979 = vmatpush1.bf16.msra.mxu0 0
    %3980 = vmatprep.subr.bf16.mxu0 0
    %3981 = vmatpush1.bf16.msra.mxu0 0
    %3982 = vmatprep.subr.bf16.mxu0 0
    %3983 = vmatpush1.bf16.msra.mxu0 0
    %3984 = vmatprep.subr.bf16.mxu0 0
    %3985 = vmatpush1.bf16.msra.mxu0 0
    %3986 = vmatprep.subr.bf16.mxu0 0
    %3987 = vmatpush1.bf16.msra.mxu0 0
    %3988 = vmatprep.subr.bf16.mxu0 0
    %3989 = vmatpush1.bf16.msra.mxu0 0
    %3990 = vmatprep.subr.bf16.mxu0 0
    %3991 = vmatpush1.bf16.msra.mxu0 0
    %3992 = vmatprep.mubr.bf16.mxu0 0
    %3993 = vmatmul.mubr.bf16.gmra.mrb[0].mxu0 %v3918
    %v3994 = vpop.f32.mrb[0].mxu0
    %v3995 = vadd.f32 0.0, %v3994
    %v3996 = vpop.f32.mrb[0].mxu0
    %v3997 = vadd.f32 0.0, %v3996
    %v3998 = vpop.f32.mrb[0].mxu0
    %v3999 = vpop.f32.mrb[0].mxu0
    %4000 = vdwg.mxu0
    %v4001 = vpack.c.bf16 %v3911, %v3911
    %4002 = vmatprep.subr.bf16.mxu0 %v2869
    %4003 = vmatpush1.bf16.msra.mxu0 %v2868
    %4004 = vmatprep.subr.bf16.mxu0 %v2873
    %4005 = vmatpush1.bf16.msra.mxu0 %v2872
    %4006 = vmatprep.subr.bf16.mxu0 %v2877
    %4007 = vmatpush1.bf16.msra.mxu0 %v2876
    %4008 = vmatprep.subr.bf16.mxu0 %v2881
    %4009 = vmatpush1.bf16.msra.mxu0 %v2880
    %4010 = vmatprep.subr.bf16.mxu0 %v2885
    %4011 = vmatpush1.bf16.msra.mxu0 %v2884
    %4012 = vmatprep.subr.bf16.mxu0 %v2889
    %4013 = vmatpush1.bf16.msra.mxu0 %v2888
    %4014 = vmatprep.subr.bf16.mxu0 %v2893
    %4015 = vmatpush1.bf16.msra.mxu0 %v2892
    %4016 = vmatprep.subr.bf16.mxu0 %v2897
    %4017 = vmatpush1.bf16.msra.mxu0 %v2896
    %4018 = vmatprep.subr.bf16.mxu0 0
    %4019 = vmatpush1.bf16.msra.mxu0 0
    %4020 = vmatprep.subr.bf16.mxu0 0
    %4021 = vmatpush1.bf16.msra.mxu0 0
    %4022 = vmatprep.subr.bf16.mxu0 0
    %4023 = vmatpush1.bf16.msra.mxu0 0
    %4024 = vmatprep.subr.bf16.mxu0 0
    %4025 = vmatpush1.bf16.msra.mxu0 0
    %4026 = vmatprep.subr.bf16.mxu0 0
    %4027 = vmatpush1.bf16.msra.mxu0 0
    %4028 = vmatprep.subr.bf16.mxu0 0
    %4029 = vmatpush1.bf16.msra.mxu0 0
    %4030 = vmatprep.subr.bf16.mxu0 0
    %4031 = vmatpush1.bf16.msra.mxu0 0
    %4032 = vmatprep.subr.bf16.mxu0 0
    %4033 = vmatpush1.bf16.msra.mxu0 0
    %4034 = vmatprep.mubr.bf16.mxu0 0
    %4035 = vmatmul.mubr.bf16.gmra.mrb[0].mxu0 %v4001
    %v4036 = vpop.f32.mrb[0].mxu0
    %v4037 = vadd.f32 0.0, %v4036
    %v4038 = vpop.f32.mrb[0].mxu0
    %v4039 = vadd.f32 0.0, %v4038
    %v4040 = vpop.f32.mrb[0].mxu0
    %v4041 = vpop.f32.mrb[0].mxu0
    %4042 = vdwg.mxu0
    %4043 = vmatprep.subr.bf16.mxu0 %v2871
    %4044 = vmatpush1.bf16.msra.mxu0 %v2870
    %4045 = vmatprep.subr.bf16.mxu0 %v2875
    %4046 = vmatpush1.bf16.msra.mxu0 %v2874
    %4047 = vmatprep.subr.bf16.mxu0 %v2879
    %4048 = vmatpush1.bf16.msra.mxu0 %v2878
    %4049 = vmatprep.subr.bf16.mxu0 %v2883
    %4050 = vmatpush1.bf16.msra.mxu0 %v2882
    %4051 = vmatprep.subr.bf16.mxu0 %v2887
    %4052 = vmatpush1.bf16.msra.mxu0 %v2886
    %4053 = vmatprep.subr.bf16.mxu0 %v2891
    %4054 = vmatpush1.bf16.msra.mxu0 %v2890
    %4055 = vmatprep.subr.bf16.mxu0 %v2895
    %4056 = vmatpush1.bf16.msra.mxu0 %v2894
    %4057 = vmatprep.subr.bf16.mxu0 %v2899
    %4058 = vmatpush1.bf16.msra.mxu0 %v2898
    %4059 = vmatprep.subr.bf16.mxu0 0
    %4060 = vmatpush1.bf16.msra.mxu0 0
    %4061 = vmatprep.subr.bf16.mxu0 0
    %4062 = vmatpush1.bf16.msra.mxu0 0
    %4063 = vmatprep.subr.bf16.mxu0 0
    %4064 = vmatpush1.bf16.msra.mxu0 0
    %4065 = vmatprep.subr.bf16.mxu0 0
    %4066 = vmatpush1.bf16.msra.mxu0 0
    %4067 = vmatprep.subr.bf16.mxu0 0
    %4068 = vmatpush1.bf16.msra.mxu0 0
    %4069 = vmatprep.subr.bf16.mxu0 0
    %4070 = vmatpush1.bf16.msra.mxu0 0
    %4071 = vmatprep.subr.bf16.mxu0 0
    %4072 = vmatpush1.bf16.msra.mxu0 0
    %4073 = vmatprep.subr.bf16.mxu0 0
    %4074 = vmatpush1.bf16.msra.mxu0 0
    %4075 = vmatprep.mubr.bf16.mxu0 0
    %4076 = vmatmul.mubr.bf16.gmra.mrb[0].mxu0 %v4001
    %v4077 = vpop.f32.mrb[0].mxu0
    %v4078 = vadd.f32 0.0, %v4077
    %v4079 = vpop.f32.mrb[0].mxu0
    %v4080 = vadd.f32 0.0, %v4079
    %v4081 = vpop.f32.mrb[0].mxu0
    %v4082 = vpop.f32.mrb[0].mxu0
    %4083 = vdwg.mxu0
    %s4084 = smul.addr %s3827, 8
    %s4085 = scalar_lea.vmem [#allocation2], %s4084
    %v4086 = vld [vmem:[%s4085] sm:$0xff]
    %v4087 = vld [vmem:[%s4085 + $0x8] sm:$0xff]
    %v4088 = vld [vmem:[%s4085 + $0x10] sm:$0xff]
    %v4089 = vld [vmem:[%s4085 + $0x18] sm:$0xff]
    %v4090 = vadd.f32 %v4086, %v3954
    %v4091 = vadd.f32 %v4087, %v3956
    %v4092 = vadd.f32 %v4088, %v3995
    %v4093 = vadd.f32 %v4089, %v3997
    %s4094 = smul.addr %s3816, 8
    %s4095 = scalar_lea.vmem [#allocation3], %s4094
    %v4096 = vld [vmem:[%s4095] sm:$0xff]
    %v4097 = vld [vmem:[%s4095 + $0x8] sm:$0xff]
    %v4098 = vld [vmem:[%s4095 + $0x10] sm:$0xff]
    %v4099 = vld [vmem:[%s4095 + $0x18] sm:$0xff]
    %v4100 = vadd.f32 %v4096, %v4037
    %v4101 = vadd.f32 %v4097, %v4039
    %v4102 = vadd.f32 %v4098, %v4078
    %v4103 = vadd.f32 %v4099, %v4080
    %v4104 = vxor.u32 %v4090, 2147483648
    %v4105 = vmul.f32 %v4104, 1.442695
    %v4106 = vpow.pop %v4105
    %v4107 = vadd.f32 %v4106, 1.0
    %v4108 = vrcp.pop %v4107
    %v4109 = vmul.f32 1.0, %v4108
    %v4110 = vxor.u32 %v4091, 2147483648
    %v4111 = vmul.f32 %v4110, 1.442695
    %v4112 = vpow.pop %v4111
    %v4113 = vadd.f32 %v4112, 1.0
    %v4114 = vrcp.pop %v4113
    %v4115 = vmul.f32 1.0, %v4114
    %v4116 = vtanh.pop %v4092
    %v4117 = vxor.u32 %v4093, 2147483648
    %v4118 = vmul.f32 %v4117, 1.442695
    %v4119 = vpow.pop %v4118
    %v4120 = vadd.f32 %v4119, 1.0
    %v4121 = vrcp.pop %v4120
    %v4122 = vmul.f32 1.0, %v4121
    %v4123 = vmul.f32 %v4115, %v3914
    %v4124 = vmul.f32 %v4109, %v4116
    %v4125 = vadd.f32 %v4123, %v4124
    %v4126 = vtanh.pop %v4125
    %v4127 = vmul.f32 %v4122, %v4126
    %v4128 = vxor.u32 %v4100, 2147483648
    %v4129 = vmul.f32 %v4128, 1.442695
    %v4130 = vpow.pop %v4129
    %v4131 = vadd.f32 %v4130, 1.0
    %v4132 = vrcp.pop %v4131
    %v4133 = vmul.f32 1.0, %v4132
    %v4134 = vxor.u32 %v4101, 2147483648
    %v4135 = vmul.f32 %v4134, 1.442695
    %v4136 = vpow.pop %v4135
    %v4137 = vadd.f32 %v4136, 1.0
    %v4138 = vrcp.pop %v4137
    %v4139 = vmul.f32 1.0, %v4138
    %v4140 = vtanh.pop %v4102
    %v4141 = vxor.u32 %v4103, 2147483648
    %v4142 = vmul.f32 %v4141, 1.442695
    %v4143 = vpow.pop %v4142
    %v4144 = vadd.f32 %v4143, 1.0
    %v4145 = vrcp.pop %v4144
    %v4146 = vmul.f32 1.0, %v4145
    %v4147 = vmul.f32 %v4139, %v3917
    %v4148 = vmul.f32 %v4133, %v4140
    %v4149 = vadd.f32 %v4147, %v4148
    %v4150 = vtanh.pop %v4149
    %v4151 = vmul.f32 %v4146, %v4150
    %v4152 = vld [vmem:[%s3888] sm:$0xff]
    %v4153 = vld [vmem:[%s3886] sm:$0xff]
    %4155 = vset.pattern.permute.xlu0 0
    %4156 = vperm.xlu0 %4155, %v4152
    %v4157 = vpop.permute.xlu0 %4156
    %v4159 = vmul.f32 %v4157, %v4127
    %4160 = vst [vmem:[%s3904] sm:$0xff] %v4159
    %4162 = vset.pattern.permute.xlu0 0
    %4163 = vperm.xlu0 %4162, %v4153
    %v4164 = vpop.permute.xlu0 %4163
    %v4166 = vmul.f32 %v4164, %v4151
    %4167 = vst [vmem:[%s3896 + $0x8] sm:$0xff] %v4166
    %v4168 = vsub.f32 %v4127, %v3908
    %v4169 = vmul.f32 %v4157, %v4168
    %v4170 = vadd.f32 %v3908, %v4169
    %v4171 = vsub.f32 %v4151, %v3911
    %v4172 = vmul.f32 %v4164, %v4171
    %v4173 = vadd.f32 %v3911, %v4172
    %v4174 = vsub.f32 %v4125, %v3914
    %v4175 = vmul.f32 %v4157, %v4174
    %v4176 = vadd.f32 %v3914, %v4175
    %v4177 = vsub.f32 %v4149, %v3917
    %v4178 = vmul.f32 %v4164, %v4177
    %v4179 = vadd.f32 %v3917, %v4178
    %v4180 = vpack.c.bf16 %v4170, %v4170
    %4181 = vmatprep.subr.bf16.mxu0 %v2626
    %4182 = vmatpush1.bf16.msra.mxu0 %v2625
    %4183 = vmatprep.subr.bf16.mxu0 %v2630
    %4184 = vmatpush1.bf16.msra.mxu0 %v2629
    %4185 = vmatprep.subr.bf16.mxu0 %v2634
    %4186 = vmatpush1.bf16.msra.mxu0 %v2633
    %4187 = vmatprep.subr.bf16.mxu0 %v2638
    %4188 = vmatpush1.bf16.msra.mxu0 %v2637
    %4189 = vmatprep.subr.bf16.mxu0 %v2642
    %4190 = vmatpush1.bf16.msra.mxu0 %v2641
    %4191 = vmatprep.subr.bf16.mxu0 %v2646
    %4192 = vmatpush1.bf16.msra.mxu0 %v2645
    %4193 = vmatprep.subr.bf16.mxu0 %v2650
    %4194 = vmatpush1.bf16.msra.mxu0 %v2649
    %4195 = vmatprep.subr.bf16.mxu0 %v2654
    %4196 = vmatpush1.bf16.msra.mxu0 %v2653
    %4197 = vmatprep.subr.bf16.mxu0 0
    %4198 = vmatpush1.bf16.msra.mxu0 0
    %4199 = vmatprep.subr.bf16.mxu0 0
    %4200 = vmatpush1.bf16.msra.mxu0 0
    %4201 = vmatprep.subr.bf16.mxu0 0
    %4202 = vmatpush1.bf16.msra.mxu0 0
    %4203 = vmatprep.subr.bf16.mxu0 0
    %4204 = vmatpush1.bf16.msra.mxu0 0
    %4205 = vmatprep.subr.bf16.mxu0 0
    %4206 = vmatpush1.bf16.msra.mxu0 0
    %4207 = vmatprep.subr.bf16.mxu0 0
    %4208 = vmatpush1.bf16.msra.mxu0 0
    %4209 = vmatprep.subr.bf16.mxu0 0
    %4210 = vmatpush1.bf16.msra.mxu0 0
    %4211 = vmatprep.subr.bf16.mxu0 0
    %4212 = vmatpush1.bf16.msra.mxu0 0
    %4213 = vmatprep.mubr.bf16.mxu0 0
    %4214 = vmatmul.mubr.bf16.gmra.mrb[0].mxu0 %v4180
    %v4215 = vpop.f32.mrb[0].mxu0
    %v4216 = vadd.f32 0.0, %v4215
    %v4217 = vpop.f32.mrb[0].mxu0
    %v4218 = vadd.f32 0.0, %v4217
    %v4219 = vpop.f32.mrb[0].mxu0
    %v4220 = vpop.f32.mrb[0].mxu0
    %4221 = vdwg.mxu0
    %4222 = vmatprep.subr.bf16.mxu0 %v2628
    %4223 = vmatpush1.bf16.msra.mxu0 %v2627
    %4224 = vmatprep.subr.bf16.mxu0 %v2632
    %4225 = vmatpush1.bf16.msra.mxu0 %v2631
    %4226 = vmatprep.subr.bf16.mxu0 %v2636
    %4227 = vmatpush1.bf16.msra.mxu0 %v2635
    %4228 = vmatprep.subr.bf16.mxu0 %v2640
    %4229 = vmatpush1.bf16.msra.mxu0 %v2639
    %4230 = vmatprep.subr.bf16.mxu0 %v2644
    %4231 = vmatpush1.bf16.msra.mxu0 %v2643
    %4232 = vmatprep.subr.bf16.mxu0 %v2648
    %4233 = vmatpush1.bf16.msra.mxu0 %v2647
    %4234 = vmatprep.subr.bf16.mxu0 %v2652
    %4235 = vmatpush1.bf16.msra.mxu0 %v2651
    %4236 = vmatprep.subr.bf16.mxu0 %v2656
    %4237 = vmatpush1.bf16.msra.mxu0 %v2655
    %4238 = vmatprep.subr.bf16.mxu0 0
    %4239 = vmatpush1.bf16.msra.mxu0 0
    %4240 = vmatprep.subr.bf16.mxu0 0
    %4241 = vmatpush1.bf16.msra.mxu0 0
    %4242 = vmatprep.subr.bf16.mxu0 0
    %4243 = vmatpush1.bf16.msra.mxu0 0
    %4244 = vmatprep.subr.bf16.mxu0 0
    %4245 = vmatpush1.bf16.msra.mxu0 0
    %4246 = vmatprep.subr.bf16.mxu0 0
    %4247 = vmatpush1.bf16.msra.mxu0 0
    %4248 = vmatprep.subr.bf16.mxu0 0
    %4249 = vmatpush1.bf16.msra.mxu0 0
    %4250 = vmatprep.subr.bf16.mxu0 0
    %4251 = vmatpush1.bf16.msra.mxu0 0
    %4252 = vmatprep.subr.bf16.mxu0 0
    %4253 = vmatpush1.bf16.msra.mxu0 0
    %4254 = vmatprep.mubr.bf16.mxu0 0
    %4255 = vmatmul.mubr.bf16.gmra.mrb[0].mxu0 %v4180
    %v4256 = vpop.f32.mrb[0].mxu0
    %v4257 = vadd.f32 0.0, %v4256
    %v4258 = vpop.f32.mrb[0].mxu0
    %v4259 = vadd.f32 0.0, %v4258
    %v4260 = vpop.f32.mrb[0].mxu0
    %v4261 = vpop.f32.mrb[0].mxu0
    %4262 = vdwg.mxu0
    %v4263 = vpack.c.bf16 %v4173, %v4173
    %4264 = vmatprep.subr.bf16.mxu0 %v2869
    %4265 = vmatpush1.bf16.msra.mxu0 %v2868
    %4266 = vmatprep.subr.bf16.mxu0 %v2873
    %4267 = vmatpush1.bf16.msra.mxu0 %v2872
    %4268 = vmatprep.subr.bf16.mxu0 %v2877
    %4269 = vmatpush1.bf16.msra.mxu0 %v2876
    %4270 = vmatprep.subr.bf16.mxu0 %v2881
    %4271 = vmatpush1.bf16.msra.mxu0 %v2880
    %4272 = vmatprep.subr.bf16.mxu0 %v2885
    %4273 = vmatpush1.bf16.msra.mxu0 %v2884
    %4274 = vmatprep.subr.bf16.mxu0 %v2889
    %4275 = vmatpush1.bf16.msra.mxu0 %v2888
    %4276 = vmatprep.subr.bf16.mxu0 %v2893
    %4277 = vmatpush1.bf16.msra.mxu0 %v2892
    %4278 = vmatprep.subr.bf16.mxu0 %v2897
    %4279 = vmatpush1.bf16.msra.mxu0 %v2896
    %4280 = vmatprep.subr.bf16.mxu0 0
    %4281 = vmatpush1.bf16.msra.mxu0 0
    %4282 = vmatprep.subr.bf16.mxu0 0
    %4283 = vmatpush1.bf16.msra.mxu0 0
    %4284 = vmatprep.subr.bf16.mxu0 0
    %4285 = vmatpush1.bf16.msra.mxu0 0
    %4286 = vmatprep.subr.bf16.mxu0 0
    %4287 = vmatpush1.bf16.msra.mxu0 0
    %4288 = vmatprep.subr.bf16.mxu0 0
    %4289 = vmatpush1.bf16.msra.mxu0 0
    %4290 = vmatprep.subr.bf16.mxu0 0
    %4291 = vmatpush1.bf16.msra.mxu0 0
    %4292 = vmatprep.subr.bf16.mxu0 0
    %4293 = vmatpush1.bf16.msra.mxu0 0
    %4294 = vmatprep.subr.bf16.mxu0 0
    %4295 = vmatpush1.bf16.msra.mxu0 0
    %4296 = vmatprep.mubr.bf16.mxu0 0
    %4297 = vmatmul.mubr.bf16.gmra.mrb[0].mxu0 %v4263
    %v4298 = vpop.f32.mrb[0].mxu0
    %v4299 = vadd.f32 0.0, %v4298
    %v4300 = vpop.f32.mrb[0].mxu0
    %v4301 = vadd.f32 0.0, %v4300
    %v4302 = vpop.f32.mrb[0].mxu0
    %v4303 = vpop.f32.mrb[0].mxu0
    %4304 = vdwg.mxu0
    %4305 = vmatprep.subr.bf16.mxu0 %v2871
    %4306 = vmatpush1.bf16.msra.mxu0 %v2870
    %4307 = vmatprep.subr.bf16.mxu0 %v2875
    %4308 = vmatpush1.bf16.msra.mxu0 %v2874
    %4309 = vmatprep.subr.bf16.mxu0 %v2879
    %4310 = vmatpush1.bf16.msra.mxu0 %v2878
    %4311 = vmatprep.subr.bf16.mxu0 %v2883
    %4312 = vmatpush1.bf16.msra.mxu0 %v2882
    %4313 = vmatprep.subr.bf16.mxu0 %v2887
    %4314 = vmatpush1.bf16.msra.mxu0 %v2886
    %4315 = vmatprep.subr.bf16.mxu0 %v2891
    %4316 = vmatpush1.bf16.msra.mxu0 %v2890
    %4317 = vmatprep.subr.bf16.mxu0 %v2895
    %4318 = vmatpush1.bf16.msra.mxu0 %v2894
    %4319 = vmatprep.subr.bf16.mxu0 %v2899
    %4320 = vmatpush1.bf16.msra.mxu0 %v2898
    %4321 = vmatprep.subr.bf16.mxu0 0
    %4322 = vmatpush1.bf16.msra.mxu0 0
    %4323 = vmatprep.subr.bf16.mxu0 0
    %4324 = vmatpush1.bf16.msra.mxu0 0
    %4325 = vmatprep.subr.bf16.mxu0 0
    %4326 = vmatpush1.bf16.msra.mxu0 0
    %4327 = vmatprep.subr.bf16.mxu0 0
    %4328 = vmatpush1.bf16.msra.mxu0 0
    %4329 = vmatprep.subr.bf16.mxu0 0
    %4330 = vmatpush1.bf16.msra.mxu0 0
    %4331 = vmatprep.subr.bf16.mxu0 0
    %4332 = vmatpush1.bf16.msra.mxu0 0
    %4333 = vmatprep.subr.bf16.mxu0 0
    %4334 = vmatpush1.bf16.msra.mxu0 0
    %4335 = vmatprep.subr.bf16.mxu0 0
    %4336 = vmatpush1.bf16.msra.mxu0 0
    %4337 = vmatprep.mubr.bf16.mxu0 0
    %4338 = vmatmul.mubr.bf16.gmra.mrb[0].mxu0 %v4263
    %v4339 = vpop.f32.mrb[0].mxu0
    %v4340 = vadd.f32 0.0, %v4339
    %v4341 = vpop.f32.mrb[0].mxu0
    %v4342 = vadd.f32 0.0, %v4341
    %v4343 = vpop.f32.mrb[0].mxu0
    %v4344 = vpop.f32.mrb[0].mxu0
    %4345 = vdwg.mxu0
    %s4346 = smul.addr %s3559, 8
    %s4347 = scalar_lea.vmem [#allocation2], %s4346
    %v4348 = vld [vmem:[%s4347] sm:$0xff]
    %v4349 = vld [vmem:[%s4347 + $0x8] sm:$0xff]
    %v4350 = vld [vmem:[%s4347 + $0x10] sm:$0xff]
    %v4351 = vld [vmem:[%s4347 + $0x18] sm:$0xff]
    %v4352 = vadd.f32 %v4348, %v4216
    %v4353 = vadd.f32 %v4349, %v4218
    %v4354 = vadd.f32 %v4350, %v4257
    %v4355 = vadd.f32 %v4351, %v4259
    %s4356 = smul.addr %s3548, 8
    %s4357 = scalar_lea.vmem [#allocation3], %s4356
    %v4358 = vld [vmem:[%s4357] sm:$0xff]
    %v4359 = vld [vmem:[%s4357 + $0x8] sm:$0xff]
    %v4360 = vld [vmem:[%s4357 + $0x10] sm:$0xff]
    %v4361 = vld [vmem:[%s4357 + $0x18] sm:$0xff]
    %v4362 = vadd.f32 %v4358, %v4299
    %v4363 = vadd.f32 %v4359, %v4301
    %v4364 = vadd.f32 %v4360, %v4340
    %v4365 = vadd.f32 %v4361, %v4342
    %v4366 = vxor.u32 %v4352, 2147483648
    %v4367 = vmul.f32 %v4366, 1.442695
    %v4368 = vpow.pop %v4367
    %v4369 = vadd.f32 %v4368, 1.0
    %v4370 = vrcp.pop %v4369
    %v4371 = vmul.f32 1.0, %v4370
    %v4372 = vxor.u32 %v4353, 2147483648
    %v4373 = vmul.f32 %v4372, 1.442695
    %v4374 = vpow.pop %v4373
    %v4375 = vadd.f32 %v4374, 1.0
    %v4376 = vrcp.pop %v4375
    %v4377 = vmul.f32 1.0, %v4376
    %v4378 = vtanh.pop %v4354
    %v4379 = vxor.u32 %v4355, 2147483648
    %v4380 = vmul.f32 %v4379, 1.442695
    %v4381 = vpow.pop %v4380
    %v4382 = vadd.f32 %v4381, 1.0
    %v4383 = vrcp.pop %v4382
    %v4384 = vmul.f32 1.0, %v4383
    %v4385 = vmul.f32 %v4377, %v4176
    %v4386 = vmul.f32 %v4371, %v4378
    %v4387 = vadd.f32 %v4385, %v4386
    %v4388 = vtanh.pop %v4387
    %v4389 = vmul.f32 %v4384, %v4388
    %v4390 = vxor.u32 %v4362, 2147483648
    %v4391 = vmul.f32 %v4390, 1.442695
    %v4392 = vpow.pop %v4391
    %v4393 = vadd.f32 %v4392, 1.0
    %v4394 = vrcp.pop %v4393
    %v4395 = vmul.f32 1.0, %v4394
    %v4396 = vxor.u32 %v4363, 2147483648
    %v4397 = vmul.f32 %v4396, 1.442695
    %v4398 = vpow.pop %v4397
    %v4399 = vadd.f32 %v4398, 1.0
    %v4400 = vrcp.pop %v4399
    %v4401 = vmul.f32 1.0, %v4400
    %v4402 = vtanh.pop %v4364
    %v4403 = vxor.u32 %v4365, 2147483648
    %v4404 = vmul.f32 %v4403, 1.442695
    %v4405 = vpow.pop %v4404
    %v4406 = vadd.f32 %v4405, 1.0
    %v4407 = vrcp.pop %v4406
    %v4408 = vmul.f32 1.0, %v4407
    %v4409 = vmul.f32 %v4401, %v4179
    %v4410 = vmul.f32 %v4395, %v4402
    %v4411 = vadd.f32 %v4409, %v4410
    %v4412 = vtanh.pop %v4411
    %v4413 = vmul.f32 %v4408, %v4412
    %v4414 = vld [vmem:[%s3620] sm:$0xff]
    %v4415 = vld [vmem:[%s3618] sm:$0xff]
    %4417 = vset.pattern.permute.xlu0 0
    %4418 = vperm.xlu0 %4417, %v4414
    %v4419 = vpop.permute.xlu0 %4418
    %v4421 = vmul.f32 %v4419, %v4389
    %4422 = vst [vmem:[%s3636] sm:$0xff] %v4421
    %4424 = vset.pattern.permute.xlu0 0
    %4425 = vperm.xlu0 %4424, %v4415
    %v4426 = vpop.permute.xlu0 %4425
    %v4428 = vmul.f32 %v4426, %v4413
    %4429 = vst [vmem:[%s3628 + $0x8] sm:$0xff] %v4428
    %v4430 = vsub.f32 %v4389, %v4170
    %v4431 = vmul.f32 %v4419, %v4430
    %v4432 = vadd.f32 %v4170, %v4431
    %v4433 = vsub.f32 %v4413, %v4173
    %v4434 = vmul.f32 %v4426, %v4433
    %v4435 = vadd.f32 %v4173, %v4434
    %v4436 = vsub.f32 %v4387, %v4176
    %v4437 = vmul.f32 %v4419, %v4436
    %v4438 = vadd.f32 %v4176, %v4437
    %v4439 = vsub.f32 %v4411, %v4179
    %v4440 = vmul.f32 %v4426, %v4439
    %v4441 = vadd.f32 %v4179, %v4440
    %v4442 = vpack.c.bf16 %v4432, %v4432
    %4443 = vmatprep.subr.bf16.mxu0 %v2626
    %4444 = vmatpush1.bf16.msra.mxu0 %v2625
    %4445 = vmatprep.subr.bf16.mxu0 %v2630
    %4446 = vmatpush1.bf16.msra.mxu0 %v2629
    %4447 = vmatprep.subr.bf16.mxu0 %v2634
    %4448 = vmatpush1.bf16.msra.mxu0 %v2633
    %4449 = vmatprep.subr.bf16.mxu0 %v2638
    %4450 = vmatpush1.bf16.msra.mxu0 %v2637
    %4451 = vmatprep.subr.bf16.mxu0 %v2642
    %4452 = vmatpush1.bf16.msra.mxu0 %v2641
    %4453 = vmatprep.subr.bf16.mxu0 %v2646
    %4454 = vmatpush1.bf16.msra.mxu0 %v2645
    %4455 = vmatprep.subr.bf16.mxu0 %v2650
    %4456 = vmatpush1.bf16.msra.mxu0 %v2649
    %4457 = vmatprep.subr.bf16.mxu0 %v2654
    %4458 = vmatpush1.bf16.msra.mxu0 %v2653
    %4459 = vmatprep.subr.bf16.mxu0 0
    %4460 = vmatpush1.bf16.msra.mxu0 0
    %4461 = vmatprep.subr.bf16.mxu0 0
    %4462 = vmatpush1.bf16.msra.mxu0 0
    %4463 = vmatprep.subr.bf16.mxu0 0
    %4464 = vmatpush1.bf16.msra.mxu0 0
    %4465 = vmatprep.subr.bf16.mxu0 0
    %4466 = vmatpush1.bf16.msra.mxu0 0
    %4467 = vmatprep.subr.bf16.mxu0 0
    %4468 = vmatpush1.bf16.msra.mxu0 0
    %4469 = vmatprep.subr.bf16.mxu0 0
    %4470 = vmatpush1.bf16.msra.mxu0 0
    %4471 = vmatprep.subr.bf16.mxu0 0
    %4472 = vmatpush1.bf16.msra.mxu0 0
    %4473 = vmatprep.subr.bf16.mxu0 0
    %4474 = vmatpush1.bf16.msra.mxu0 0
    %4475 = vmatprep.mubr.bf16.mxu0 0
    %4476 = vmatmul.mubr.bf16.gmra.mrb[0].mxu0 %v4442
    %v4477 = vpop.f32.mrb[0].mxu0
    %v4478 = vadd.f32 0.0, %v4477
    %v4479 = vpop.f32.mrb[0].mxu0
    %v4480 = vadd.f32 0.0, %v4479
    %v4481 = vpop.f32.mrb[0].mxu0
    %v4482 = vpop.f32.mrb[0].mxu0
    %4483 = vdwg.mxu0
    %4484 = vmatprep.subr.bf16.mxu0 %v2628
    %4485 = vmatpush1.bf16.msra.mxu0 %v2627
    %4486 = vmatprep.subr.bf16.mxu0 %v2632
    %4487 = vmatpush1.bf16.msra.mxu0 %v2631
    %4488 = vmatprep.subr.bf16.mxu0 %v2636
    %4489 = vmatpush1.bf16.msra.mxu0 %v2635
    %4490 = vmatprep.subr.bf16.mxu0 %v2640
    %4491 = vmatpush1.bf16.msra.mxu0 %v2639
    %4492 = vmatprep.subr.bf16.mxu0 %v2644
    %4493 = vmatpush1.bf16.msra.mxu0 %v2643
    %4494 = vmatprep.subr.bf16.mxu0 %v2648
    %4495 = vmatpush1.bf16.msra.mxu0 %v2647
    %4496 = vmatprep.subr.bf16.mxu0 %v2652
    %4497 = vmatpush1.bf16.msra.mxu0 %v2651
    %4498 = vmatprep.subr.bf16.mxu0 %v2656
    %4499 = vmatpush1.bf16.msra.mxu0 %v2655
    %4500 = vmatprep.subr.bf16.mxu0 0
    %4501 = vmatpush1.bf16.msra.mxu0 0
    %4502 = vmatprep.subr.bf16.mxu0 0
    %4503 = vmatpush1.bf16.msra.mxu0 0
    %4504 = vmatprep.subr.bf16.mxu0 0
    %4505 = vmatpush1.bf16.msra.mxu0 0
    %4506 = vmatprep.subr.bf16.mxu0 0
    %4507 = vmatpush1.bf16.msra.mxu0 0
    %4508 = vmatprep.subr.bf16.mxu0 0
    %4509 = vmatpush1.bf16.msra.mxu0 0
    %4510 = vmatprep.subr.bf16.mxu0 0
    %4511 = vmatpush1.bf16.msra.mxu0 0
    %4512 = vmatprep.subr.bf16.mxu0 0
    %4513 = vmatpush1.bf16.msra.mxu0 0
    %4514 = vmatprep.subr.bf16.mxu0 0
    %4515 = vmatpush1.bf16.msra.mxu0 0
    %4516 = vmatprep.mubr.bf16.mxu0 0
    %4517 = vmatmul.mubr.bf16.gmra.mrb[0].mxu0 %v4442
    %v4518 = vpop.f32.mrb[0].mxu0
    %v4519 = vadd.f32 0.0, %v4518
    %v4520 = vpop.f32.mrb[0].mxu0
    %v4521 = vadd.f32 0.0, %v4520
    %v4522 = vpop.f32.mrb[0].mxu0
    %v4523 = vpop.f32.mrb[0].mxu0
    %4524 = vdwg.mxu0
    %v4525 = vpack.c.bf16 %v4435, %v4435
    %4526 = vmatprep.subr.bf16.mxu0 %v2869
    %4527 = vmatpush1.bf16.msra.mxu0 %v2868
    %4528 = vmatprep.subr.bf16.mxu0 %v2873
    %4529 = vmatpush1.bf16.msra.mxu0 %v2872
    %4530 = vmatprep.subr.bf16.mxu0 %v2877
    %4531 = vmatpush1.bf16.msra.mxu0 %v2876
    %4532 = vmatprep.subr.bf16.mxu0 %v2881
    %4533 = vmatpush1.bf16.msra.mxu0 %v2880
    %4534 = vmatprep.subr.bf16.mxu0 %v2885
    %4535 = vmatpush1.bf16.msra.mxu0 %v2884
    %4536 = vmatprep.subr.bf16.mxu0 %v2889
    %4537 = vmatpush1.bf16.msra.mxu0 %v2888
    %4538 = vmatprep.subr.bf16.mxu0 %v2893
    %4539 = vmatpush1.bf16.msra.mxu0 %v2892
    %4540 = vmatprep.subr.bf16.mxu0 %v2897
    %4541 = vmatpush1.bf16.msra.mxu0 %v2896
    %4542 = vmatprep.subr.bf16.mxu0 0
    %4543 = vmatpush1.bf16.msra.mxu0 0
    %4544 = vmatprep.subr.bf16.mxu0 0
    %4545 = vmatpush1.bf16.msra.mxu0 0
    %4546 = vmatprep.subr.bf16.mxu0 0
    %4547 = vmatpush1.bf16.msra.mxu0 0
    %4548 = vmatprep.subr.bf16.mxu0 0
    %4549 = vmatpush1.bf16.msra.mxu0 0
    %4550 = vmatprep.subr.bf16.mxu0 0
    %4551 = vmatpush1.bf16.msra.mxu0 0
    %4552 = vmatprep.subr.bf16.mxu0 0
    %4553 = vmatpush1.bf16.msra.mxu0 0
    %4554 = vmatprep.subr.bf16.mxu0 0
    %4555 = vmatpush1.bf16.msra.mxu0 0
    %4556 = vmatprep.subr.bf16.mxu0 0
    %4557 = vmatpush1.bf16.msra.mxu0 0
    %4558 = vmatprep.mubr.bf16.mxu0 0
    %4559 = vmatmul.mubr.bf16.gmra.mrb[0].mxu0 %v4525
    %v4560 = vpop.f32.mrb[0].mxu0
    %v4561 = vadd.f32 0.0, %v4560
    %v4562 = vpop.f32.mrb[0].mxu0
    %v4563 = vadd.f32 0.0, %v4562
    %v4564 = vpop.f32.mrb[0].mxu0
    %v4565 = vpop.f32.mrb[0].mxu0
    %4566 = vdwg.mxu0
    %4567 = vmatprep.subr.bf16.mxu0 %v2871
    %4568 = vmatpush1.bf16.msra.mxu0 %v2870
    %4569 = vmatprep.subr.bf16.mxu0 %v2875
    %4570 = vmatpush1.bf16.msra.mxu0 %v2874
    %4571 = vmatprep.subr.bf16.mxu0 %v2879
    %4572 = vmatpush1.bf16.msra.mxu0 %v2878
    %4573 = vmatprep.subr.bf16.mxu0 %v2883
    %4574 = vmatpush1.bf16.msra.mxu0 %v2882
    %4575 = vmatprep.subr.bf16.mxu0 %v2887
    %4576 = vmatpush1.bf16.msra.mxu0 %v2886
    %4577 = vmatprep.subr.bf16.mxu0 %v2891
    %4578 = vmatpush1.bf16.msra.mxu0 %v2890
    %4579 = vmatprep.subr.bf16.mxu0 %v2895
    %4580 = vmatpush1.bf16.msra.mxu0 %v2894
    %4581 = vmatprep.subr.bf16.mxu0 %v2899
    %4582 = vmatpush1.bf16.msra.mxu0 %v2898
    %4583 = vmatprep.subr.bf16.mxu0 0
    %4584 = vmatpush1.bf16.msra.mxu0 0
    %4585 = vmatprep.subr.bf16.mxu0 0
    %4586 = vmatpush1.bf16.msra.mxu0 0
    %4587 = vmatprep.subr.bf16.mxu0 0
    %4588 = vmatpush1.bf16.msra.mxu0 0
    %4589 = vmatprep.subr.bf16.mxu0 0
    %4590 = vmatpush1.bf16.msra.mxu0 0
    %4591 = vmatprep.subr.bf16.mxu0 0
    %4592 = vmatpush1.bf16.msra.mxu0 0
    %4593 = vmatprep.subr.bf16.mxu0 0
    %4594 = vmatpush1.bf16.msra.mxu0 0
    %4595 = vmatprep.subr.bf16.mxu0 0
    %4596 = vmatpush1.bf16.msra.mxu0 0
    %4597 = vmatprep.subr.bf16.mxu0 0
    %4598 = vmatpush1.bf16.msra.mxu0 0
    %4599 = vmatprep.mubr.bf16.mxu0 0
    %4600 = vmatmul.mubr.bf16.gmra.mrb[0].mxu0 %v4525
    %v4601 = vpop.f32.mrb[0].mxu0
    %v4602 = vadd.f32 0.0, %v4601
    %v4603 = vpop.f32.mrb[0].mxu0
    %v4604 = vadd.f32 0.0, %v4603
    %v4605 = vpop.f32.mrb[0].mxu0
    %v4606 = vpop.f32.mrb[0].mxu0
    %4607 = vdwg.mxu0
    %s4608 = smul.addr %s3291, 8
    %s4609 = scalar_lea.vmem [#allocation2], %s4608
    %v4610 = vld [vmem:[%s4609] sm:$0xff]
    %v4611 = vld [vmem:[%s4609 + $0x8] sm:$0xff]
    %v4612 = vld [vmem:[%s4609 + $0x10] sm:$0xff]
    %v4613 = vld [vmem:[%s4609 + $0x18] sm:$0xff]
    %v4614 = vadd.f32 %v4610, %v4478
    %v4615 = vadd.f32 %v4611, %v4480
    %v4616 = vadd.f32 %v4612, %v4519
    %v4617 = vadd.f32 %v4613, %v4521
    %s4618 = smul.addr %s3280, 8
    %s4619 = scalar_lea.vmem [#allocation3], %s4618
    %v4620 = vld [vmem:[%s4619] sm:$0xff]
    %v4621 = vld [vmem:[%s4619 + $0x8] sm:$0xff]
    %v4622 = vld [vmem:[%s4619 + $0x10] sm:$0xff]
    %v4623 = vld [vmem:[%s4619 + $0x18] sm:$0xff]
    %v4624 = vadd.f32 %v4620, %v4561
    %v4625 = vadd.f32 %v4621, %v4563
    %v4626 = vadd.f32 %v4622, %v4602
    %v4627 = vadd.f32 %v4623, %v4604
    %v4628 = vxor.u32 %v4614, 2147483648
    %v4629 = vmul.f32 %v4628, 1.442695
    %v4630 = vpow.pop %v4629
    %v4631 = vadd.f32 %v4630, 1.0
    %v4632 = vrcp.pop %v4631
    %v4633 = vmul.f32 1.0, %v4632
    %v4634 = vxor.u32 %v4615, 2147483648
    %v4635 = vmul.f32 %v4634, 1.442695
    %v4636 = vpow.pop %v4635
    %v4637 = vadd.f32 %v4636, 1.0
    %v4638 = vrcp.pop %v4637
    %v4639 = vmul.f32 1.0, %v4638
    %v4640 = vtanh.pop %v4616
    %v4641 = vxor.u32 %v4617, 2147483648
    %v4642 = vmul.f32 %v4641, 1.442695
    %v4643 = vpow.pop %v4642
    %v4644 = vadd.f32 %v4643, 1.0
    %v4645 = vrcp.pop %v4644
    %v4646 = vmul.f32 1.0, %v4645
    %v4647 = vmul.f32 %v4639, %v4438
    %v4648 = vmul.f32 %v4633, %v4640
    %v4649 = vadd.f32 %v4647, %v4648
    %v4650 = vtanh.pop %v4649
    %v4651 = vmul.f32 %v4646, %v4650
    %v4652 = vxor.u32 %v4624, 2147483648
    %v4653 = vmul.f32 %v4652, 1.442695
    %v4654 = vpow.pop %v4653
    %v4655 = vadd.f32 %v4654, 1.0
    %v4656 = vrcp.pop %v4655
    %v4657 = vmul.f32 1.0, %v4656
    %v4658 = vxor.u32 %v4625, 2147483648
    %v4659 = vmul.f32 %v4658, 1.442695
    %v4660 = vpow.pop %v4659
    %v4661 = vadd.f32 %v4660, 1.0
    %v4662 = vrcp.pop %v4661
    %v4663 = vmul.f32 1.0, %v4662
    %v4664 = vtanh.pop %v4626
    %v4665 = vxor.u32 %v4627, 2147483648
    %v4666 = vmul.f32 %v4665, 1.442695
    %v4667 = vpow.pop %v4666
    %v4668 = vadd.f32 %v4667, 1.0
    %v4669 = vrcp.pop %v4668
    %v4670 = vmul.f32 1.0, %v4669
    %v4671 = vmul.f32 %v4663, %v4441
    %v4672 = vmul.f32 %v4657, %v4664
    %v4673 = vadd.f32 %v4671, %v4672
    %v4674 = vtanh.pop %v4673
    %v4675 = vmul.f32 %v4670, %v4674
    %v4676 = vld [vmem:[%s3352] sm:$0xff]
    %v4677 = vld [vmem:[%s3350] sm:$0xff]
    %4679 = vset.pattern.permute.xlu0 0
    %4680 = vperm.xlu0 %4679, %v4676
    %v4681 = vpop.permute.xlu0 %4680
    %v4683 = vmul.f32 %v4681, %v4651
    %4684 = vst [vmem:[%s3368] sm:$0xff] %v4683
    %4686 = vset.pattern.permute.xlu0 0
    %4687 = vperm.xlu0 %4686, %v4677
    %v4688 = vpop.permute.xlu0 %4687
    %v4690 = vmul.f32 %v4688, %v4675
    %4691 = vst [vmem:[%s3360 + $0x8] sm:$0xff] %v4690
    %v4692 = vsub.f32 %v4651, %v4432
    %v4693 = vmul.f32 %v4681, %v4692
    %v4694 = vadd.f32 %v4432, %v4693
    %v4695 = vsub.f32 %v4675, %v4435
    %v4696 = vmul.f32 %v4688, %v4695
    %v4697 = vadd.f32 %v4435, %v4696
    %v4698 = vsub.f32 %v4649, %v4438
    %v4699 = vmul.f32 %v4681, %v4698
    %v4700 = vadd.f32 %v4438, %v4699
    %v4701 = vsub.f32 %v4673, %v4441
    %v4702 = vmul.f32 %v4688, %v4701
    %v4703 = vadd.f32 %v4441, %v4702
    %v4704 = vpack.c.bf16 %v4694, %v4694
    %4705 = vmatprep.subr.bf16.mxu0 %v2626
    %4706 = vmatpush1.bf16.msra.mxu0 %v2625
    %4707 = vmatprep.subr.bf16.mxu0 %v2630
    %4708 = vmatpush1.bf16.msra.mxu0 %v2629
    %4709 = vmatprep.subr.bf16.mxu0 %v2634
    %4710 = vmatpush1.bf16.msra.mxu0 %v2633
    %4711 = vmatprep.subr.bf16.mxu0 %v2638
    %4712 = vmatpush1.bf16.msra.mxu0 %v2637
    %4713 = vmatprep.subr.bf16.mxu0 %v2642
    %4714 = vmatpush1.bf16.msra.mxu0 %v2641
    %4715 = vmatprep.subr.bf16.mxu0 %v2646
    %4716 = vmatpush1.bf16.msra.mxu0 %v2645
    %4717 = vmatprep.subr.bf16.mxu0 %v2650
    %4718 = vmatpush1.bf16.msra.mxu0 %v2649
    %4719 = vmatprep.subr.bf16.mxu0 %v2654
    %4720 = vmatpush1.bf16.msra.mxu0 %v2653
    %4721 = vmatprep.subr.bf16.mxu0 0
    %4722 = vmatpush1.bf16.msra.mxu0 0
    %4723 = vmatprep.subr.bf16.mxu0 0
    %4724 = vmatpush1.bf16.msra.mxu0 0
    %4725 = vmatprep.subr.bf16.mxu0 0
    %4726 = vmatpush1.bf16.msra.mxu0 0
    %4727 = vmatprep.subr.bf16.mxu0 0
    %4728 = vmatpush1.bf16.msra.mxu0 0
    %4729 = vmatprep.subr.bf16.mxu0 0
    %4730 = vmatpush1.bf16.msra.mxu0 0
    %4731 = vmatprep.subr.bf16.mxu0 0
    %4732 = vmatpush1.bf16.msra.mxu0 0
    %4733 = vmatprep.subr.bf16.mxu0 0
    %4734 = vmatpush1.bf16.msra.mxu0 0
    %4735 = vmatprep.subr.bf16.mxu0 0
    %4736 = vmatpush1.bf16.msra.mxu0 0
    %4737 = vmatprep.mubr.bf16.mxu0 0
    %4738 = vmatmul.mubr.bf16.gmra.mrb[0].mxu0 %v4704
    %v4739 = vpop.f32.mrb[0].mxu0
    %v4740 = vadd.f32 0.0, %v4739
    %v4741 = vpop.f32.mrb[0].mxu0
    %v4742 = vadd.f32 0.0, %v4741
    %v4743 = vpop.f32.mrb[0].mxu0
    %v4744 = vpop.f32.mrb[0].mxu0
    %4745 = vdwg.mxu0
    %4746 = vmatprep.subr.bf16.mxu0 %v2628
    %4747 = vmatpush1.bf16.msra.mxu0 %v2627
    %4748 = vmatprep.subr.bf16.mxu0 %v2632
    %4749 = vmatpush1.bf16.msra.mxu0 %v2631
    %4750 = vmatprep.subr.bf16.mxu0 %v2636
    %4751 = vmatpush1.bf16.msra.mxu0 %v2635
    %4752 = vmatprep.subr.bf16.mxu0 %v2640
    %4753 = vmatpush1.bf16.msra.mxu0 %v2639
    %4754 = vmatprep.subr.bf16.mxu0 %v2644
    %4755 = vmatpush1.bf16.msra.mxu0 %v2643
    %4756 = vmatprep.subr.bf16.mxu0 %v2648
    %4757 = vmatpush1.bf16.msra.mxu0 %v2647
    %4758 = vmatprep.subr.bf16.mxu0 %v2652
    %4759 = vmatpush1.bf16.msra.mxu0 %v2651
    %4760 = vmatprep.subr.bf16.mxu0 %v2656
    %4761 = vmatpush1.bf16.msra.mxu0 %v2655
    %4762 = vmatprep.subr.bf16.mxu0 0
    %4763 = vmatpush1.bf16.msra.mxu0 0
    %4764 = vmatprep.subr.bf16.mxu0 0
    %4765 = vmatpush1.bf16.msra.mxu0 0
    %4766 = vmatprep.subr.bf16.mxu0 0
    %4767 = vmatpush1.bf16.msra.mxu0 0
    %4768 = vmatprep.subr.bf16.mxu0 0
    %4769 = vmatpush1.bf16.msra.mxu0 0
    %4770 = vmatprep.subr.bf16.mxu0 0
    %4771 = vmatpush1.bf16.msra.mxu0 0
    %4772 = vmatprep.subr.bf16.mxu0 0
    %4773 = vmatpush1.bf16.msra.mxu0 0
    %4774 = vmatprep.subr.bf16.mxu0 0
    %4775 = vmatpush1.bf16.msra.mxu0 0
    %4776 = vmatprep.subr.bf16.mxu0 0
    %4777 = vmatpush1.bf16.msra.mxu0 0
    %4778 = vmatprep.mubr.bf16.mxu0 0
    %4779 = vmatmul.mubr.bf16.gmra.mrb[0].mxu0 %v4704
    %v4780 = vpop.f32.mrb[0].mxu0
    %v4781 = vadd.f32 0.0, %v4780
    %v4782 = vpop.f32.mrb[0].mxu0
    %v4783 = vadd.f32 0.0, %v4782
    %v4784 = vpop.f32.mrb[0].mxu0
    %v4785 = vpop.f32.mrb[0].mxu0
    %4786 = vdwg.mxu0
    %v4787 = vpack.c.bf16 %v4697, %v4697
    %4788 = vmatprep.subr.bf16.mxu0 %v2869
    %4789 = vmatpush1.bf16.msra.mxu0 %v2868
    %4790 = vmatprep.subr.bf16.mxu0 %v2873
    %4791 = vmatpush1.bf16.msra.mxu0 %v2872
    %4792 = vmatprep.subr.bf16.mxu0 %v2877
    %4793 = vmatpush1.bf16.msra.mxu0 %v2876
    %4794 = vmatprep.subr.bf16.mxu0 %v2881
    %4795 = vmatpush1.bf16.msra.mxu0 %v2880
    %4796 = vmatprep.subr.bf16.mxu0 %v2885
    %4797 = vmatpush1.bf16.msra.mxu0 %v2884
    %4798 = vmatprep.subr.bf16.mxu0 %v2889
    %4799 = vmatpush1.bf16.msra.mxu0 %v2888
    %4800 = vmatprep.subr.bf16.mxu0 %v2893
    %4801 = vmatpush1.bf16.msra.mxu0 %v2892
    %4802 = vmatprep.subr.bf16.mxu0 %v2897
    %4803 = vmatpush1.bf16.msra.mxu0 %v2896
    %4804 = vmatprep.subr.bf16.mxu0 0
    %4805 = vmatpush1.bf16.msra.mxu0 0
    %4806 = vmatprep.subr.bf16.mxu0 0
    %4807 = vmatpush1.bf16.msra.mxu0 0
    %4808 = vmatprep.subr.bf16.mxu0 0
    %4809 = vmatpush1.bf16.msra.mxu0 0
    %4810 = vmatprep.subr.bf16.mxu0 0
    %4811 = vmatpush1.bf16.msra.mxu0 0
    %4812 = vmatprep.subr.bf16.mxu0 0
    %4813 = vmatpush1.bf16.msra.mxu0 0
    %4814 = vmatprep.subr.bf16.mxu0 0
    %4815 = vmatpush1.bf16.msra.mxu0 0
    %4816 = vmatprep.subr.bf16.mxu0 0
    %4817 = vmatpush1.bf16.msra.mxu0 0
    %4818 = vmatprep.subr.bf16.mxu0 0
    %4819 = vmatpush1.bf16.msra.mxu0 0
    %4820 = vmatprep.mubr.bf16.mxu0 0
    %4821 = vmatmul.mubr.bf16.gmra.mrb[0].mxu0 %v4787
    %v4822 = vpop.f32.mrb[0].mxu0
    %v4823 = vadd.f32 0.0, %v4822
    %v4824 = vpop.f32.mrb[0].mxu0
    %v4825 = vadd.f32 0.0, %v4824
    %v4826 = vpop.f32.mrb[0].mxu0
    %v4827 = vpop.f32.mrb[0].mxu0
    %4828 = vdwg.mxu0
    %4829 = vmatprep.subr.bf16.mxu0 %v2871
    %4830 = vmatpush1.bf16.msra.mxu0 %v2870
    %4831 = vmatprep.subr.bf16.mxu0 %v2875
    %4832 = vmatpush1.bf16.msra.mxu0 %v2874
    %4833 = vmatprep.subr.bf16.mxu0 %v2879
    %4834 = vmatpush1.bf16.msra.mxu0 %v2878
    %4835 = vmatprep.subr.bf16.mxu0 %v2883
    %4836 = vmatpush1.bf16.msra.mxu0 %v2882
    %4837 = vmatprep.subr.bf16.mxu0 %v2887
    %4838 = vmatpush1.bf16.msra.mxu0 %v2886
    %4839 = vmatprep.subr.bf16.mxu0 %v2891
    %4840 = vmatpush1.bf16.msra.mxu0 %v2890
    %4841 = vmatprep.subr.bf16.mxu0 %v2895
    %4842 = vmatpush1.bf16.msra.mxu0 %v2894
    %4843 = vmatprep.subr.bf16.mxu0 %v2899
    %4844 = vmatpush1.bf16.msra.mxu0 %v2898
    %4845 = vmatprep.subr.bf16.mxu0 0
    %4846 = vmatpush1.bf16.msra.mxu0 0
    %4847 = vmatprep.subr.bf16.mxu0 0
    %4848 = vmatpush1.bf16.msra.mxu0 0
    %4849 = vmatprep.subr.bf16.mxu0 0
    %4850 = vmatpush1.bf16.msra.mxu0 0
    %4851 = vmatprep.subr.bf16.mxu0 0
    %4852 = vmatpush1.bf16.msra.mxu0 0
    %4853 = vmatprep.subr.bf16.mxu0 0
    %4854 = vmatpush1.bf16.msra.mxu0 0
    %4855 = vmatprep.subr.bf16.mxu0 0
    %4856 = vmatpush1.bf16.msra.mxu0 0
    %4857 = vmatprep.subr.bf16.mxu0 0
    %4858 = vmatpush1.bf16.msra.mxu0 0
    %4859 = vmatprep.subr.bf16.mxu0 0
    %4860 = vmatpush1.bf16.msra.mxu0 0
    %4861 = vmatprep.mubr.bf16.mxu0 0
    %4862 = vmatmul.mubr.bf16.gmra.mrb[0].mxu0 %v4787
    %v4863 = vpop.f32.mrb[0].mxu0
    %v4864 = vadd.f32 0.0, %v4863
    %v4865 = vpop.f32.mrb[0].mxu0
    %v4866 = vadd.f32 0.0, %v4865
    %v4867 = vpop.f32.mrb[0].mxu0
    %v4868 = vpop.f32.mrb[0].mxu0
    %4869 = vdwg.mxu0
    %s4870 = smul.addr %s3025, 8
    %s4871 = scalar_lea.vmem [#allocation2], %s4870
    %v4872 = vld [vmem:[%s4871] sm:$0xff]
    %v4873 = vld [vmem:[%s4871 + $0x8] sm:$0xff]
    %v4874 = vld [vmem:[%s4871 + $0x10] sm:$0xff]
    %v4875 = vld [vmem:[%s4871 + $0x18] sm:$0xff]
    %v4876 = vadd.f32 %v4872, %v4740
    %v4877 = vadd.f32 %v4873, %v4742
    %v4878 = vadd.f32 %v4874, %v4781
    %v4879 = vadd.f32 %v4875, %v4783
    %s4880 = smul.addr %s3014, 8
    %s4881 = scalar_lea.vmem [#allocation3], %s4880
    %v4882 = vld [vmem:[%s4881] sm:$0xff]
    %v4883 = vld [vmem:[%s4881 + $0x8] sm:$0xff]
    %v4884 = vld [vmem:[%s4881 + $0x10] sm:$0xff]
    %v4885 = vld [vmem:[%s4881 + $0x18] sm:$0xff]
    %v4886 = vadd.f32 %v4882, %v4823
    %v4887 = vadd.f32 %v4883, %v4825
    %v4888 = vadd.f32 %v4884, %v4864
    %v4889 = vadd.f32 %v4885, %v4866
    %v4890 = vxor.u32 %v4876, 2147483648
    %v4891 = vmul.f32 %v4890, 1.442695
    %v4892 = vpow.pop %v4891
    %v4893 = vadd.f32 %v4892, 1.0
    %v4894 = vrcp.pop %v4893
    %v4895 = vmul.f32 1.0, %v4894
    %v4896 = vxor.u32 %v4877, 2147483648
    %v4897 = vmul.f32 %v4896, 1.442695
    %v4898 = vpow.pop %v4897
    %v4899 = vadd.f32 %v4898, 1.0
    %v4900 = vrcp.pop %v4899
    %v4901 = vmul.f32 1.0, %v4900
    %v4902 = vtanh.pop %v4878
    %v4903 = vxor.u32 %v4879, 2147483648
    %v4904 = vmul.f32 %v4903, 1.442695
    %v4905 = vpow.pop %v4904
    %v4906 = vadd.f32 %v4905, 1.0
    %v4907 = vrcp.pop %v4906
    %v4908 = vmul.f32 1.0, %v4907
    %v4909 = vmul.f32 %v4901, %v4700
    %v4910 = vmul.f32 %v4895, %v4902
    %v4911 = vadd.f32 %v4909, %v4910
    %v4912 = vtanh.pop %v4911
    %v4913 = vmul.f32 %v4908, %v4912
    %v4914 = vxor.u32 %v4886, 2147483648
    %v4915 = vmul.f32 %v4914, 1.442695
    %v4916 = vpow.pop %v4915
    %v4917 = vadd.f32 %v4916, 1.0
    %v4918 = vrcp.pop %v4917
    %v4919 = vmul.f32 1.0, %v4918
    %v4920 = vxor.u32 %v4887, 2147483648
    %v4921 = vmul.f32 %v4920, 1.442695
    %v4922 = vpow.pop %v4921
    %v4923 = vadd.f32 %v4922, 1.0
    %v4924 = vrcp.pop %v4923
    %v4925 = vmul.f32 1.0, %v4924
    %v4926 = vtanh.pop %v4888
    %v4927 = vxor.u32 %v4889, 2147483648
    %v4928 = vmul.f32 %v4927, 1.442695
    %v4929 = vpow.pop %v4928
    %v4930 = vadd.f32 %v4929, 1.0
    %v4931 = vrcp.pop %v4930
    %v4932 = vmul.f32 1.0, %v4931
    %v4933 = vmul.f32 %v4925, %v4703
    %v4934 = vmul.f32 %v4919, %v4926
    %v4935 = vadd.f32 %v4933, %v4934
    %v4936 = vtanh.pop %v4935
    %v4937 = vmul.f32 %v4932, %v4936
    %v4938 = vld [vmem:[%s3085] sm:$0xff]
    %v4939 = vld [vmem:[#allocation7] sm:$0xff]
    %4941 = vset.pattern.permute.xlu0 0
    %4942 = vperm.xlu0 %4941, %v4938
    %v4943 = vpop.permute.xlu0 %4942
    %v4945 = vmul.f32 %v4943, %v4913
    %4946 = vst [vmem:[%s3100] sm:$0xff] %v4945
    %4948 = vset.pattern.permute.xlu0 0
    %4949 = vperm.xlu0 %4948, %v4939
    %v4950 = vpop.permute.xlu0 %4949
    %v4952 = vmul.f32 %v4950, %v4937
    %4953 = vst [vmem:[#allocation18 + $0x8] sm:$0xff] %v4952
    // Predicated region
    $region66: #{tpu_custom_call.1} parent=1 // pred_check
      _
    $region67: #{tpu_custom_call.1} parent=1 // pred_check_branch
      %4955 = sbr.rel (0) target = $region69
    $region68: #{tpu_custom_call.1} parent=1 // pred_region
      %s4957 = ssub.s32 2048, 2048
      %4958 = vsyncadd [#allocation6], %s4957
      %s4959 = sshll.u32 [#allocation18], 4
      %s4960 = int_to_ptr.vmem [resolvable:$true] %s4959
      %4965 = dma.vmem_to_hbm [thread:$0]  %s4960, 2048, %s8, [#allocation6], 256, 256, 16
    $region69: #{tpu_custom_call.1} parent=1 // pred_fallthru
      _
    // Predicated region
    $region70: #{tpu_custom_call.1} parent=1 // pred_check
      _
    $region71: #{tpu_custom_call.1} parent=1 // pred_check_branch
      %4967 = sbr.rel (0) target = $region73
    $region72: #{tpu_custom_call.1} parent=1 // pred_region
      %4968 = dma.done [#allocation6], 2048
    $region73: #{tpu_custom_call.1} parent=1 // pred_fallthru
      _
    %4969 = vsyncpa [#allocation5], 1
    %4970 = vsyncpa [#allocation8], 1
    %4971 = vsyncpa [#allocation11], 1
    %4972 = vsyncpa [#allocation14], 1
    %4973 = vsyncpa [#allocation17], 1
    %4974 = vsyncpa [#allocation6], 1

</llo_original>
